<compile_context>
chip_gen: v6e
topology: v6e:2x2x1
jax: 0.10.0
libtpu: 0.0.40
codegen_flags: <defaults>
</compile_context>

<pallas_src>
import jax
import jax.numpy as jnp
from jax import lax
from jax.experimental import pallas as pl
from jax.experimental.pallas import tpu as pltpu


# ------------------------------- fused kernel ------------------------------ #
def _residual_upsample_kernel(x_ref, w1_ref, wct_ref, w3_ref, wb_ref,
                              alpha_ref, o_ref, pad1_ref, padb_ref):
    """One batch image per grid step.
    x_ref   : (1, H, W, C)        input image (NHWC)
    w1_ref  : (C, C)              top 1x1 conv, (Cin, Cout)
    wct_ref : (4, C, 4*C)         deconv taps: shift s -> all 4 output parities
    w3_ref  : (4, 4*C, C//2)      top final 1x1 conv, block-placed per parity
    wb_ref  : (C, C//2)           bottom 1x1 conv
    alpha_ref: (2,) SMEM          PReLU slopes
    o_ref   : (1, 4, H*W, C//2)   output, dim1 = parity p = 2*(row%2)+(col%2)
    pad1/padb: VMEM scratch for zero-padded shifted reads
    """
    f32 = jnp.float32
    _, H, W, C = x_ref.shape
    HW = H * W
    C2 = o_ref.shape[-1]

    a1 = alpha_ref[0]
    a2 = alpha_ref[1]

    xf = x_ref[0].reshape(HW, C).astype(f32)

    # ------------------------------ top path ------------------------------ #
    # 1x1 conv + PReLU
    t1 = jnp.dot(xf, w1_ref[...], preferred_element_type=f32)        # (HW, C)
    t1 = jnp.where(t1 > 0, t1, a1 * t1)

    # ConvTranspose2d(3, stride=2, padding=1, output_padding=1):
    #   out[2i+pi, 2j+pj] = sum over shifts (si,sj) in {0,1}^2 of
    #                       t1[i+si, j+sj] @ tap(pi,pj,si,sj)  (zero outside)
    pad1_ref[...] = jnp.zeros_like(pad1_ref)
    pad1_ref[0:H, 0:W, :] = t1.reshape(H, W, C)
    y01 = pad1_ref[0:H, 1:W + 1, :].reshape(HW, C)        # t1[i,   j+1]
    y10 = pad1_ref[1:H + 1, 0:W, :].reshape(HW, C)        # t1[i+1, j  ]
    y11 = pad1_ref[1:H + 1, 1:W + 1, :].reshape(HW, C)    # t1[i+1, j+1]

    acts = (jnp.dot(t1, wct_ref[0], preferred_element_type=f32)
            + jnp.dot(y01, wct_ref[1], preferred_element_type=f32)
            + jnp.dot(y10, wct_ref[2], preferred_element_type=f32)
            + jnp.dot(y11, wct_ref[3], preferred_element_type=f32))  # (HW, 4C)
    acts = jnp.where(acts > 0, acts, a2 * acts)                      # PReLU

    # ----------------------------- bottom path ---------------------------- #
    # 1x1 conv first (it commutes with the bilinear upsample), then separable
    # 2x bilinear upsample (align_corners=False): taps (0.25, 0.75) per axis
    # with edge clamping, evaluated per output parity.
    xb = jnp.dot(xf, wb_ref[...], preferred_element_type=f32)        # (HW, C2)
    xb_h = xb.reshape(H, W, C2)

    padb_ref[...] = jnp.zeros_like(padb_ref)
    padb_ref[:, 1:W + 1, :] = xb_h
    x_l0 = padb_ref[:, 0:W, :]           # xb[i, j-1]  (0 at j=0)
    x_r0 = padb_ref[:, 2:W + 2, :]       # xb[i, j+1]  (0 at j=W-1)

    col = lax.broadcasted_iota(jnp.int32, (W, 1), 0)
    m_first = (col == 0).astype(f32)
    m_last = (col == W - 1).astype(f32)
    x_l = x_l0 + m_first * xb_h          # clamp at left edge
    x_r = x_r0 + m_last * xb_h           # clamp at right edge

    hb_e = 0.25 * x_l + 0.75 * xb_h      # even output columns
    hb_o = 0.75 * xb_h + 0.25 * x_r      # odd  output columns

    def up(v):       # v[max(i-1, 0)]
        return jnp.concatenate([v[0:1], v[0:H - 1]], axis=0)

    def dn(v):       # v[min(i+1, H-1)]
        return jnp.concatenate([v[1:H], v[H - 1:H]], axis=0)

    bot = (0.25 * up(hb_e) + 0.75 * hb_e,    # even row, even col
           0.25 * up(hb_o) + 0.75 * hb_o,    # even row, odd  col
           0.75 * hb_e + 0.25 * dn(hb_e),    # odd  row, even col
           0.75 * hb_o + 0.25 * dn(hb_o))    # odd  row, odd  col

    # ------------- final 1x1 conv (C -> C/2) per parity + add ------------- #
    for p in range(4):
        top_p = jnp.dot(acts, w3_ref[p], preferred_element_type=f32)  # (HW,C2)
        o_ref[0, p] = (top_p + bot[p].reshape(HW, C2)).astype(o_ref.dtype)


# ------------------------------ module wrapper ----------------------------- #
def residual_upsample_forward(x_nchw, params):
    """ResidualUpSample.forward: (N, C, H, W) -> (N, C//2, 2H, 2W)."""
    f32 = jnp.float32
    N, C, H, W = x_nchw.shape
    C2 = C // 2
    HW = H * W

    w1 = params["w1"].astype(f32)    # (C,  C, 1, 1)  Conv2d          (OIHW)
    wt = params["wt"].astype(f32)    # (C,  C, 3, 3)  ConvTranspose2d (IOHW)
    w3 = params["w3"].astype(f32)    # (C2, C, 1, 1)  Conv2d
    wb = params["wb"].astype(f32)    # (C2, C, 1, 1)  Conv2d

    w1t = w1[:, :, 0, 0].T                            # (Cin, Cout)
    w3t = w3[:, :, 0, 0].T                            # (Cin, C2)
    wbt = wb[:, :, 0, 0].T                            # (Cin, C2)

    # Transposed-conv taps packed per input shift s=(si,sj); column block p
    # holds the (Cin, Cout) tap that feeds output parity p=(pi,pj).
    wct = jnp.zeros((4, C, 4 * C), f32)
    for si in (0, 1):
        for sj in (0, 1):
            s = si * 2 + sj
            for pi_ in (0, 1):
                for pj_ in (0, 1):
                    p = pi_ * 2 + pj_
                    kh = pi_ + 1 - 2 * si
                    kw = pj_ + 1 - 2 * sj
                    if 0 <= kh < 3 and 0 <= kw < 3:
                        wct = wct.at[s, :, p * C:(p + 1) * C].set(
                            wt[:, :, kh, kw])

    # Final 1x1 conv, block-placed so parity block p of `acts` maps to output p.
    w3blk = jnp.zeros((4, 4 * C, C2), f32)
    for p in range(4):
        w3blk = w3blk.at[p, p * C:(p + 1) * C, :].set(w3t)

    alphas = jnp.stack([jnp.asarray(params["alpha1"], f32),
                        jnp.asarray(params["alpha2"], f32)])

    x_nhwc = jnp.transpose(x_nchw.astype(f32), (0, 2, 3, 1))   # (N, H, W, C)

    out_k = pl.pallas_call(
        _residual_upsample_kernel,
        out_shape=jax.ShapeDtypeStruct((N, 4, HW, C2), f32),
        grid_spec=pltpu.PrefetchScalarGridSpec(
            num_scalar_prefetch=0,
            grid=(N,),
            in_specs=[
                pl.BlockSpec((1, H, W, C), lambda b: (b, 0, 0, 0)),
                pl.BlockSpec((C, C), lambda b: (0, 0)),
                pl.BlockSpec((4, C, 4 * C), lambda b: (0, 0, 0)),
                pl.BlockSpec((4, 4 * C, C2), lambda b: (0, 0, 0)),
                pl.BlockSpec((C, C2), lambda b: (0, 0)),
                pl.BlockSpec(memory_space=pltpu.MemorySpace.SMEM),
            ],
            out_specs=pl.BlockSpec((1, 4, HW, C2), lambda b: (b, 0, 0, 0)),
            scratch_shapes=[
                pltpu.VMEM((H + 1, W + 1, C), f32),
                pltpu.VMEM((H, W + 2, C2), f32),
            ],
        ),
        compiler_params=pltpu.CompilerParams(
            dimension_semantics=("parallel",)),
    )(x_nhwc, w1t, wct, w3blk, wbt, alphas)

    # out_k[n, 2*pi+pj, i*W+j, c] -> out[n, c, 2i+pi, 2j+pj]
    out = out_k.reshape(N, 2, 2, H, W, C2)
    out = jnp.transpose(out, (0, 5, 3, 1, 4, 2))      # (N, C2, H, 2, W, 2)
    return out.reshape(N, C2, 2 * H, 2 * W).astype(x_nchw.dtype)


# -------------------------- pure-JAX reference ----------------------------- #
def _reference_forward(x, params):
    f32 = jnp.float32
    x = x.astype(f32)
    N, C, H, W = x.shape
    dn = ("NCHW", "OIHW", "NCHW")
    hi = lax.Precision.HIGHEST
    a1 = jnp.asarray(params["alpha1"], f32)
    a2 = jnp.asarray(params["alpha2"], f32)
    prelu = lambda v, a: jnp.where(v > 0, v, a * v)

    # top
    t = lax.conv_general_dilated(x, params["w1"].astype(f32), (1, 1), "VALID",
                                 dimension_numbers=dn, precision=hi)
    t = prelu(t, a1)
    wt = params["wt"].astype(f32)
    wt_f = jnp.flip(wt, axis=(2, 3)).transpose(1, 0, 2, 3)
    t = lax.conv_general_dilated(t, wt_f, (1, 1), ((1, 2), (1, 2)),
                                 lhs_dilation=(2, 2),
                                 dimension_numbers=dn, precision=hi)
    t = prelu(t, a2)
    top = lax.conv_general_dilated(t, params["w3"].astype(f32), (1, 1), "VALID",
                                   dimension_numbers=dn, precision=hi)

    # bottom: bilinear x2 (align_corners=False), then 1x1 conv
    def axis_interp(size):
        o = jnp.arange(2 * size, dtype=f32)
        s = jnp.maximum((o + 0.5) / 2.0 - 0.5, 0.0)
        i0 = jnp.minimum(jnp.floor(s), size - 1).astype(jnp.int32)
        i1 = jnp.minimum(i0 + 1, size - 1)
        lam = s - i0.astype(f32)
        return i0, i1, lam

    y0, y1, ly = axis_interp(H)
    x0, x1, lx = axis_interp(W)
    g = lambda iy, ix: x[:, :, iy, :][:, :, :, ix]
    ly = ly[:, None]
    up = ((1 - ly) * ((1 - lx) * g(y0, x0) + lx * g(y0, x1))
          + ly * ((1 - lx) * g(y1, x0) + lx * g(y1, x1)))
    bot = lax.conv_general_dilated(up, params["wb"].astype(f32), (1, 1),
                                   "VALID", dimension_numbers=dn, precision=hi)
    return top + bot


if __name__ == "__main__":
    # ResidualUpSample(in_channels=16, bias=False)
    N, C, H, W = 2, 16, 16, 16
    C2 = C // 2

    key = jax.random.PRNGKey(0)
    k1, k2, k3, k4, k5 = jax.random.split(key, 5)
    x = jax.random.normal(k1, (N, C, H, W), jnp.float32)
    params = dict(
        w1=jax.random.normal(k2, (C, C, 1, 1), jnp.float32) * 0.1,
        wt=jax.random.normal(k3, (C, C, 3, 3), jnp.float32) * 0.1,
        w3=jax.random.normal(k4, (C2, C, 1, 1), jnp.float32) * 0.1,
        wb=jax.random.normal(k5, (C2, C, 1, 1), jnp.float32) * 0.1,
        alpha1=jnp.float32(0.25),      # PReLU default single parameter
        alpha2=jnp.float32(0.25),
    )

    out = residual_upsample_forward(x, params)
    out = jax.block_until_ready(out)
    assert out.shape == (N, C2, 2 * H, 2 * W) and out.dtype == jnp.float32

    ref = jax.block_until_ready(_reference_forward(x, params))
    max_err = float(jnp.max(jnp.abs(out - ref)))
    assert jnp.allclose(out, ref, atol=2e-2, rtol=2e-2), max_err
    print("KERNEL_OK")
</pallas_src>

<mosaic_0001>
module attributes {stable_mosaic.version = 11 : i64} {
  func.func @_residual_upsample_kernel(%arg0: i32, %arg1: memref<1x16x16x16xf32, #tpu.memory_space<vmem>>, %arg2: memref<16x16xf32, #tpu.memory_space<vmem>>, %arg3: memref<4x16x64xf32, #tpu.memory_space<vmem>>, %arg4: memref<4x64x8xf32, #tpu.memory_space<vmem>>, %arg5: memref<16x8xf32, #tpu.memory_space<vmem>>, %arg6: memref<2xf32, #tpu.memory_space<smem>>, %arg7: memref<1x4x256x8xf32, #tpu.memory_space<vmem>>, %arg8: memref<17x17x16xf32, #tpu.memory_space<vmem>>, %arg9: memref<16x18x8xf32, #tpu.memory_space<vmem>>) attributes {dimension_semantics = [#tpu.dimension_semantics<parallel>], iteration_bounds = array<i64: 2>, scalar_prefetch = 0 : i64, scratch_operands = 2 : i64, tpu.core_type = #tpu.core_type<tc>, window_params = [{transform_indices = @transform_0, window_bounds = array<i64: 1, 16, 16, 16>}, {pipeline_mode = #tpu.pipeline_mode<synchronous>, transform_indices = @transform_1, window_bounds = array<i64: 16, 16>}, {pipeline_mode = #tpu.pipeline_mode<synchronous>, transform_indices = @transform_2, window_bounds = array<i64: 4, 16, 64>}, {pipeline_mode = #tpu.pipeline_mode<synchronous>, transform_indices = @transform_3, window_bounds = array<i64: 4, 64, 8>}, {pipeline_mode = #tpu.pipeline_mode<synchronous>, transform_indices = @transform_4, window_bounds = array<i64: 16, 8>}, {transform_indices = @transform_5, window_bounds = array<i64: 2>}, {transform_indices = @transform_6, window_bounds = array<i64: 1, 4, 256, 8>}]} {
    %c0 = arith.constant 0 : index
    %0 = memref.load %arg6[%c0] : memref<2xf32, #tpu.memory_space<smem>>
    %c1 = arith.constant 1 : index
    %1 = memref.load %arg6[%c1] : memref<2xf32, #tpu.memory_space<smem>>
    %c0_0 = arith.constant 0 : index
    %c0_1 = arith.constant 0 : index
    %c0_2 = arith.constant 0 : index
    %c0_3 = arith.constant 0 : index
    %2 = vector.load %arg1[%c0_0, %c0_1, %c0_2, %c0_3] : memref<1x16x16x16xf32, #tpu.memory_space<vmem>>, vector<1x16x16x16xf32>
    %3 = vector.shape_cast %2 : vector<1x16x16x16xf32> to vector<16x16x16xf32>
    %4 = vector.shape_cast %3 : vector<16x16x16xf32> to vector<256x16xf32>
    %c0_4 = arith.constant 0 : index
    %c0_5 = arith.constant 0 : index
    %5 = vector.load %arg2[%c0_4, %c0_5] : memref<16x16xf32, #tpu.memory_space<vmem>>, vector<16x16xf32>
    %cst = arith.constant dense<0.000000e+00> : vector<256x16xf32>
    %6 = tpu.matmul %4, %5, %cst {dimension_numbers = #tpu.dot_dimension_numbers<[1], [0], [0], [1], [0, 0, 1, 1], [], []>} : vector<256x16xf32>, vector<16x16xf32>, vector<256x16xf32> -> vector<256x16xf32>
    %cst_6 = arith.constant 0.000000e+00 : f32
    %7 = vector.broadcast %cst_6 : f32 to vector<256x16xf32>
    %8 = arith.cmpf ogt, %6, %7 : vector<256x16xf32>
    %9 = vector.broadcast %0 : f32 to vector<256x16xf32>
    %10 = arith.mulf %9, %6 : vector<256x16xf32>
    %11 = arith.select %8, %6, %10 : vector<256x16xi1>, vector<256x16xf32>
    %cst_7 = arith.constant 0.000000e+00 : f32
    %12 = vector.broadcast %cst_7 : f32 to vector<17x17x16xf32>
    %c0_8 = arith.constant 0 : index
    %c0_9 = arith.constant 0 : index
    %c0_10 = arith.constant 0 : index
    %13 = vector.load %arg8[%c0_8, %c0_9, %c0_10] : memref<17x17x16xf32, #tpu.memory_space<vmem>>, vector<17x17x16xf32>
    tpu.vector_store %arg8[%c0_8, %c0_9, %c0_10], %12 {strides = array<i32>} : memref<17x17x16xf32, #tpu.memory_space<vmem>>, vector<17x17x16xf32>,
    %14 = vector.shape_cast %11 : vector<256x16xf32> to vector<16x16x16xf32>
    %c0_11 = arith.constant 0 : index
    %c0_12 = arith.constant 0 : index
    %c0_13 = arith.constant 0 : index
    %15 = vector.load %arg8[%c0_11, %c0_12, %c0_13] : memref<17x17x16xf32, #tpu.memory_space<vmem>>, vector<16x16x16xf32>
    tpu.vector_store %arg8[%c0_11, %c0_12, %c0_13], %14 {strides = array<i32>} : memref<17x17x16xf32, #tpu.memory_space<vmem>>, vector<16x16x16xf32>,
    %c0_14 = arith.constant 0 : index
    %c1_15 = arith.constant 1 : index
    %c0_16 = arith.constant 0 : index
    %16 = vector.load %arg8[%c0_14, %c1_15, %c0_16] : memref<17x17x16xf32, #tpu.memory_space<vmem>>, vector<16x16x16xf32>
    %17 = vector.shape_cast %16 : vector<16x16x16xf32> to vector<256x16xf32>
    %c1_17 = arith.constant 1 : index
    %c0_18 = arith.constant 0 : index
    %c0_19 = arith.constant 0 : index
    %18 = vector.load %arg8[%c1_17, %c0_18, %c0_19] : memref<17x17x16xf32, #tpu.memory_space<vmem>>, vector<16x16x16xf32>
    %19 = vector.shape_cast %18 : vector<16x16x16xf32> to vector<256x16xf32>
    %c1_20 = arith.constant 1 : index
    %c1_21 = arith.constant 1 : index
    %c0_22 = arith.constant 0 : index
    %20 = vector.load %arg8[%c1_20, %c1_21, %c0_22] : memref<17x17x16xf32, #tpu.memory_space<vmem>>, vector<16x16x16xf32>
    %21 = vector.shape_cast %20 : vector<16x16x16xf32> to vector<256x16xf32>
    %c0_23 = arith.constant 0 : index
    %c0_24 = arith.constant 0 : index
    %c0_25 = arith.constant 0 : index
    %22 = vector.load %arg3[%c0_23, %c0_24, %c0_25] : memref<4x16x64xf32, #tpu.memory_space<vmem>>, vector<1x16x64xf32>
    %23 = vector.shape_cast %22 : vector<1x16x64xf32> to vector<16x64xf32>
    %cst_26 = arith.constant dense<0.000000e+00> : vector<256x64xf32>
    %24 = tpu.matmul %11, %23, %cst_26 {dimension_numbers = #tpu.dot_dimension_numbers<[1], [0], [0], [1], [0, 0, 1, 1], [], []>} : vector<256x16xf32>, vector<16x64xf32>, vector<256x64xf32> -> vector<256x64xf32>
    %c1_27 = arith.constant 1 : index
    %c0_28 = arith.constant 0 : index
    %c0_29 = arith.constant 0 : index
    %25 = vector.load %arg3[%c1_27, %c0_28, %c0_29] : memref<4x16x64xf32, #tpu.memory_space<vmem>>, vector<1x16x64xf32>
    %26 = vector.shape_cast %25 : vector<1x16x64xf32> to vector<16x64xf32>
    %cst_30 = arith.constant dense<0.000000e+00> : vector<256x64xf32>
    %27 = tpu.matmul %17, %26, %cst_30 {dimension_numbers = #tpu.dot_dimension_numbers<[1], [0], [0], [1], [0, 0, 1, 1], [], []>} : vector<256x16xf32>, vector<16x64xf32>, vector<256x64xf32> -> vector<256x64xf32>
    %28 = arith.addf %24, %27 : vector<256x64xf32>
    %c2 = arith.constant 2 : index
    %c0_31 = arith.constant 0 : index
    %c0_32 = arith.constant 0 : index
    %29 = vector.load %arg3[%c2, %c0_31, %c0_32] : memref<4x16x64xf32, #tpu.memory_space<vmem>>, vector<1x16x64xf32>
    %30 = vector.shape_cast %29 : vector<1x16x64xf32> to vector<16x64xf32>
    %cst_33 = arith.constant dense<0.000000e+00> : vector<256x64xf32>
    %31 = tpu.matmul %19, %30, %cst_33 {dimension_numbers = #tpu.dot_dimension_numbers<[1], [0], [0], [1], [0, 0, 1, 1], [], []>} : vector<256x16xf32>, vector<16x64xf32>, vector<256x64xf32> -> vector<256x64xf32>
    %32 = arith.addf %28, %31 : vector<256x64xf32>
    %c3 = arith.constant 3 : index
    %c0_34 = arith.constant 0 : index
    %c0_35 = arith.constant 0 : index
    %33 = vector.load %arg3[%c3, %c0_34, %c0_35] : memref<4x16x64xf32, #tpu.memory_space<vmem>>, vector<1x16x64xf32>
    %34 = vector.shape_cast %33 : vector<1x16x64xf32> to vector<16x64xf32>
    %cst_36 = arith.constant dense<0.000000e+00> : vector<256x64xf32>
    %35 = tpu.matmul %21, %34, %cst_36 {dimension_numbers = #tpu.dot_dimension_numbers<[1], [0], [0], [1], [0, 0, 1, 1], [], []>} : vector<256x16xf32>, vector<16x64xf32>, vector<256x64xf32> -> vector<256x64xf32>
    %36 = arith.addf %32, %35 : vector<256x64xf32>
    %cst_37 = arith.constant 0.000000e+00 : f32
    %37 = vector.broadcast %cst_37 : f32 to vector<256x64xf32>
    %38 = arith.cmpf ogt, %36, %37 : vector<256x64xf32>
    %39 = vector.broadcast %1 : f32 to vector<256x64xf32>
    %40 = arith.mulf %39, %36 : vector<256x64xf32>
    %41 = arith.select %38, %36, %40 : vector<256x64xi1>, vector<256x64xf32>
    %c0_38 = arith.constant 0 : index
    %c0_39 = arith.constant 0 : index
    %42 = vector.load %arg5[%c0_38, %c0_39] : memref<16x8xf32, #tpu.memory_space<vmem>>, vector<16x8xf32>
    %cst_40 = arith.constant dense<0.000000e+00> : vector<256x8xf32>
    %43 = tpu.matmul %4, %42, %cst_40 {dimension_numbers = #tpu.dot_dimension_numbers<[1], [0], [0], [1], [0, 0, 1, 1], [], []>} : vector<256x16xf32>, vector<16x8xf32>, vector<256x8xf32> -> vector<256x8xf32>
    %44 = vector.shape_cast %43 : vector<256x8xf32> to vector<16x16x8xf32>
    %cst_41 = arith.constant 0.000000e+00 : f32
    %45 = vector.broadcast %cst_41 : f32 to vector<16x18x8xf32>
    %c0_42 = arith.constant 0 : index
    %c0_43 = arith.constant 0 : index
    %c0_44 = arith.constant 0 : index
    %46 = vector.load %arg9[%c0_42, %c0_43, %c0_44] : memref<16x18x8xf32, #tpu.memory_space<vmem>>, vector<16x18x8xf32>
    tpu.vector_store %arg9[%c0_42, %c0_43, %c0_44], %45 {strides = array<i32>} : memref<16x18x8xf32, #tpu.memory_space<vmem>>, vector<16x18x8xf32>,
    %c0_45 = arith.constant 0 : index
    %c1_46 = arith.constant 1 : index
    %c0_47 = arith.constant 0 : index
    %47 = vector.load %arg9[%c0_45, %c1_46, %c0_47] : memref<16x18x8xf32, #tpu.memory_space<vmem>>, vector<16x16x8xf32>
    tpu.vector_store %arg9[%c0_45, %c1_46, %c0_47], %44 {strides = array<i32>} : memref<16x18x8xf32, #tpu.memory_space<vmem>>, vector<16x16x8xf32>,
    %c0_48 = arith.constant 0 : index
    %c0_49 = arith.constant 0 : index
    %c0_50 = arith.constant 0 : index
    %48 = vector.load %arg9[%c0_48, %c0_49, %c0_50] : memref<16x18x8xf32, #tpu.memory_space<vmem>>, vector<16x16x8xf32>
    %c0_51 = arith.constant 0 : index
    %c2_52 = arith.constant 2 : index
    %c0_53 = arith.constant 0 : index
    %49 = vector.load %arg9[%c0_51, %c2_52, %c0_53] : memref<16x18x8xf32, #tpu.memory_space<vmem>>, vector<16x16x8xf32>
    %50 = tpu.iota {dimensions = array<i32: 0>} : vector<16x1xi32>
    %c0_i32 = arith.constant 0 : i32
    %51 = vector.broadcast %c0_i32 : i32 to vector<16x1xi32>
    %52 = arith.cmpi eq, %50, %51 : vector<16x1xi32>
    %53 = arith.extui %52 : vector<16x1xi1> to vector<16x1xi32>
    %54 = arith.sitofp %53 : vector<16x1xi32> to vector<16x1xf32>
    %c15_i32 = arith.constant 15 : i32
    %55 = vector.broadcast %c15_i32 : i32 to vector<16x1xi32>
    %56 = arith.cmpi eq, %50, %55 : vector<16x1xi32>
    %57 = arith.extui %56 : vector<16x1xi1> to vector<16x1xi32>
    %58 = arith.sitofp %57 : vector<16x1xi32> to vector<16x1xf32>
    %59 = vector.shape_cast %54 : vector<16x1xf32> to vector<1x16x1xf32>
    %60 = vector.broadcast %59 : vector<1x16x1xf32> to vector<16x16x8xf32>
    %61 = arith.mulf %60, %44 : vector<16x16x8xf32>
    %62 = arith.addf %48, %61 : vector<16x16x8xf32>
    %63 = vector.shape_cast %58 : vector<16x1xf32> to vector<1x16x1xf32>
    %64 = vector.broadcast %63 : vector<1x16x1xf32> to vector<16x16x8xf32>
    %65 = arith.mulf %64, %44 : vector<16x16x8xf32>
    %66 = arith.addf %49, %65 : vector<16x16x8xf32>
    %cst_54 = arith.constant 2.500000e-01 : f32
    %67 = vector.broadcast %cst_54 : f32 to vector<16x16x8xf32>
    %68 = arith.mulf %67, %62 : vector<16x16x8xf32>
    %cst_55 = arith.constant 7.500000e-01 : f32
    %69 = vector.broadcast %cst_55 : f32 to vector<16x16x8xf32>
    %70 = arith.mulf %69, %44 : vector<16x16x8xf32>
    %71 = arith.addf %68, %70 : vector<16x16x8xf32>
    %cst_56 = arith.constant 7.500000e-01 : f32
    %72 = vector.broadcast %cst_56 : f32 to vector<16x16x8xf32>
    %73 = arith.mulf %72, %44 : vector<16x16x8xf32>
    %cst_57 = arith.constant 2.500000e-01 : f32
    %74 = vector.broadcast %cst_57 : f32 to vector<16x16x8xf32>
    %75 = arith.mulf %74, %66 : vector<16x16x8xf32>
    %76 = arith.addf %73, %75 : vector<16x16x8xf32>
    %77 = vector.extract_strided_slice %71 {offsets = [0, 0, 0], sizes = [1, 16, 8], strides = [1, 1, 1]} : vector<16x16x8xf32> to vector<1x16x8xf32>
    %78 = vector.extract_strided_slice %71 {offsets = [0, 0, 0], sizes = [15, 16, 8], strides = [1, 1, 1]} : vector<16x16x8xf32> to vector<15x16x8xf32>
    %79 = tpu.concatenate %77, %78 in 0 : vector<1x16x8xf32>, vector<15x16x8xf32> -> vector<16x16x8xf32>
    %cst_58 = arith.constant 2.500000e-01 : f32
    %80 = vector.broadcast %cst_58 : f32 to vector<16x16x8xf32>
    %81 = arith.mulf %80, %79 : vector<16x16x8xf32>
    %cst_59 = arith.constant 7.500000e-01 : f32
    %82 = vector.broadcast %cst_59 : f32 to vector<16x16x8xf32>
    %83 = arith.mulf %82, %71 : vector<16x16x8xf32>
    %84 = arith.addf %81, %83 : vector<16x16x8xf32>
    %85 = vector.extract_strided_slice %76 {offsets = [0, 0, 0], sizes = [1, 16, 8], strides = [1, 1, 1]} : vector<16x16x8xf32> to vector<1x16x8xf32>
    %86 = vector.extract_strided_slice %76 {offsets = [0, 0, 0], sizes = [15, 16, 8], strides = [1, 1, 1]} : vector<16x16x8xf32> to vector<15x16x8xf32>
    %87 = tpu.concatenate %85, %86 in 0 : vector<1x16x8xf32>, vector<15x16x8xf32> -> vector<16x16x8xf32>
    %cst_60 = arith.constant 2.500000e-01 : f32
    %88 = vector.broadcast %cst_60 : f32 to vector<16x16x8xf32>
    %89 = arith.mulf %88, %87 : vector<16x16x8xf32>
    %cst_61 = arith.constant 7.500000e-01 : f32
    %90 = vector.broadcast %cst_61 : f32 to vector<16x16x8xf32>
    %91 = arith.mulf %90, %76 : vector<16x16x8xf32>
    %92 = arith.addf %89, %91 : vector<16x16x8xf32>
    %cst_62 = arith.constant 7.500000e-01 : f32
    %93 = vector.broadcast %cst_62 : f32 to vector<16x16x8xf32>
    %94 = arith.mulf %93, %71 : vector<16x16x8xf32>
    %95 = vector.extract_strided_slice %71 {offsets = [1, 0, 0], sizes = [15, 16, 8], strides = [1, 1, 1]} : vector<16x16x8xf32> to vector<15x16x8xf32>
    %96 = vector.extract_strided_slice %71 {offsets = [15, 0, 0], sizes = [1, 16, 8], strides = [1, 1, 1]} : vector<16x16x8xf32> to vector<1x16x8xf32>
    %97 = tpu.concatenate %95, %96 in 0 : vector<15x16x8xf32>, vector<1x16x8xf32> -> vector<16x16x8xf32>
    %cst_63 = arith.constant 2.500000e-01 : f32
    %98 = vector.broadcast %cst_63 : f32 to vector<16x16x8xf32>
    %99 = arith.mulf %98, %97 : vector<16x16x8xf32>
    %100 = arith.addf %94, %99 : vector<16x16x8xf32>
    %cst_64 = arith.constant 7.500000e-01 : f32
    %101 = vector.broadcast %cst_64 : f32 to vector<16x16x8xf32>
    %102 = arith.mulf %101, %76 : vector<16x16x8xf32>
    %103 = vector.extract_strided_slice %76 {offsets = [1, 0, 0], sizes = [15, 16, 8], strides = [1, 1, 1]} : vector<16x16x8xf32> to vector<15x16x8xf32>
    %104 = vector.extract_strided_slice %76 {offsets = [15, 0, 0], sizes = [1, 16, 8], strides = [1, 1, 1]} : vector<16x16x8xf32> to vector<1x16x8xf32>
    %105 = tpu.concatenate %103, %104 in 0 : vector<15x16x8xf32>, vector<1x16x8xf32> -> vector<16x16x8xf32>
    %cst_65 = arith.constant 2.500000e-01 : f32
    %106 = vector.broadcast %cst_65 : f32 to vector<16x16x8xf32>
    %107 = arith.mulf %106, %105 : vector<16x16x8xf32>
    %108 = arith.addf %102, %107 : vector<16x16x8xf32>
    %c0_66 = arith.constant 0 : index
    %c0_67 = arith.constant 0 : index
    %c0_68 = arith.constant 0 : index
    %109 = vector.load %arg4[%c0_66, %c0_67, %c0_68] : memref<4x64x8xf32, #tpu.memory_space<vmem>>, vector<1x64x8xf32>
    %110 = vector.shape_cast %109 : vector<1x64x8xf32> to vector<64x8xf32>
    %cst_69 = arith.constant dense<0.000000e+00> : vector<256x8xf32>
    %111 = tpu.matmul %41, %110, %cst_69 {dimension_numbers = #tpu.dot_dimension_numbers<[1], [0], [0], [1], [0, 0, 1, 1], [], []>} : vector<256x64xf32>, vector<64x8xf32>, vector<256x8xf32> -> vector<256x8xf32>
    %112 = vector.shape_cast %84 : vector<16x16x8xf32> to vector<256x8xf32>
    %113 = arith.addf %111, %112 : vector<256x8xf32>
    %c0_70 = arith.constant 0 : index
    %c0_71 = arith.constant 0 : index
    %c0_72 = arith.constant 0 : index
    %c0_73 = arith.constant 0 : index
    %114 = vector.load %arg7[%c0_70, %c0_71, %c0_72, %c0_73] : memref<1x4x256x8xf32, #tpu.memory_space<vmem>>, vector<1x1x256x8xf32>
    %115 = vector.shape_cast %114 : vector<1x1x256x8xf32> to vector<256x8xf32>
    %116 = vector.shape_cast %113 : vector<256x8xf32> to vector<1x1x256x8xf32>
    tpu.vector_store %arg7[%c0_70, %c0_71, %c0_72, %c0_73], %116 {strides = array<i32>} : memref<1x4x256x8xf32, #tpu.memory_space<vmem>>, vector<1x1x256x8xf32>,
    %c1_74 = arith.constant 1 : index
    %c0_75 = arith.constant 0 : index
    %c0_76 = arith.constant 0 : index
    %117 = vector.load %arg4[%c1_74, %c0_75, %c0_76] : memref<4x64x8xf32, #tpu.memory_space<vmem>>, vector<1x64x8xf32>
    %118 = vector.shape_cast %117 : vector<1x64x8xf32> to vector<64x8xf32>
    %cst_77 = arith.constant dense<0.000000e+00> : vector<256x8xf32>
    %119 = tpu.matmul %41, %118, %cst_77 {dimension_numbers = #tpu.dot_dimension_numbers<[1], [0], [0], [1], [0, 0, 1, 1], [], []>} : vector<256x64xf32>, vector<64x8xf32>, vector<256x8xf32> -> vector<256x8xf32>
    %120 = vector.shape_cast %92 : vector<16x16x8xf32> to vector<256x8xf32>
    %121 = arith.addf %119, %120 : vector<256x8xf32>
    %c0_78 = arith.constant 0 : index
    %c1_79 = arith.constant 1 : index
    %c0_80 = arith.constant 0 : index
    %c0_81 = arith.constant 0 : index
    %122 = vector.load %arg7[%c0_78, %c1_79, %c0_80, %c0_81] : memref<1x4x256x8xf32, #tpu.memory_space<vmem>>, vector<1x1x256x8xf32>
    %123 = vector.shape_cast %122 : vector<1x1x256x8xf32> to vector<256x8xf32>
    %124 = vector.shape_cast %121 : vector<256x8xf32> to vector<1x1x256x8xf32>
    tpu.vector_store %arg7[%c0_78, %c1_79, %c0_80, %c0_81], %124 {strides = array<i32>} : memref<1x4x256x8xf32, #tpu.memory_space<vmem>>, vector<1x1x256x8xf32>,
    %c2_82 = arith.constant 2 : index
    %c0_83 = arith.constant 0 : index
    %c0_84 = arith.constant 0 : index
    %125 = vector.load %arg4[%c2_82, %c0_83, %c0_84] : memref<4x64x8xf32, #tpu.memory_space<vmem>>, vector<1x64x8xf32>
    %126 = vector.shape_cast %125 : vector<1x64x8xf32> to vector<64x8xf32>
    %cst_85 = arith.constant dense<0.000000e+00> : vector<256x8xf32>
    %127 = tpu.matmul %41, %126, %cst_85 {dimension_numbers = #tpu.dot_dimension_numbers<[1], [0], [0], [1], [0, 0, 1, 1], [], []>} : vector<256x64xf32>, vector<64x8xf32>, vector<256x8xf32> -> vector<256x8xf32>
    %128 = vector.shape_cast %100 : vector<16x16x8xf32> to vector<256x8xf32>
    %129 = arith.addf %127, %128 : vector<256x8xf32>
    %c0_86 = arith.constant 0 : index
    %c2_87 = arith.constant 2 : index
    %c0_88 = arith.constant 0 : index
    %c0_89 = arith.constant 0 : index
    %130 = vector.load %arg7[%c0_86, %c2_87, %c0_88, %c0_89] : memref<1x4x256x8xf32, #tpu.memory_space<vmem>>, vector<1x1x256x8xf32>
    %131 = vector.shape_cast %130 : vector<1x1x256x8xf32> to vector<256x8xf32>
    %132 = vector.shape_cast %129 : vector<256x8xf32> to vector<1x1x256x8xf32>
    tpu.vector_store %arg7[%c0_86, %c2_87, %c0_88, %c0_89], %132 {strides = array<i32>} : memref<1x4x256x8xf32, #tpu.memory_space<vmem>>, vector<1x1x256x8xf32>,
    %c3_90 = arith.constant 3 : index
    %c0_91 = arith.constant 0 : index
    %c0_92 = arith.constant 0 : index
    %133 = vector.load %arg4[%c3_90, %c0_91, %c0_92] : memref<4x64x8xf32, #tpu.memory_space<vmem>>, vector<1x64x8xf32>
    %134 = vector.shape_cast %133 : vector<1x64x8xf32> to vector<64x8xf32>
    %cst_93 = arith.constant dense<0.000000e+00> : vector<256x8xf32>
    %135 = tpu.matmul %41, %134, %cst_93 {dimension_numbers = #tpu.dot_dimension_numbers<[1], [0], [0], [1], [0, 0, 1, 1], [], []>} : vector<256x64xf32>, vector<64x8xf32>, vector<256x8xf32> -> vector<256x8xf32>
    %136 = vector.shape_cast %108 : vector<16x16x8xf32> to vector<256x8xf32>
    %137 = arith.addf %135, %136 : vector<256x8xf32>
    %c0_94 = arith.constant 0 : index
    %c3_95 = arith.constant 3 : index
    %c0_96 = arith.constant 0 : index
    %c0_97 = arith.constant 0 : index
    %138 = vector.load %arg7[%c0_94, %c3_95, %c0_96, %c0_97] : memref<1x4x256x8xf32, #tpu.memory_space<vmem>>, vector<1x1x256x8xf32>
    %139 = vector.shape_cast %138 : vector<1x1x256x8xf32> to vector<256x8xf32>
    %140 = vector.shape_cast %137 : vector<256x8xf32> to vector<1x1x256x8xf32>
    tpu.vector_store %arg7[%c0_94, %c3_95, %c0_96, %c0_97], %140 {strides = array<i32>} : memref<1x4x256x8xf32, #tpu.memory_space<vmem>>, vector<1x1x256x8xf32>,
    return
  }
  func.func @transform_0(%arg0: i32) -> (i32, i32, i32, i32) {
    %c0_i32 = arith.constant 0 : i32
    %c0_i32_0 = arith.constant 0 : i32
    %c0_i32_1 = arith.constant 0 : i32
    %c0_i32_2 = arith.constant 0 : i32
    return %arg0, %c0_i32, %c0_i32_0, %c0_i32_1 : i32, i32, i32, i32
  }
  func.func @transform_1(%arg0: i32) -> (i32, i32) {
    %c0_i32 = arith.constant 0 : i32
    %c0_i32_0 = arith.constant 0 : i32
    %c0_i32_1 = arith.constant 0 : i32
    return %c0_i32, %c0_i32_0 : i32, i32
  }
  func.func @transform_2(%arg0: i32) -> (i32, i32, i32) {
    %c0_i32 = arith.constant 0 : i32
    %c0_i32_0 = arith.constant 0 : i32
    %c0_i32_1 = arith.constant 0 : i32
    %c0_i32_2 = arith.constant 0 : i32
    return %c0_i32, %c0_i32_0, %c0_i32_1 : i32, i32, i32
  }
  func.func @transform_3(%arg0: i32) -> (i32, i32, i32) {
    %c0_i32 = arith.constant 0 : i32
    %c0_i32_0 = arith.constant 0 : i32
    %c0_i32_1 = arith.constant 0 : i32
    %c0_i32_2 = arith.constant 0 : i32
    return %c0_i32, %c0_i32_0, %c0_i32_1 : i32, i32, i32
  }
  func.func @transform_4(%arg0: i32) -> (i32, i32) {
    %c0_i32 = arith.constant 0 : i32
    %c0_i32_0 = arith.constant 0 : i32
    %c0_i32_1 = arith.constant 0 : i32
    return %c0_i32, %c0_i32_0 : i32, i32
  }
  func.func @transform_5(%arg0: i32) -> i32 {
    %c0_i32 = arith.constant 0 : i32
    %c0_i32_0 = arith.constant 0 : i32
    return %c0_i32 : i32
  }
  func.func @transform_6(%arg0: i32) -> (i32, i32, i32, i32) {
    %c0_i32 = arith.constant 0 : i32
    %c0_i32_0 = arith.constant 0 : i32
    %c0_i32_1 = arith.constant 0 : i32
    %c0_i32_2 = arith.constant 0 : i32
    return %arg0, %c0_i32, %c0_i32_0, %c0_i32_1 : i32, i32, i32, i32
  }
}

</mosaic_0001>

<llo_original>
// kernel: tpu_custom_call.1
$region0: #{tpu_custom_call.1}
  #allocation0 [shape = 'u32[]', space=smem, size = 0x4, offset = 0x4, fixed_abs, tag = 'smem constant byte address 0x4 - core index']
  #allocation1 [shape = 'u32[144,128]{1,0:T(1,128)}', space=vmem, size = 0x12000, scoped, tag = 'internal scratch']
  #allocation2 [shape = 'f32[17,17,16]{2,1,0:T(8,128)}', space=vmem, size = 0x33000, scoped, tag = 'scratch operand']
  #allocation3 [shape = 'f32[16,18,8]{2,1,0:T(8,128)}', space=vmem, size = 0x30000, scoped, tag = 'scratch operand']
  %s0 = inlined_call_operand.hbm [shape: f32[2,16,16,16], index: 0, kind: input, shape index: {}]
  %s1 = inlined_call_operand.vmem [shape: f32[16,16], index: 1, kind: input, shape index: {}]
  %s2 = inlined_call_operand.vmem [shape: f32[4,16,64], index: 2, kind: input, shape index: {}]
  %s3 = inlined_call_operand.vmem [shape: f32[4,64,8], index: 3, kind: input, shape index: {}]
  %s4 = inlined_call_operand.vmem [shape: f32[16,8], index: 4, kind: input, shape index: {}]
  %s5 = inlined_call_operand.vmem [shape: f32[2], index: 5, kind: input, shape index: {}]
  %s6 = inlined_call_operand.vmem [shape: f32[2,4,256,8], index: 6, kind: output, shape index: {}]
  %s7 = sld [smem:[#allocation0]]
  $region65: #{tpu_custom_call.1} parent=0
    _
  %s9 = ssub.s32 1, %s7
  %s10 = scalar_select 0, %s9, %s7
  $region1: #{tpu_custom_call.1} parent=0
    #allocation4 [shape = 'u8[262144]{0}', space=vmem, size = 0x40000, scoped, tag = 'input window, operand 0']
    #allocation5 [shape = 's32[2]{0}', space=sflag, size = 0x8, scoped, tag = 'scoped memory for tpu_custom_call.1']
    #allocation6 [shape = 's32[2]{0}', space=sflag, size = 0x8, scoped, tag = 'scoped memory for tpu_custom_call.1']
    #allocation7 [shape = 'u8[512]{0}', space=smem, size = 0x200, scoped, tag = 'input window, operand 5, single buffered']
    %11 = vsyncpa [#allocation5], 0
    %s12 = scalar_lea.sflag [#allocation5], 1
    %13 = vsyncpa %s12, 0
    %14 = vsyncpa [#allocation6], 0
    loop: start=0, step=1, limit=4
    $region2: #{tpu_custom_call.1} parent=1 // loop_pre_header
      _
    $region3: #{tpu_custom_call.1} parent=1 // loop_header
      %s16 = sphi 0, %s20
      %p17 = scmp.ge.s32.totalorder %s16, 4
      %s26 = sphi 0, %s28
      %s29 = sphi 0, %s26
      %s30 = sphi 0, %s29
      %s46 = sphi 0, %s30
      %s50 = sphi 0, %s50
      %s52 = sphi 0, %s50
      %s53 = sphi 0, %s52
      %s67 = sphi 0, %s53
      %s71 = sphi 0, %s71
      %s73 = sphi 0, %s71
      %s74 = sphi 0, %s73
      %s88 = sphi 0, %s74
      %s92 = sphi 0, %s92
      %s94 = sphi 0, %s92
      %s95 = sphi 0, %s94
      %s109 = sphi 0, %s95
      %s113 = sphi 0, %s113
      %s115 = sphi 0, %s113
      %s116 = sphi 0, %s115
      %s130 = sphi 0, %s116
      %s134 = sphi 0, %s134
      %s136 = sphi 0, %s134
      %s137 = sphi 0, %s136
      %s151 = sphi 0, %s137
      %s157 = sphi 0, %s159
      %s160 = sphi 0, %s157
      %s161 = sphi 0, %s160
      %s177 = sphi 0, %s161
    $region4: #{tpu_custom_call.1} parent=1 // loop_header_branch
      %19 = sbr.rel (%p17) target = $region8
    $region5: #{tpu_custom_call.1} parent=1 // loop_body
      %s21 = ssub.s32 %s16, 1
      %s22 = ssub.s32 %s16, 2
      %s23 = sadd.s32 %s16, 1
      %s24 = ssub.s32 %s16, %s23
      %p25 = scmp.eq.s32.totalorder %s24, 0
      %s27 = sadd.s32 %s26, 1
      %s28 = scalar_select %p25, %s26, %s27
      %p31 = pneg %p25
      %p32 = scmp.eq.s32.totalorder %s16, 1
      %p33 = por %p31, %p32
      %p34 = scmp.ne.s32.totalorder %s26, %s29
      %p35 = scmp.eq.s32.totalorder %s16, 0
      %p36 = por %p34, %p35
      %p37 = scmp.ne.s32.totalorder %s26, %s29
      %p38 = scmp.eq.s32.totalorder %s21, 1
      %p39 = por %p37, %p38
      %p40 = scmp.ne.s32.totalorder %s29, %s30
      %p41 = scmp.eq.s32.totalorder %s21, 0
      %p42 = por %p40, %p41
      %p43 = scmp.ne.s32.totalorder %s29, %s30
      %p44 = scmp.eq.s32.totalorder %s22, 1
      %p45 = por %p43, %p44
      %p47 = scmp.ne.s32.totalorder %s30, %s46
      %p48 = scmp.eq.s32.totalorder %s22, 0
      %p49 = por %p47, %p48
      %s51 = sadd.s32 %s50, 1
      %p54 = scmp.eq.s32.totalorder %s16, 1
      %p55 = scmp.ne.s32.totalorder %s50, %s52
      %p56 = scmp.eq.s32.totalorder %s16, 0
      %p57 = por %p55, %p56
      %p58 = scmp.ne.s32.totalorder %s50, %s52
      %p59 = scmp.eq.s32.totalorder %s21, 1
      %p60 = por %p58, %p59
      %p61 = scmp.ne.s32.totalorder %s52, %s53
      %p62 = scmp.eq.s32.totalorder %s21, 0
      %p63 = por %p61, %p62
      %p64 = scmp.ne.s32.totalorder %s52, %s53
      %p65 = scmp.eq.s32.totalorder %s22, 1
      %p66 = por %p64, %p65
      %p68 = scmp.ne.s32.totalorder %s53, %s67
      %p69 = scmp.eq.s32.totalorder %s22, 0
      %p70 = por %p68, %p69
      %s72 = sadd.s32 %s71, 1
      %p75 = scmp.eq.s32.totalorder %s16, 1
      %p76 = scmp.ne.s32.totalorder %s71, %s73
      %p77 = scmp.eq.s32.totalorder %s16, 0
      %p78 = por %p76, %p77
      %p79 = scmp.ne.s32.totalorder %s71, %s73
      %p80 = scmp.eq.s32.totalorder %s21, 1
      %p81 = por %p79, %p80
      %p82 = scmp.ne.s32.totalorder %s73, %s74
      %p83 = scmp.eq.s32.totalorder %s21, 0
      %p84 = por %p82, %p83
      %p85 = scmp.ne.s32.totalorder %s73, %s74
      %p86 = scmp.eq.s32.totalorder %s22, 1
      %p87 = por %p85, %p86
      %p89 = scmp.ne.s32.totalorder %s74, %s88
      %p90 = scmp.eq.s32.totalorder %s22, 0
      %p91 = por %p89, %p90
      %s93 = sadd.s32 %s92, 1
      %p96 = scmp.eq.s32.totalorder %s16, 1
      %p97 = scmp.ne.s32.totalorder %s92, %s94
      %p98 = scmp.eq.s32.totalorder %s16, 0
      %p99 = por %p97, %p98
      %p100 = scmp.ne.s32.totalorder %s92, %s94
      %p101 = scmp.eq.s32.totalorder %s21, 1
      %p102 = por %p100, %p101
      %p103 = scmp.ne.s32.totalorder %s94, %s95
      %p104 = scmp.eq.s32.totalorder %s21, 0
      %p105 = por %p103, %p104
      %p106 = scmp.ne.s32.totalorder %s94, %s95
      %p107 = scmp.eq.s32.totalorder %s22, 1
      %p108 = por %p106, %p107
      %p110 = scmp.ne.s32.totalorder %s95, %s109
      %p111 = scmp.eq.s32.totalorder %s22, 0
      %p112 = por %p110, %p111
      %s114 = sadd.s32 %s113, 1
      %p117 = scmp.eq.s32.totalorder %s16, 1
      %p118 = scmp.ne.s32.totalorder %s113, %s115
      %p119 = scmp.eq.s32.totalorder %s16, 0
      %p120 = por %p118, %p119
      %p121 = scmp.ne.s32.totalorder %s113, %s115
      %p122 = scmp.eq.s32.totalorder %s21, 1
      %p123 = por %p121, %p122
      %p124 = scmp.ne.s32.totalorder %s115, %s116
      %p125 = scmp.eq.s32.totalorder %s21, 0
      %p126 = por %p124, %p125
      %p127 = scmp.ne.s32.totalorder %s115, %s116
      %p128 = scmp.eq.s32.totalorder %s22, 1
      %p129 = por %p127, %p128
      %p131 = scmp.ne.s32.totalorder %s116, %s130
      %p132 = scmp.eq.s32.totalorder %s22, 0
      %p133 = por %p131, %p132
      %s135 = sadd.s32 %s134, 1
      %p138 = scmp.eq.s32.totalorder %s16, 1
      %p139 = scmp.ne.s32.totalorder %s134, %s136
      %p140 = scmp.eq.s32.totalorder %s16, 0
      %p141 = por %p139, %p140
      %p142 = scmp.ne.s32.totalorder %s134, %s136
      %p143 = scmp.eq.s32.totalorder %s21, 1
      %p144 = por %p142, %p143
      %p145 = scmp.ne.s32.totalorder %s136, %s137
      %p146 = scmp.eq.s32.totalorder %s21, 0
      %p147 = por %p145, %p146
      %p148 = scmp.ne.s32.totalorder %s136, %s137
      %p149 = scmp.eq.s32.totalorder %s22, 1
      %p150 = por %p148, %p149
      %p152 = scmp.ne.s32.totalorder %s137, %s151
      %p153 = scmp.eq.s32.totalorder %s22, 0
      %p154 = por %p152, %p153
      %s155 = ssub.s32 %s16, %s23
      %p156 = scmp.eq.s32.totalorder %s155, 0
      %s158 = sadd.s32 %s157, 1
      %s159 = scalar_select %p156, %s157, %s158
      %p162 = pneg %p156
      %p163 = scmp.eq.s32.totalorder %s16, 1
      %p164 = por %p162, %p163
      %p165 = scmp.ne.s32.totalorder %s157, %s160
      %p166 = scmp.eq.s32.totalorder %s16, 0
      %p167 = por %p165, %p166
      %p168 = scmp.ne.s32.totalorder %s157, %s160
      %p169 = scmp.eq.s32.totalorder %s21, 1
      %p170 = por %p168, %p169
      %p171 = scmp.ne.s32.totalorder %s160, %s161
      %p172 = scmp.eq.s32.totalorder %s21, 0
      %p173 = por %p171, %p172
      %p174 = scmp.ne.s32.totalorder %s160, %s161
      %p175 = scmp.eq.s32.totalorder %s22, 1
      %p176 = por %p174, %p175
      %p178 = scmp.ne.s32.totalorder %s161, %s177
      %p179 = scmp.eq.s32.totalorder %s22, 0
      %p180 = por %p178, %p179
      %p181 = scmp.le.s32.totalorder 1, %s16
      %p182 = scmp.lt.s32.totalorder %s16, 3
      %p183 = pnand %p181, %p182
      %p184 = pneg %p183
      // Predicated region
      $region9: #{tpu_custom_call.1} parent=5 // pred_check
        _
      $region10: #{tpu_custom_call.1} parent=5 // pred_check_branch
        %186 = sbr.rel (%p183) target = $region12
      $region11: #{tpu_custom_call.1} parent=5 // pred_region
        %s187 = ssub.s32 %s16, 1
        // Predicated region
        $region13: #{tpu_custom_call.1} parent=11 // pred_check
          %p188 = pneg %p63
        $region14: #{tpu_custom_call.1} parent=11 // pred_check_branch
          %190 = sbr.rel (%p188) target = $region16
        $region15: #{tpu_custom_call.1} parent=11 // pred_region
          _
        $region16: #{tpu_custom_call.1} parent=11 // pred_fallthru
          _
        // Predicated region
        $region17: #{tpu_custom_call.1} parent=11 // pred_check
          %p191 = pneg %p84
        $region18: #{tpu_custom_call.1} parent=11 // pred_check_branch
          %193 = sbr.rel (%p191) target = $region20
        $region19: #{tpu_custom_call.1} parent=11 // pred_region
          _
        $region20: #{tpu_custom_call.1} parent=11 // pred_fallthru
          _
        // Predicated region
        $region21: #{tpu_custom_call.1} parent=11 // pred_check
          %p194 = pneg %p105
        $region22: #{tpu_custom_call.1} parent=11 // pred_check_branch
          %196 = sbr.rel (%p194) target = $region24
        $region23: #{tpu_custom_call.1} parent=11 // pred_region
          _
        $region24: #{tpu_custom_call.1} parent=11 // pred_fallthru
          _
        // Predicated region
        $region25: #{tpu_custom_call.1} parent=11 // pred_check
          %p197 = pneg %p126
        $region26: #{tpu_custom_call.1} parent=11 // pred_check_branch
          %199 = sbr.rel (%p197) target = $region28
        $region27: #{tpu_custom_call.1} parent=11 // pred_region
          _
        $region28: #{tpu_custom_call.1} parent=11 // pred_fallthru
          _
        // Predicated region
        $region29: #{tpu_custom_call.1} parent=11 // pred_check
          %p200 = pneg %p147
        $region30: #{tpu_custom_call.1} parent=11 // pred_check_branch
          %202 = sbr.rel (%p200) target = $region32
        $region31: #{tpu_custom_call.1} parent=11 // pred_region
          %s204 = ssub.s32 16, 16
          %205 = vsyncadd [#allocation6], %s204
          %s207 = sshll.u32 %s5, 4
          %s208 = int_to_ptr.vmem [resolvable:$true] %s207
          %210 = dma.vmem_to_smem %s208, 16, [#allocation7], [#allocation6]
        $region32: #{tpu_custom_call.1} parent=11 // pred_fallthru
          _
      $region12: #{tpu_custom_call.1} parent=5 // pred_fallthru
        _
      %p211 = scmp.lt.s32.totalorder %s16, 2
      // Predicated region
      $region33: #{tpu_custom_call.1} parent=5 // pred_check
        %p212 = pneg %p211
      $region34: #{tpu_custom_call.1} parent=5 // pred_check_branch
        %214 = sbr.rel (%p212) target = $region36
      $region35: #{tpu_custom_call.1} parent=5 // pred_region
        // Predicated region
        $region37: #{tpu_custom_call.1} parent=35 // pred_check
          %p215 = pneg %p36
        $region38: #{tpu_custom_call.1} parent=35 // pred_check_branch
          %217 = sbr.rel (%p215) target = $region40
        $region39: #{tpu_custom_call.1} parent=35 // pred_region
          %s218 = sand.u32 %s26, 1
          %s219 = scalar_lea.sflag [#allocation5], %s218
          %s220 = sand.u32 %s26, 1
          %s221 = smul.addr %s220, 256
          %s222 = scalar_lea.vmem [#allocation4], %s221
          %s224 = ssub.s32 4096, 4096
          %225 = vsyncadd %s219, %s224
          %s226 = smul.addr %s16, 32
          %s227 = smul.addr %s226, 128
          %s228 = scalar_lea.hbm %s0, %s227
          %s229 = sshll.u32 %s222, 4
          %s230 = int_to_ptr.vmem [resolvable:$true] %s229
          %235 = dma.hbm_to_vmem [thread:$0]  %s228, 4096, %s230, %s219, 128, 128, 8
        $region40: #{tpu_custom_call.1} parent=35 // pred_fallthru
          _
      $region36: #{tpu_custom_call.1} parent=5 // pred_fallthru
        _
      %p236 = scmp.le.s32.totalorder 1, %s16
      %p237 = scmp.lt.s32.totalorder %s16, 3
      %p238 = pnand %p236, %p237
      %p239 = pneg %p238
      // Predicated region
      $region41: #{tpu_custom_call.1} parent=5 // pred_check
        _
      $region42: #{tpu_custom_call.1} parent=5 // pred_check_branch
        %241 = sbr.rel (%p238) target = $region44
      $region43: #{tpu_custom_call.1} parent=5 // pred_region
        %s242 = ssub.s32 %s16, 1
        %s243 = sand.u32 %s29, 1
        %s244 = scalar_lea.sflag [#allocation5], %s243
        %s245 = sand.u32 %s29, 1
        %s246 = smul.addr %s245, 256
        %s247 = scalar_lea.vmem [#allocation4], %s246
        // Predicated region
        $region45: #{tpu_custom_call.1} parent=43 // pred_check
          %p248 = pneg %p42
        $region46: #{tpu_custom_call.1} parent=43 // pred_check_branch
          %250 = sbr.rel (%p248) target = $region48
        $region47: #{tpu_custom_call.1} parent=43 // pred_region
          %251 = dma.done %s244, 4096
        $region48: #{tpu_custom_call.1} parent=43 // pred_fallthru
          _
        // Predicated region
        $region49: #{tpu_custom_call.1} parent=43 // pred_check
          %p252 = pneg %p147
        $region50: #{tpu_custom_call.1} parent=43 // pred_check_branch
          %254 = sbr.rel (%p252) target = $region52
        $region51: #{tpu_custom_call.1} parent=43 // pred_region
          %255 = dma.done [#allocation6], 16
        $region52: #{tpu_custom_call.1} parent=43 // pred_fallthru
          _
        %256 = sfence
        %s257 = sand.u32 %s29, 1
        %s258 = scalar_lea.sflag [#allocation5], %s257
        %s259 = sand.u32 %s29, 1
        %s260 = smul.addr %s259, 256
        %s261 = scalar_lea.vmem [#allocation4], %s260
        %p262 = pneg %p42
        %p263 = pneg %p39
        %p264 = pneg %p63
        %p265 = pneg %p60
        %p266 = pneg %p84
        %p267 = pneg %p81
        %p268 = pneg %p105
        %p269 = pneg %p102
        %p270 = pneg %p126
        %p271 = pneg %p123
        %p272 = pneg %p147
        %p273 = pneg %p144
        %p274 = pneg %p173
        %p275 = pneg %p170
        %p276 = scmp.lt.s32.totalorder %s21, 1
        %s277 = scalar_select %p276, %s21, 1
        %s278 = smul.addr %s277, 128
        %s279 = smul.addr %s278, 8
        %s280 = scalar_lea.vmem %s6, %s279
        %p281 = scmp.lt.s32.totalorder %s21, 1
        %s282 = scalar_select %p281, %s21, 1
        %s283 = smul.addr %s282, 128
        %s284 = smul.addr %s283, 8
        %s285 = scalar_lea.vmem %s6, %s284
        %s286 = sld [smem:[#allocation7]]
        %s287 = sld [smem:[#allocation7 + $0x1]]
        %v288 = vld [vmem:[%s247] sm:$0xff]
        %v289 = vld [vmem:[%s247 + $0x8] sm:$0xff]
        %v290 = vld [vmem:[%s247 + $0x10] sm:$0xff]
        %v291 = vld [vmem:[%s247 + $0x18] sm:$0xff]
        %v292 = vld [vmem:[%s247 + $0x20] sm:$0xff]
        %v293 = vld [vmem:[%s247 + $0x28] sm:$0xff]
        %v294 = vld [vmem:[%s247 + $0x30] sm:$0xff]
        %v295 = vld [vmem:[%s247 + $0x38] sm:$0xff]
        %v296 = vld [vmem:[%s247 + $0x40] sm:$0xff]
        %v297 = vld [vmem:[%s247 + $0x48] sm:$0xff]
        %v298 = vld [vmem:[%s247 + $0x50] sm:$0xff]
        %v299 = vld [vmem:[%s247 + $0x58] sm:$0xff]
        %v300 = vld [vmem:[%s247 + $0x60] sm:$0xff]
        %v301 = vld [vmem:[%s247 + $0x68] sm:$0xff]
        %v302 = vld [vmem:[%s247 + $0x70] sm:$0xff]
        %v303 = vld [vmem:[%s247 + $0x78] sm:$0xff]
        %v304 = vld [vmem:[%s247 + $0x80] sm:$0xff]
        %v305 = vld [vmem:[%s247 + $0x88] sm:$0xff]
        %v306 = vld [vmem:[%s247 + $0x90] sm:$0xff]
        %v307 = vld [vmem:[%s247 + $0x98] sm:$0xff]
        %v308 = vld [vmem:[%s247 + $0xa0] sm:$0xff]
        %v309 = vld [vmem:[%s247 + $0xa8] sm:$0xff]
        %v310 = vld [vmem:[%s247 + $0xb0] sm:$0xff]
        %v311 = vld [vmem:[%s247 + $0xb8] sm:$0xff]
        %v312 = vld [vmem:[%s247 + $0xc0] sm:$0xff]
        %v313 = vld [vmem:[%s247 + $0xc8] sm:$0xff]
        %v314 = vld [vmem:[%s247 + $0xd0] sm:$0xff]
        %v315 = vld [vmem:[%s247 + $0xd8] sm:$0xff]
        %v316 = vld [vmem:[%s247 + $0xe0] sm:$0xff]
        %v317 = vld [vmem:[%s247 + $0xe8] sm:$0xff]
        %v318 = vld [vmem:[%s247 + $0xf0] sm:$0xff]
        %v319 = vld [vmem:[%s247 + $0xf8] sm:$0xff]
        %v320 = vld [vmem:[%s1] sm:$0xff]
        %v321 = vld [vmem:[%s1 + $0x8] sm:$0xff]
        %vm322 = vcmask 130048
        %v324 = vsel %vm322, %v288, 0
        %v327 = vsel %vm322, %v289, 0
        %v330 = vsel %vm322, %v290, 0
        %v333 = vsel %vm322, %v291, 0
        %v336 = vsel %vm322, %v292, 0
        %v339 = vsel %vm322, %v293, 0
        %v342 = vsel %vm322, %v294, 0
        %v345 = vsel %vm322, %v295, 0
        %v348 = vsel %vm322, %v296, 0
        %v351 = vsel %vm322, %v297, 0
        %v354 = vsel %vm322, %v298, 0
        %v357 = vsel %vm322, %v299, 0
        %v360 = vsel %vm322, %v300, 0
        %v363 = vsel %vm322, %v301, 0
        %v366 = vsel %vm322, %v302, 0
        %v369 = vsel %vm322, %v303, 0
        %v372 = vsel %vm322, %v304, 0
        %v375 = vsel %vm322, %v305, 0
        %v378 = vsel %vm322, %v306, 0
        %v381 = vsel %vm322, %v307, 0
        %v384 = vsel %vm322, %v308, 0
        %v387 = vsel %vm322, %v309, 0
        %v390 = vsel %vm322, %v310, 0
        %v393 = vsel %vm322, %v311, 0
        %v396 = vsel %vm322, %v312, 0
        %v399 = vsel %vm322, %v313, 0
        %v402 = vsel %vm322, %v314, 0
        %v405 = vsel %vm322, %v315, 0
        %v408 = vsel %vm322, %v316, 0
        %v411 = vsel %vm322, %v317, 0
        %v414 = vsel %vm322, %v318, 0
        %v417 = vsel %vm322, %v319, 0
        %419 = vmatprep.subr.mxu0 0.0
        %420 = vmatpush1.msra.mxu0 0.0
        %421 = vmatprep.subr.mxu0 0.0
        %422 = vmatpush1.msra.mxu0 0.0
        %423 = vmatprep.subr.mxu0 0.0
        %424 = vmatpush1.msra.mxu0 0.0
        %425 = vmatprep.subr.mxu0 0.0
        %426 = vmatpush1.msra.mxu0 0.0
        %427 = vmatprep.subr.mxu0 0.0
        %428 = vmatpush1.msra.mxu0 0.0
        %429 = vmatprep.subr.mxu0 0.0
        %430 = vmatpush1.msra.mxu0 0.0
        %431 = vmatprep.subr.mxu0 0.0
        %432 = vmatpush1.msra.mxu0 0.0
        %433 = vmatprep.subr.mxu0 0.0
        %434 = vmatpush1.msra.mxu0 0.0
        %435 = vmatprep.subr.mxu0 0.0
        %436 = vmatpush1.msra.mxu0 0.0
        %437 = vmatprep.subr.mxu0 0.0
        %438 = vmatpush1.msra.mxu0 0.0
        %439 = vmatprep.subr.mxu0 0.0
        %440 = vmatpush1.msra.mxu0 0.0
        %441 = vmatprep.subr.mxu0 0.0
        %442 = vmatpush1.msra.mxu0 0.0
        %443 = vmatprep.subr.mxu0 0.0
        %444 = vmatpush1.msra.mxu0 0.0
        %445 = vmatprep.subr.mxu0 0.0
        %446 = vmatpush1.msra.mxu0 0.0
        %447 = vmatprep.subr.mxu0 0.0
        %448 = vmatpush1.msra.mxu0 %v321
        %449 = vmatprep.subr.mxu0 0.0
        %450 = vmatpush1.msra.mxu0 %v320
        %451 = vmatprep.subr.mxu0 0.0
        %452 = vmatpush2.msra.mxu0 0.0
        %453 = vmatprep.subr.mxu0 0.0
        %454 = vmatpush2.msra.mxu0 0.0
        %455 = vmatprep.subr.mxu0 0.0
        %456 = vmatpush2.msra.mxu0 0.0
        %457 = vmatprep.subr.mxu0 0.0
        %458 = vmatpush2.msra.mxu0 0.0
        %459 = vmatprep.subr.mxu0 0.0
        %460 = vmatpush2.msra.mxu0 0.0
        %461 = vmatprep.subr.mxu0 0.0
        %462 = vmatpush2.msra.mxu0 0.0
        %463 = vmatprep.subr.mxu0 0.0
        %464 = vmatpush2.msra.mxu0 0.0
        %465 = vmatprep.subr.mxu0 0.0
        %466 = vmatpush2.msra.mxu0 0.0
        %467 = vmatprep.subr.mxu0 0.0
        %468 = vmatpush2.msra.mxu0 0.0
        %469 = vmatprep.subr.mxu0 0.0
        %470 = vmatpush2.msra.mxu0 0.0
        %471 = vmatprep.subr.mxu0 0.0
        %472 = vmatpush2.msra.mxu0 0.0
        %473 = vmatprep.subr.mxu0 0.0
        %474 = vmatpush2.msra.mxu0 0.0
        %475 = vmatprep.subr.mxu0 0.0
        %476 = vmatpush2.msra.mxu0 0.0
        %477 = vmatprep.subr.mxu0 0.0
        %478 = vmatpush2.msra.mxu0 0.0
        %479 = vmatprep.subr.mxu0 0.0
        %480 = vmatpush2.msra.mxu0 0.0
        %481 = vmatprep.subr.mxu0 0.0
        %482 = vmatpush2.msra.mxu0 0.0
        %483 = vmatprep.mubr.f32.mxu0 0.0
        %484 = vmatmul.mubr.f32.gmra.mxu0 %v324
        %v485 = vpop.f32.mrf.mxu0
        %v486 = vadd.f32 0.0, %v485
        %v487 = vpop.f32.mrf.mxu0
        %488 = vmatprep.mubr.f32.mxu0 0.0
        %489 = vmatmul.mubr.f32.gmra.mxu0 %v327
        %v490 = vpop.f32.mrf.mxu0
        %v491 = vadd.f32 0.0, %v490
        %v492 = vpop.f32.mrf.mxu0
        %493 = vmatprep.mubr.f32.mxu0 0.0
        %494 = vmatmul.mubr.f32.gmra.mxu0 %v330
        %v495 = vpop.f32.mrf.mxu0
        %v496 = vadd.f32 0.0, %v495
        %v497 = vpop.f32.mrf.mxu0
        %498 = vmatprep.mubr.f32.mxu0 0.0
        %499 = vmatmul.mubr.f32.gmra.mxu0 %v333
        %v500 = vpop.f32.mrf.mxu0
        %v501 = vadd.f32 0.0, %v500
        %v502 = vpop.f32.mrf.mxu0
        %503 = vmatprep.mubr.f32.mxu0 0.0
        %504 = vmatmul.mubr.f32.gmra.mxu0 %v336
        %v505 = vpop.f32.mrf.mxu0
        %v506 = vadd.f32 0.0, %v505
        %v507 = vpop.f32.mrf.mxu0
        %508 = vmatprep.mubr.f32.mxu0 0.0
        %509 = vmatmul.mubr.f32.gmra.mxu0 %v339
        %v510 = vpop.f32.mrf.mxu0
        %v511 = vadd.f32 0.0, %v510
        %v512 = vpop.f32.mrf.mxu0
        %513 = vmatprep.mubr.f32.mxu0 0.0
        %514 = vmatmul.mubr.f32.gmra.mxu0 %v342
        %v515 = vpop.f32.mrf.mxu0
        %v516 = vadd.f32 0.0, %v515
        %v517 = vpop.f32.mrf.mxu0
        %518 = vmatprep.mubr.f32.mxu0 0.0
        %519 = vmatmul.mubr.f32.gmra.mxu0 %v345
        %v520 = vpop.f32.mrf.mxu0
        %v521 = vadd.f32 0.0, %v520
        %v522 = vpop.f32.mrf.mxu0
        %523 = vmatprep.mubr.f32.mxu0 0.0
        %524 = vmatmul.mubr.f32.gmra.mxu0 %v348
        %v525 = vpop.f32.mrf.mxu0
        %v526 = vadd.f32 0.0, %v525
        %v527 = vpop.f32.mrf.mxu0
        %528 = vmatprep.mubr.f32.mxu0 0.0
        %529 = vmatmul.mubr.f32.gmra.mxu0 %v351
        %v530 = vpop.f32.mrf.mxu0
        %v531 = vadd.f32 0.0, %v530
        %v532 = vpop.f32.mrf.mxu0
        %533 = vmatprep.mubr.f32.mxu0 0.0
        %534 = vmatmul.mubr.f32.gmra.mxu0 %v354
        %v535 = vpop.f32.mrf.mxu0
        %v536 = vadd.f32 0.0, %v535
        %v537 = vpop.f32.mrf.mxu0
        %538 = vmatprep.mubr.f32.mxu0 0.0
        %539 = vmatmul.mubr.f32.gmra.mxu0 %v357
        %v540 = vpop.f32.mrf.mxu0
        %v541 = vadd.f32 0.0, %v540
        %v542 = vpop.f32.mrf.mxu0
        %543 = vmatprep.mubr.f32.mxu0 0.0
        %544 = vmatmul.mubr.f32.gmra.mxu0 %v360
        %v545 = vpop.f32.mrf.mxu0
        %v546 = vadd.f32 0.0, %v545
        %v547 = vpop.f32.mrf.mxu0
        %548 = vmatprep.mubr.f32.mxu0 0.0
        %549 = vmatmul.mubr.f32.gmra.mxu0 %v363
        %v550 = vpop.f32.mrf.mxu0
        %v551 = vadd.f32 0.0, %v550
        %v552 = vpop.f32.mrf.mxu0
        %553 = vmatprep.mubr.f32.mxu0 0.0
        %554 = vmatmul.mubr.f32.gmra.mxu0 %v366
        %v555 = vpop.f32.mrf.mxu0
        %v556 = vadd.f32 0.0, %v555
        %v557 = vpop.f32.mrf.mxu0
        %558 = vmatprep.mubr.f32.mxu0 0.0
        %559 = vmatmul.mubr.f32.gmra.mxu0 %v369
        %v560 = vpop.f32.mrf.mxu0
        %v561 = vadd.f32 0.0, %v560
        %v562 = vpop.f32.mrf.mxu0
        %563 = vmatprep.mubr.f32.mxu0 0.0
        %564 = vmatmul.mubr.f32.gmra.mxu0 %v372
        %v565 = vpop.f32.mrf.mxu0
        %v566 = vadd.f32 0.0, %v565
        %v567 = vpop.f32.mrf.mxu0
        %568 = vmatprep.mubr.f32.mxu0 0.0
        %569 = vmatmul.mubr.f32.gmra.mxu0 %v375
        %v570 = vpop.f32.mrf.mxu0
        %v571 = vadd.f32 0.0, %v570
        %v572 = vpop.f32.mrf.mxu0
        %573 = vmatprep.mubr.f32.mxu0 0.0
        %574 = vmatmul.mubr.f32.gmra.mxu0 %v378
        %v575 = vpop.f32.mrf.mxu0
        %v576 = vadd.f32 0.0, %v575
        %v577 = vpop.f32.mrf.mxu0
        %578 = vmatprep.mubr.f32.mxu0 0.0
        %579 = vmatmul.mubr.f32.gmra.mxu0 %v381
        %v580 = vpop.f32.mrf.mxu0
        %v581 = vadd.f32 0.0, %v580
        %v582 = vpop.f32.mrf.mxu0
        %583 = vmatprep.mubr.f32.mxu0 0.0
        %584 = vmatmul.mubr.f32.gmra.mxu0 %v384
        %v585 = vpop.f32.mrf.mxu0
        %v586 = vadd.f32 0.0, %v585
        %v587 = vpop.f32.mrf.mxu0
        %588 = vmatprep.mubr.f32.mxu0 0.0
        %589 = vmatmul.mubr.f32.gmra.mxu0 %v387
        %v590 = vpop.f32.mrf.mxu0
        %v591 = vadd.f32 0.0, %v590
        %v592 = vpop.f32.mrf.mxu0
        %593 = vmatprep.mubr.f32.mxu0 0.0
        %594 = vmatmul.mubr.f32.gmra.mxu0 %v390
        %v595 = vpop.f32.mrf.mxu0
        %v596 = vadd.f32 0.0, %v595
        %v597 = vpop.f32.mrf.mxu0
        %598 = vmatprep.mubr.f32.mxu0 0.0
        %599 = vmatmul.mubr.f32.gmra.mxu0 %v393
        %v600 = vpop.f32.mrf.mxu0
        %v601 = vadd.f32 0.0, %v600
        %v602 = vpop.f32.mrf.mxu0
        %603 = vmatprep.mubr.f32.mxu0 0.0
        %604 = vmatmul.mubr.f32.gmra.mxu0 %v396
        %v605 = vpop.f32.mrf.mxu0
        %v606 = vadd.f32 0.0, %v605
        %v607 = vpop.f32.mrf.mxu0
        %608 = vmatprep.mubr.f32.mxu0 0.0
        %609 = vmatmul.mubr.f32.gmra.mxu0 %v399
        %v610 = vpop.f32.mrf.mxu0
        %v611 = vadd.f32 0.0, %v610
        %v612 = vpop.f32.mrf.mxu0
        %613 = vmatprep.mubr.f32.mxu0 0.0
        %614 = vmatmul.mubr.f32.gmra.mxu0 %v402
        %v615 = vpop.f32.mrf.mxu0
        %v616 = vadd.f32 0.0, %v615
        %v617 = vpop.f32.mrf.mxu0
        %618 = vmatprep.mubr.f32.mxu0 0.0
        %619 = vmatmul.mubr.f32.gmra.mxu0 %v405
        %v620 = vpop.f32.mrf.mxu0
        %v621 = vadd.f32 0.0, %v620
        %v622 = vpop.f32.mrf.mxu0
        %623 = vmatprep.mubr.f32.mxu0 0.0
        %624 = vmatmul.mubr.f32.gmra.mxu0 %v408
        %v625 = vpop.f32.mrf.mxu0
        %v626 = vadd.f32 0.0, %v625
        %v627 = vpop.f32.mrf.mxu0
        %628 = vmatprep.mubr.f32.mxu0 0.0
        %629 = vmatmul.mubr.f32.gmra.mxu0 %v411
        %v630 = vpop.f32.mrf.mxu0
        %v631 = vadd.f32 0.0, %v630
        %v632 = vpop.f32.mrf.mxu0
        %633 = vmatprep.mubr.f32.mxu0 0.0
        %634 = vmatmul.mubr.f32.gmra.mxu0 %v414
        %v635 = vpop.f32.mrf.mxu0
        %v636 = vadd.f32 0.0, %v635
        %v637 = vpop.f32.mrf.mxu0
        %638 = vmatprep.mubr.f32.mxu0 0.0
        %639 = vmatmul.mubr.f32.gmra.mxu0 %v417
        %v640 = vpop.f32.mrf.mxu0
        %v641 = vadd.f32 0.0, %v640
        %v642 = vpop.f32.mrf.mxu0
        %643 = vdwg.mxu0
        %vm644 = vcmp.gt.f32.partialorder %v486, 0.0
        %vm645 = vcmp.gt.f32.partialorder %v491, 0.0
        %vm646 = vcmp.gt.f32.partialorder %v496, 0.0
        %vm647 = vcmp.gt.f32.partialorder %v501, 0.0
        %vm648 = vcmp.gt.f32.partialorder %v506, 0.0
        %vm649 = vcmp.gt.f32.partialorder %v511, 0.0
        %vm650 = vcmp.gt.f32.partialorder %v516, 0.0
        %vm651 = vcmp.gt.f32.partialorder %v521, 0.0
        %vm652 = vcmp.gt.f32.partialorder %v526, 0.0
        %vm653 = vcmp.gt.f32.partialorder %v531, 0.0
        %vm654 = vcmp.gt.f32.partialorder %v536, 0.0
        %vm655 = vcmp.gt.f32.partialorder %v541, 0.0
        %vm656 = vcmp.gt.f32.partialorder %v546, 0.0
        %vm657 = vcmp.gt.f32.partialorder %v551, 0.0
        %vm658 = vcmp.gt.f32.partialorder %v556, 0.0
        %vm659 = vcmp.gt.f32.partialorder %v561, 0.0
        %vm660 = vcmp.gt.f32.partialorder %v566, 0.0
        %vm661 = vcmp.gt.f32.partialorder %v571, 0.0
        %vm662 = vcmp.gt.f32.partialorder %v576, 0.0
        %vm663 = vcmp.gt.f32.partialorder %v581, 0.0
        %vm664 = vcmp.gt.f32.partialorder %v586, 0.0
        %vm665 = vcmp.gt.f32.partialorder %v591, 0.0
        %vm666 = vcmp.gt.f32.partialorder %v596, 0.0
        %vm667 = vcmp.gt.f32.partialorder %v601, 0.0
        %vm668 = vcmp.gt.f32.partialorder %v606, 0.0
        %vm669 = vcmp.gt.f32.partialorder %v611, 0.0
        %vm670 = vcmp.gt.f32.partialorder %v616, 0.0
        %vm671 = vcmp.gt.f32.partialorder %v621, 0.0
        %vm672 = vcmp.gt.f32.partialorder %v626, 0.0
        %vm673 = vcmp.gt.f32.partialorder %v631, 0.0
        %vm674 = vcmp.gt.f32.partialorder %v636, 0.0
        %vm675 = vcmp.gt.f32.partialorder %v641, 0.0
        %v676 = vstv %s286
        %v677 = vmul.f32 %v676, %v486
        %v678 = vmul.f32 %v676, %v491
        %v679 = vmul.f32 %v676, %v496
        %v680 = vmul.f32 %v676, %v501
        %v681 = vmul.f32 %v676, %v506
        %v682 = vmul.f32 %v676, %v511
        %v683 = vmul.f32 %v676, %v516
        %v684 = vmul.f32 %v676, %v521
        %v685 = vmul.f32 %v676, %v526
        %v686 = vmul.f32 %v676, %v531
        %v687 = vmul.f32 %v676, %v536
        %v688 = vmul.f32 %v676, %v541
        %v689 = vmul.f32 %v676, %v546
        %v690 = vmul.f32 %v676, %v551
        %v691 = vmul.f32 %v676, %v556
        %v692 = vmul.f32 %v676, %v561
        %v693 = vmul.f32 %v676, %v566
        %v694 = vmul.f32 %v676, %v571
        %v695 = vmul.f32 %v676, %v576
        %v696 = vmul.f32 %v676, %v581
        %v697 = vmul.f32 %v676, %v586
        %v698 = vmul.f32 %v676, %v591
        %v699 = vmul.f32 %v676, %v596
        %v700 = vmul.f32 %v676, %v601
        %v701 = vmul.f32 %v676, %v606
        %v702 = vmul.f32 %v676, %v611
        %v703 = vmul.f32 %v676, %v616
        %v704 = vmul.f32 %v676, %v621
        %v705 = vmul.f32 %v676, %v626
        %v706 = vmul.f32 %v676, %v631
        %v707 = vmul.f32 %v676, %v636
        %v708 = vmul.f32 %v676, %v641
        %v709 = vsel %vm644, %v486, %v677
        %v710 = vsel %vm645, %v491, %v678
        %v711 = vsel %vm646, %v496, %v679
        %v712 = vsel %vm647, %v501, %v680
        %v713 = vsel %vm648, %v506, %v681
        %v714 = vsel %vm649, %v511, %v682
        %v715 = vsel %vm650, %v516, %v683
        %v716 = vsel %vm651, %v521, %v684
        %v717 = vsel %vm652, %v526, %v685
        %v718 = vsel %vm653, %v531, %v686
        %v719 = vsel %vm654, %v536, %v687
        %v720 = vsel %vm655, %v541, %v688
        %v721 = vsel %vm656, %v546, %v689
        %v722 = vsel %vm657, %v551, %v690
        %v723 = vsel %vm658, %v556, %v691
        %v724 = vsel %vm659, %v561, %v692
        %v725 = vsel %vm660, %v566, %v693
        %v726 = vsel %vm661, %v571, %v694
        %v727 = vsel %vm662, %v576, %v695
        %v728 = vsel %vm663, %v581, %v696
        %v729 = vsel %vm664, %v586, %v697
        %v730 = vsel %vm665, %v591, %v698
        %v731 = vsel %vm666, %v596, %v699
        %v732 = vsel %vm667, %v601, %v700
        %v733 = vsel %vm668, %v606, %v701
        %v734 = vsel %vm669, %v611, %v702
        %v735 = vsel %vm670, %v616, %v703
        %v736 = vsel %vm671, %v621, %v704
        %v737 = vsel %vm672, %v626, %v705
        %v738 = vsel %vm673, %v631, %v706
        %v739 = vsel %vm674, %v636, %v707
        %v740 = vsel %vm675, %v641, %v708
        %741 = vst.msk [vmem:[#allocation2] sm:$0xff] %vm322, 0.0
        %742 = vst.msk [vmem:[#allocation2 + $0x8] sm:$0xff] %vm322, 0.0
        %vm743 = vcmask 122880
        %744 = vst.msk [vmem:[#allocation2 + $0x10] sm:$0x1] %vm743, 0.0
        %745 = vst.msk [vmem:[#allocation2 + $0x18] sm:$0xff] %vm322, 0.0
        %746 = vst.msk [vmem:[#allocation2 + $0x20] sm:$0xff] %vm322, 0.0
        %747 = vst.msk [vmem:[#allocation2 + $0x28] sm:$0x1] %vm743, 0.0
        %748 = vst.msk [vmem:[#allocation2 + $0x30] sm:$0xff] %vm322, 0.0
        %749 = vst.msk [vmem:[#allocation2 + $0x38] sm:$0xff] %vm322, 0.0
        %750 = vst.msk [vmem:[#allocation2 + $0x40] sm:$0x1] %vm743, 0.0
        %751 = vst.msk [vmem:[#allocation2 + $0x48] sm:$0xff] %vm322, 0.0
        %752 = vst.msk [vmem:[#allocation2 + $0x50] sm:$0xff] %vm322, 0.0
        %753 = vst.msk [vmem:[#allocation2 + $0x58] sm:$0x1] %vm743, 0.0
        %754 = vst.msk [vmem:[#allocation2 + $0x60] sm:$0xff] %vm322, 0.0
        %755 = vst.msk [vmem:[#allocation2 + $0x68] sm:$0xff] %vm322, 0.0
        %756 = vst.msk [vmem:[#allocation2 + $0x70] sm:$0x1] %vm743, 0.0
        %757 = vst.msk [vmem:[#allocation2 + $0x78] sm:$0xff] %vm322, 0.0
        %758 = vst.msk [vmem:[#allocation2 + $0x80] sm:$0xff] %vm322, 0.0
        %759 = vst.msk [vmem:[#allocation2 + $0x88] sm:$0x1] %vm743, 0.0
        %760 = vst.msk [vmem:[#allocation2 + $0x90] sm:$0xff] %vm322, 0.0
        %761 = vst.msk [vmem:[#allocation2 + $0x98] sm:$0xff] %vm322, 0.0
        %762 = vst.msk [vmem:[#allocation2 + $0xa0] sm:$0x1] %vm743, 0.0
        %763 = vst.msk [vmem:[#allocation2 + $0xa8] sm:$0xff] %vm322, 0.0
        %764 = vst.msk [vmem:[#allocation2 + $0xb0] sm:$0xff] %vm322, 0.0
        %765 = vst.msk [vmem:[#allocation2 + $0xb8] sm:$0x1] %vm743, 0.0
        %766 = vst.msk [vmem:[#allocation2 + $0xc0] sm:$0xff] %vm322, 0.0
        %767 = vst.msk [vmem:[#allocation2 + $0xc8] sm:$0xff] %vm322, 0.0
        %768 = vst.msk [vmem:[#allocation2 + $0xd0] sm:$0x1] %vm743, 0.0
        %769 = vst.msk [vmem:[#allocation2 + $0xd8] sm:$0xff] %vm322, 0.0
        %770 = vst.msk [vmem:[#allocation2 + $0xe0] sm:$0xff] %vm322, 0.0
        %771 = vst.msk [vmem:[#allocation2 + $0xe8] sm:$0x1] %vm743, 0.0
        %772 = vst.msk [vmem:[#allocation2 + $0xf0] sm:$0xff] %vm322, 0.0
        %773 = vst.msk [vmem:[#allocation2 + $0xf8] sm:$0xff] %vm322, 0.0
        %774 = vst.msk [vmem:[#allocation2 + $0x100] sm:$0x1] %vm743, 0.0
        %775 = vst.msk [vmem:[#allocation2 + $0x108] sm:$0xff] %vm322, 0.0
        %776 = vst.msk [vmem:[#allocation2 + $0x110] sm:$0xff] %vm322, 0.0
        %777 = vst.msk [vmem:[#allocation2 + $0x118] sm:$0x1] %vm743, 0.0
        %778 = vst.msk [vmem:[#allocation2 + $0x120] sm:$0xff] %vm322, 0.0
        %779 = vst.msk [vmem:[#allocation2 + $0x128] sm:$0xff] %vm322, 0.0
        %780 = vst.msk [vmem:[#allocation2 + $0x130] sm:$0x1] %vm743, 0.0
        %781 = vst.msk [vmem:[#allocation2 + $0x138] sm:$0xff] %vm322, 0.0
        %782 = vst.msk [vmem:[#allocation2 + $0x140] sm:$0xff] %vm322, 0.0
        %783 = vst.msk [vmem:[#allocation2 + $0x148] sm:$0x1] %vm743, 0.0
        %784 = vst.msk [vmem:[#allocation2 + $0x150] sm:$0xff] %vm322, 0.0
        %785 = vst.msk [vmem:[#allocation2 + $0x158] sm:$0xff] %vm322, 0.0
        %786 = vst.msk [vmem:[#allocation2 + $0x160] sm:$0x1] %vm743, 0.0
        %787 = vst.msk [vmem:[#allocation2 + $0x168] sm:$0xff] %vm322, 0.0
        %788 = vst.msk [vmem:[#allocation2 + $0x170] sm:$0xff] %vm322, 0.0
        %789 = vst.msk [vmem:[#allocation2 + $0x178] sm:$0x1] %vm743, 0.0
        %790 = vst.msk [vmem:[#allocation2 + $0x180] sm:$0xff] %vm322, 0.0
        %791 = vst.msk [vmem:[#allocation2 + $0x188] sm:$0xff] %vm322, 0.0
        %792 = vst.msk [vmem:[#allocation2 + $0x190] sm:$0x1] %vm743, 0.0
        %793 = vst.msk [vmem:[#allocation2] sm:$0xff] %vm322, %v709
        %794 = vst.msk [vmem:[#allocation2 + $0x8] sm:$0xff] %vm322, %v710
        %795 = vst.msk [vmem:[#allocation2 + $0x18] sm:$0xff] %vm322, %v711
        %796 = vst.msk [vmem:[#allocation2 + $0x20] sm:$0xff] %vm322, %v712
        %797 = vst.msk [vmem:[#allocation2 + $0x30] sm:$0xff] %vm322, %v713
        %798 = vst.msk [vmem:[#allocation2 + $0x38] sm:$0xff] %vm322, %v714
        %799 = vst.msk [vmem:[#allocation2 + $0x48] sm:$0xff] %vm322, %v715
        %800 = vst.msk [vmem:[#allocation2 + $0x50] sm:$0xff] %vm322, %v716
        %801 = vst.msk [vmem:[#allocation2 + $0x60] sm:$0xff] %vm322, %v717
        %802 = vst.msk [vmem:[#allocation2 + $0x68] sm:$0xff] %vm322, %v718
        %803 = vst.msk [vmem:[#allocation2 + $0x78] sm:$0xff] %vm322, %v719
        %804 = vst.msk [vmem:[#allocation2 + $0x80] sm:$0xff] %vm322, %v720
        %805 = vst.msk [vmem:[#allocation2 + $0x90] sm:$0xff] %vm322, %v721
        %806 = vst.msk [vmem:[#allocation2 + $0x98] sm:$0xff] %vm322, %v722
        %807 = vst.msk [vmem:[#allocation2 + $0xa8] sm:$0xff] %vm322, %v723
        %808 = vst.msk [vmem:[#allocation2 + $0xb0] sm:$0xff] %vm322, %v724
        %809 = vst.msk [vmem:[#allocation2 + $0xc0] sm:$0xff] %vm322, %v725
        %810 = vst.msk [vmem:[#allocation2 + $0xc8] sm:$0xff] %vm322, %v726
        %811 = vst.msk [vmem:[#allocation2 + $0xd8] sm:$0xff] %vm322, %v727
        %812 = vst.msk [vmem:[#allocation2 + $0xe0] sm:$0xff] %vm322, %v728
        %813 = vst.msk [vmem:[#allocation2 + $0xf0] sm:$0xff] %vm322, %v729
        %814 = vst.msk [vmem:[#allocation2 + $0xf8] sm:$0xff] %vm322, %v730
        %815 = vst.msk [vmem:[#allocation2 + $0x108] sm:$0xff] %vm322, %v731
        %816 = vst.msk [vmem:[#allocation2 + $0x110] sm:$0xff] %vm322, %v732
        %817 = vst.msk [vmem:[#allocation2 + $0x120] sm:$0xff] %vm322, %v733
        %818 = vst.msk [vmem:[#allocation2 + $0x128] sm:$0xff] %vm322, %v734
        %819 = vst.msk [vmem:[#allocation2 + $0x138] sm:$0xff] %vm322, %v735
        %820 = vst.msk [vmem:[#allocation2 + $0x140] sm:$0xff] %vm322, %v736
        %821 = vst.msk [vmem:[#allocation2 + $0x150] sm:$0xff] %vm322, %v737
        %822 = vst.msk [vmem:[#allocation2 + $0x158] sm:$0xff] %vm322, %v738
        %823 = vst.msk [vmem:[#allocation2 + $0x168] sm:$0xff] %vm322, %v739
        %824 = vst.msk [vmem:[#allocation2 + $0x170] sm:$0xff] %vm322, %v740
        %v825 = vld [vmem:[#allocation2 + $0x1] sm:$0xff]
        %v826 = vld [vmem:[#allocation2 + $0x9] sm:$0xff]
        %v827 = vld [vmem:[#allocation2 + $0x19] sm:$0xff]
        %v828 = vld [vmem:[#allocation2 + $0x21] sm:$0xff]
        %v829 = vld [vmem:[#allocation2 + $0x31] sm:$0xff]
        %v830 = vld [vmem:[#allocation2 + $0x39] sm:$0xff]
        %v831 = vld [vmem:[#allocation2 + $0x49] sm:$0xff]
        %v832 = vld [vmem:[#allocation2 + $0x51] sm:$0xff]
        %v833 = vld [vmem:[#allocation2 + $0x61] sm:$0xff]
        %v834 = vld [vmem:[#allocation2 + $0x69] sm:$0xff]
        %v835 = vld [vmem:[#allocation2 + $0x79] sm:$0xff]
        %v836 = vld [vmem:[#allocation2 + $0x81] sm:$0xff]
        %v837 = vld [vmem:[#allocation2 + $0x91] sm:$0xff]
        %v838 = vld [vmem:[#allocation2 + $0x99] sm:$0xff]
        %v839 = vld [vmem:[#allocation2 + $0xa9] sm:$0xff]
        %v840 = vld [vmem:[#allocation2 + $0xb1] sm:$0xff]
        %v841 = vld [vmem:[#allocation2 + $0xc1] sm:$0xff]
        %v842 = vld [vmem:[#allocation2 + $0xc9] sm:$0xff]
        %v843 = vld [vmem:[#allocation2 + $0xd9] sm:$0xff]
        %v844 = vld [vmem:[#allocation2 + $0xe1] sm:$0xff]
        %v845 = vld [vmem:[#allocation2 + $0xf1] sm:$0xff]
        %v846 = vld [vmem:[#allocation2 + $0xf9] sm:$0xff]
        %v847 = vld [vmem:[#allocation2 + $0x109] sm:$0xff]
        %v848 = vld [vmem:[#allocation2 + $0x111] sm:$0xff]
        %v849 = vld [vmem:[#allocation2 + $0x121] sm:$0xff]
        %v850 = vld [vmem:[#allocation2 + $0x129] sm:$0xff]
        %v851 = vld [vmem:[#allocation2 + $0x139] sm:$0xff]
        %v852 = vld [vmem:[#allocation2 + $0x141] sm:$0xff]
        %v853 = vld [vmem:[#allocation2 + $0x151] sm:$0xff]
        %v854 = vld [vmem:[#allocation2 + $0x159] sm:$0xff]
        %v855 = vld [vmem:[#allocation2 + $0x169] sm:$0xff]
        %v856 = vld [vmem:[#allocation2 + $0x171] sm:$0xff]
        %s857 = scalar_lea.vmem [#allocation2], 24
        %v858 = vld [vmem:[%s857] sm:$0xff]
        %v859 = vld [vmem:[%s857 + $0x8] sm:$0xff]
        %v860 = vld [vmem:[%s857 + $0x18] sm:$0xff]
        %v861 = vld [vmem:[%s857 + $0x20] sm:$0xff]
        %v862 = vld [vmem:[%s857 + $0x30] sm:$0xff]
        %v863 = vld [vmem:[%s857 + $0x38] sm:$0xff]
        %v864 = vld [vmem:[%s857 + $0x48] sm:$0xff]
        %v865 = vld [vmem:[%s857 + $0x50] sm:$0xff]
        %v866 = vld [vmem:[%s857 + $0x60] sm:$0xff]
        %v867 = vld [vmem:[%s857 + $0x68] sm:$0xff]
        %v868 = vld [vmem:[%s857 + $0x78] sm:$0xff]
        %v869 = vld [vmem:[%s857 + $0x80] sm:$0xff]
        %v870 = vld [vmem:[%s857 + $0x90] sm:$0xff]
        %v871 = vld [vmem:[%s857 + $0x98] sm:$0xff]
        %v872 = vld [vmem:[%s857 + $0xa8] sm:$0xff]
        %v873 = vld [vmem:[%s857 + $0xb0] sm:$0xff]
        %v874 = vld [vmem:[%s857 + $0xc0] sm:$0xff]
        %v875 = vld [vmem:[%s857 + $0xc8] sm:$0xff]
        %v876 = vld [vmem:[%s857 + $0xd8] sm:$0xff]
        %v877 = vld [vmem:[%s857 + $0xe0] sm:$0xff]
        %v878 = vld [vmem:[%s857 + $0xf0] sm:$0xff]
        %v879 = vld [vmem:[%s857 + $0xf8] sm:$0xff]
        %v880 = vld [vmem:[%s857 + $0x108] sm:$0xff]
        %v881 = vld [vmem:[%s857 + $0x110] sm:$0xff]
        %v882 = vld [vmem:[%s857 + $0x120] sm:$0xff]
        %v883 = vld [vmem:[%s857 + $0x128] sm:$0xff]
        %v884 = vld [vmem:[%s857 + $0x138] sm:$0xff]
        %v885 = vld [vmem:[%s857 + $0x140] sm:$0xff]
        %v886 = vld [vmem:[%s857 + $0x150] sm:$0xff]
        %v887 = vld [vmem:[%s857 + $0x158] sm:$0xff]
        %v888 = vld [vmem:[%s857 + $0x168] sm:$0xff]
        %v889 = vld [vmem:[%s857 + $0x170] sm:$0xff]
        %v890 = vld [vmem:[%s857 + $0x1] sm:$0xff]
        %v891 = vld [vmem:[%s857 + $0x9] sm:$0xff]
        %v892 = vld [vmem:[%s857 + $0x19] sm:$0xff]
        %v893 = vld [vmem:[%s857 + $0x21] sm:$0xff]
        %v894 = vld [vmem:[%s857 + $0x31] sm:$0xff]
        %v895 = vld [vmem:[%s857 + $0x39] sm:$0xff]
        %v896 = vld [vmem:[%s857 + $0x49] sm:$0xff]
        %v897 = vld [vmem:[%s857 + $0x51] sm:$0xff]
        %v898 = vld [vmem:[%s857 + $0x61] sm:$0xff]
        %v899 = vld [vmem:[%s857 + $0x69] sm:$0xff]
        %v900 = vld [vmem:[%s857 + $0x79] sm:$0xff]
        %v901 = vld [vmem:[%s857 + $0x81] sm:$0xff]
        %v902 = vld [vmem:[%s857 + $0x91] sm:$0xff]
        %v903 = vld [vmem:[%s857 + $0x99] sm:$0xff]
        %v904 = vld [vmem:[%s857 + $0xa9] sm:$0xff]
        %v905 = vld [vmem:[%s857 + $0xb1] sm:$0xff]
        %v906 = vld [vmem:[%s857 + $0xc1] sm:$0xff]
        %v907 = vld [vmem:[%s857 + $0xc9] sm:$0xff]
        %v908 = vld [vmem:[%s857 + $0xd9] sm:$0xff]
        %v909 = vld [vmem:[%s857 + $0xe1] sm:$0xff]
        %v910 = vld [vmem:[%s857 + $0xf1] sm:$0xff]
        %v911 = vld [vmem:[%s857 + $0xf9] sm:$0xff]
        %v912 = vld [vmem:[%s857 + $0x109] sm:$0xff]
        %v913 = vld [vmem:[%s857 + $0x111] sm:$0xff]
        %v914 = vld [vmem:[%s857 + $0x121] sm:$0xff]
        %v915 = vld [vmem:[%s857 + $0x129] sm:$0xff]
        %v916 = vld [vmem:[%s857 + $0x139] sm:$0xff]
        %v917 = vld [vmem:[%s857 + $0x141] sm:$0xff]
        %v918 = vld [vmem:[%s857 + $0x151] sm:$0xff]
        %v919 = vld [vmem:[%s857 + $0x159] sm:$0xff]
        %v920 = vld [vmem:[%s857 + $0x169] sm:$0xff]
        %v921 = vld [vmem:[%s857 + $0x171] sm:$0xff]
        %v922 = vld [vmem:[%s2] sm:$0xff]
        %v923 = vld [vmem:[%s2 + $0x8] sm:$0xff]
        %s924 = scalar_lea.vmem %s2, 16
        %v925 = vld [vmem:[%s924] sm:$0xff]
        %v926 = vld [vmem:[%s924 + $0x8] sm:$0xff]
        %v928 = vsel %vm322, %v825, 0
        %v931 = vsel %vm322, %v826, 0
        %v934 = vsel %vm322, %v827, 0
        %v937 = vsel %vm322, %v828, 0
        %v940 = vsel %vm322, %v829, 0
        %v943 = vsel %vm322, %v830, 0
        %v946 = vsel %vm322, %v831, 0
        %v949 = vsel %vm322, %v832, 0
        %v952 = vsel %vm322, %v833, 0
        %v955 = vsel %vm322, %v834, 0
        %v958 = vsel %vm322, %v835, 0
        %v961 = vsel %vm322, %v836, 0
        %v964 = vsel %vm322, %v837, 0
        %v967 = vsel %vm322, %v838, 0
        %v970 = vsel %vm322, %v839, 0
        %v973 = vsel %vm322, %v840, 0
        %v976 = vsel %vm322, %v841, 0
        %v979 = vsel %vm322, %v842, 0
        %v982 = vsel %vm322, %v843, 0
        %v985 = vsel %vm322, %v844, 0
        %v988 = vsel %vm322, %v845, 0
        %v991 = vsel %vm322, %v846, 0
        %v994 = vsel %vm322, %v847, 0
        %v997 = vsel %vm322, %v848, 0
        %v1000 = vsel %vm322, %v849, 0
        %v1003 = vsel %vm322, %v850, 0
        %v1006 = vsel %vm322, %v851, 0
        %v1009 = vsel %vm322, %v852, 0
        %v1012 = vsel %vm322, %v853, 0
        %v1015 = vsel %vm322, %v854, 0
        %v1018 = vsel %vm322, %v855, 0
        %v1021 = vsel %vm322, %v856, 0
        %1023 = vmatprep.subr.mxu0 0.0
        %1024 = vmatpush1.msra.mxu0 0.0
        %1025 = vmatprep.subr.mxu0 0.0
        %1026 = vmatpush1.msra.mxu0 0.0
        %1027 = vmatprep.subr.mxu0 0.0
        %1028 = vmatpush1.msra.mxu0 0.0
        %1029 = vmatprep.subr.mxu0 0.0
        %1030 = vmatpush1.msra.mxu0 0.0
        %1031 = vmatprep.subr.mxu0 0.0
        %1032 = vmatpush1.msra.mxu0 0.0
        %1033 = vmatprep.subr.mxu0 0.0
        %1034 = vmatpush1.msra.mxu0 0.0
        %1035 = vmatprep.subr.mxu0 0.0
        %1036 = vmatpush1.msra.mxu0 0.0
        %1037 = vmatprep.subr.mxu0 0.0
        %1038 = vmatpush1.msra.mxu0 0.0
        %1039 = vmatprep.subr.mxu0 0.0
        %1040 = vmatpush1.msra.mxu0 0.0
        %1041 = vmatprep.subr.mxu0 0.0
        %1042 = vmatpush1.msra.mxu0 0.0
        %1043 = vmatprep.subr.mxu0 0.0
        %1044 = vmatpush1.msra.mxu0 0.0
        %1045 = vmatprep.subr.mxu0 0.0
        %1046 = vmatpush1.msra.mxu0 0.0
        %1047 = vmatprep.subr.mxu0 0.0
        %1048 = vmatpush1.msra.mxu0 0.0
        %1049 = vmatprep.subr.mxu0 0.0
        %1050 = vmatpush1.msra.mxu0 0.0
        %1051 = vmatprep.subr.mxu0 0.0
        %1052 = vmatpush1.msra.mxu0 %v926
        %1053 = vmatprep.subr.mxu0 0.0
        %1054 = vmatpush1.msra.mxu0 %v925
        %1055 = vmatprep.subr.mxu0 0.0
        %1056 = vmatpush2.msra.mxu0 0.0
        %1057 = vmatprep.subr.mxu0 0.0
        %1058 = vmatpush2.msra.mxu0 0.0
        %1059 = vmatprep.subr.mxu0 0.0
        %1060 = vmatpush2.msra.mxu0 0.0
        %1061 = vmatprep.subr.mxu0 0.0
        %1062 = vmatpush2.msra.mxu0 0.0
        %1063 = vmatprep.subr.mxu0 0.0
        %1064 = vmatpush2.msra.mxu0 0.0
        %1065 = vmatprep.subr.mxu0 0.0
        %1066 = vmatpush2.msra.mxu0 0.0
        %1067 = vmatprep.subr.mxu0 0.0
        %1068 = vmatpush2.msra.mxu0 0.0
        %1069 = vmatprep.subr.mxu0 0.0
        %1070 = vmatpush2.msra.mxu0 0.0
        %1071 = vmatprep.subr.mxu0 0.0
        %1072 = vmatpush2.msra.mxu0 0.0
        %1073 = vmatprep.subr.mxu0 0.0
        %1074 = vmatpush2.msra.mxu0 0.0
        %1075 = vmatprep.subr.mxu0 0.0
        %1076 = vmatpush2.msra.mxu0 0.0
        %1077 = vmatprep.subr.mxu0 0.0
        %1078 = vmatpush2.msra.mxu0 0.0
        %1079 = vmatprep.subr.mxu0 0.0
        %1080 = vmatpush2.msra.mxu0 0.0
        %1081 = vmatprep.subr.mxu0 0.0
        %1082 = vmatpush2.msra.mxu0 0.0
        %1083 = vmatprep.subr.mxu0 0.0
        %1084 = vmatpush2.msra.mxu0 0.0
        %1085 = vmatprep.subr.mxu0 0.0
        %1086 = vmatpush2.msra.mxu0 0.0
        %1087 = vmatprep.mubr.f32.mxu0 0.0
        %1088 = vmatmul.mubr.f32.gmra.mxu0 %v928
        %v1089 = vpop.f32.mrf.mxu0
        %v1090 = vadd.f32 0.0, %v1089
        %v1091 = vpop.f32.mrf.mxu0
        %1092 = vmatprep.mubr.f32.mxu0 0.0
        %1093 = vmatmul.mubr.f32.gmra.mxu0 %v931
        %v1094 = vpop.f32.mrf.mxu0
        %v1095 = vadd.f32 0.0, %v1094
        %v1096 = vpop.f32.mrf.mxu0
        %1097 = vmatprep.mubr.f32.mxu0 0.0
        %1098 = vmatmul.mubr.f32.gmra.mxu0 %v934
        %v1099 = vpop.f32.mrf.mxu0
        %v1100 = vadd.f32 0.0, %v1099
        %v1101 = vpop.f32.mrf.mxu0
        %1102 = vmatprep.mubr.f32.mxu0 0.0
        %1103 = vmatmul.mubr.f32.gmra.mxu0 %v937
        %v1104 = vpop.f32.mrf.mxu0
        %v1105 = vadd.f32 0.0, %v1104
        %v1106 = vpop.f32.mrf.mxu0
        %1107 = vmatprep.mubr.f32.mxu0 0.0
        %1108 = vmatmul.mubr.f32.gmra.mxu0 %v940
        %v1109 = vpop.f32.mrf.mxu0
        %v1110 = vadd.f32 0.0, %v1109
        %v1111 = vpop.f32.mrf.mxu0
        %1112 = vmatprep.mubr.f32.mxu0 0.0
        %1113 = vmatmul.mubr.f32.gmra.mxu0 %v943
        %v1114 = vpop.f32.mrf.mxu0
        %v1115 = vadd.f32 0.0, %v1114
        %v1116 = vpop.f32.mrf.mxu0
        %1117 = vmatprep.mubr.f32.mxu0 0.0
        %1118 = vmatmul.mubr.f32.gmra.mxu0 %v946
        %v1119 = vpop.f32.mrf.mxu0
        %v1120 = vadd.f32 0.0, %v1119
        %v1121 = vpop.f32.mrf.mxu0
        %1122 = vmatprep.mubr.f32.mxu0 0.0
        %1123 = vmatmul.mubr.f32.gmra.mxu0 %v949
        %v1124 = vpop.f32.mrf.mxu0
        %v1125 = vadd.f32 0.0, %v1124
        %v1126 = vpop.f32.mrf.mxu0
        %1127 = vmatprep.mubr.f32.mxu0 0.0
        %1128 = vmatmul.mubr.f32.gmra.mxu0 %v952
        %v1129 = vpop.f32.mrf.mxu0
        %v1130 = vadd.f32 0.0, %v1129
        %v1131 = vpop.f32.mrf.mxu0
        %1132 = vmatprep.mubr.f32.mxu0 0.0
        %1133 = vmatmul.mubr.f32.gmra.mxu0 %v955
        %v1134 = vpop.f32.mrf.mxu0
        %v1135 = vadd.f32 0.0, %v1134
        %v1136 = vpop.f32.mrf.mxu0
        %1137 = vmatprep.mubr.f32.mxu0 0.0
        %1138 = vmatmul.mubr.f32.gmra.mxu0 %v958
        %v1139 = vpop.f32.mrf.mxu0
        %v1140 = vadd.f32 0.0, %v1139
        %v1141 = vpop.f32.mrf.mxu0
        %1142 = vmatprep.mubr.f32.mxu0 0.0
        %1143 = vmatmul.mubr.f32.gmra.mxu0 %v961
        %v1144 = vpop.f32.mrf.mxu0
        %v1145 = vadd.f32 0.0, %v1144
        %v1146 = vpop.f32.mrf.mxu0
        %1147 = vmatprep.mubr.f32.mxu0 0.0
        %1148 = vmatmul.mubr.f32.gmra.mxu0 %v964
        %v1149 = vpop.f32.mrf.mxu0
        %v1150 = vadd.f32 0.0, %v1149
        %v1151 = vpop.f32.mrf.mxu0
        %1152 = vmatprep.mubr.f32.mxu0 0.0
        %1153 = vmatmul.mubr.f32.gmra.mxu0 %v967
        %v1154 = vpop.f32.mrf.mxu0
        %v1155 = vadd.f32 0.0, %v1154
        %v1156 = vpop.f32.mrf.mxu0
        %1157 = vmatprep.mubr.f32.mxu0 0.0
        %1158 = vmatmul.mubr.f32.gmra.mxu0 %v970
        %v1159 = vpop.f32.mrf.mxu0
        %v1160 = vadd.f32 0.0, %v1159
        %v1161 = vpop.f32.mrf.mxu0
        %1162 = vmatprep.mubr.f32.mxu0 0.0
        %1163 = vmatmul.mubr.f32.gmra.mxu0 %v973
        %v1164 = vpop.f32.mrf.mxu0
        %v1165 = vadd.f32 0.0, %v1164
        %v1166 = vpop.f32.mrf.mxu0
        %1167 = vmatprep.mubr.f32.mxu0 0.0
        %1168 = vmatmul.mubr.f32.gmra.mxu0 %v976
        %v1169 = vpop.f32.mrf.mxu0
        %v1170 = vadd.f32 0.0, %v1169
        %v1171 = vpop.f32.mrf.mxu0
        %1172 = vmatprep.mubr.f32.mxu0 0.0
        %1173 = vmatmul.mubr.f32.gmra.mxu0 %v979
        %v1174 = vpop.f32.mrf.mxu0
        %v1175 = vadd.f32 0.0, %v1174
        %v1176 = vpop.f32.mrf.mxu0
        %1177 = vmatprep.mubr.f32.mxu0 0.0
        %1178 = vmatmul.mubr.f32.gmra.mxu0 %v982
        %v1179 = vpop.f32.mrf.mxu0
        %v1180 = vadd.f32 0.0, %v1179
        %v1181 = vpop.f32.mrf.mxu0
        %1182 = vmatprep.mubr.f32.mxu0 0.0
        %1183 = vmatmul.mubr.f32.gmra.mxu0 %v985
        %v1184 = vpop.f32.mrf.mxu0
        %v1185 = vadd.f32 0.0, %v1184
        %v1186 = vpop.f32.mrf.mxu0
        %1187 = vmatprep.mubr.f32.mxu0 0.0
        %1188 = vmatmul.mubr.f32.gmra.mxu0 %v988
        %v1189 = vpop.f32.mrf.mxu0
        %v1190 = vadd.f32 0.0, %v1189
        %v1191 = vpop.f32.mrf.mxu0
        %1192 = vmatprep.mubr.f32.mxu0 0.0
        %1193 = vmatmul.mubr.f32.gmra.mxu0 %v991
        %v1194 = vpop.f32.mrf.mxu0
        %v1195 = vadd.f32 0.0, %v1194
        %v1196 = vpop.f32.mrf.mxu0
        %1197 = vmatprep.mubr.f32.mxu0 0.0
        %1198 = vmatmul.mubr.f32.gmra.mxu0 %v994
        %v1199 = vpop.f32.mrf.mxu0
        %v1200 = vadd.f32 0.0, %v1199
        %v1201 = vpop.f32.mrf.mxu0
        %1202 = vmatprep.mubr.f32.mxu0 0.0
        %1203 = vmatmul.mubr.f32.gmra.mxu0 %v997
        %v1204 = vpop.f32.mrf.mxu0
        %v1205 = vadd.f32 0.0, %v1204
        %v1206 = vpop.f32.mrf.mxu0
        %1207 = vmatprep.mubr.f32.mxu0 0.0
        %1208 = vmatmul.mubr.f32.gmra.mxu0 %v1000
        %v1209 = vpop.f32.mrf.mxu0
        %v1210 = vadd.f32 0.0, %v1209
        %v1211 = vpop.f32.mrf.mxu0
        %1212 = vmatprep.mubr.f32.mxu0 0.0
        %1213 = vmatmul.mubr.f32.gmra.mxu0 %v1003
        %v1214 = vpop.f32.mrf.mxu0
        %v1215 = vadd.f32 0.0, %v1214
        %v1216 = vpop.f32.mrf.mxu0
        %1217 = vmatprep.mubr.f32.mxu0 0.0
        %1218 = vmatmul.mubr.f32.gmra.mxu0 %v1006
        %v1219 = vpop.f32.mrf.mxu0
        %v1220 = vadd.f32 0.0, %v1219
        %v1221 = vpop.f32.mrf.mxu0
        %1222 = vmatprep.mubr.f32.mxu0 0.0
        %1223 = vmatmul.mubr.f32.gmra.mxu0 %v1009
        %v1224 = vpop.f32.mrf.mxu0
        %v1225 = vadd.f32 0.0, %v1224
        %v1226 = vpop.f32.mrf.mxu0
        %1227 = vmatprep.mubr.f32.mxu0 0.0
        %1228 = vmatmul.mubr.f32.gmra.mxu0 %v1012
        %v1229 = vpop.f32.mrf.mxu0
        %v1230 = vadd.f32 0.0, %v1229
        %v1231 = vpop.f32.mrf.mxu0
        %1232 = vmatprep.mubr.f32.mxu0 0.0
        %1233 = vmatmul.mubr.f32.gmra.mxu0 %v1015
        %v1234 = vpop.f32.mrf.mxu0
        %v1235 = vadd.f32 0.0, %v1234
        %v1236 = vpop.f32.mrf.mxu0
        %1237 = vmatprep.mubr.f32.mxu0 0.0
        %1238 = vmatmul.mubr.f32.gmra.mxu0 %v1018
        %v1239 = vpop.f32.mrf.mxu0
        %v1240 = vadd.f32 0.0, %v1239
        %v1241 = vpop.f32.mrf.mxu0
        %1242 = vmatprep.mubr.f32.mxu0 0.0
        %1243 = vmatmul.mubr.f32.gmra.mxu0 %v1021
        %v1244 = vpop.f32.mrf.mxu0
        %v1245 = vadd.f32 0.0, %v1244
        %v1246 = vpop.f32.mrf.mxu0
        %1247 = vdwg.mxu0
        %v1249 = vsel %vm322, %v709, 0
        %v1252 = vsel %vm322, %v710, 0
        %v1255 = vsel %vm322, %v711, 0
        %v1258 = vsel %vm322, %v712, 0
        %v1261 = vsel %vm322, %v713, 0
        %v1264 = vsel %vm322, %v714, 0
        %v1267 = vsel %vm322, %v715, 0
        %v1270 = vsel %vm322, %v716, 0
        %v1273 = vsel %vm322, %v717, 0
        %v1276 = vsel %vm322, %v718, 0
        %v1279 = vsel %vm322, %v719, 0
        %v1282 = vsel %vm322, %v720, 0
        %v1285 = vsel %vm322, %v721, 0
        %v1288 = vsel %vm322, %v722, 0
        %v1291 = vsel %vm322, %v723, 0
        %v1294 = vsel %vm322, %v724, 0
        %v1297 = vsel %vm322, %v725, 0
        %v1300 = vsel %vm322, %v726, 0
        %v1303 = vsel %vm322, %v727, 0
        %v1306 = vsel %vm322, %v728, 0
        %v1309 = vsel %vm322, %v729, 0
        %v1312 = vsel %vm322, %v730, 0
        %v1315 = vsel %vm322, %v731, 0
        %v1318 = vsel %vm322, %v732, 0
        %v1321 = vsel %vm322, %v733, 0
        %v1324 = vsel %vm322, %v734, 0
        %v1327 = vsel %vm322, %v735, 0
        %v1330 = vsel %vm322, %v736, 0
        %v1333 = vsel %vm322, %v737, 0
        %v1336 = vsel %vm322, %v738, 0
        %v1339 = vsel %vm322, %v739, 0
        %v1342 = vsel %vm322, %v740, 0
        %1344 = vmatprep.subr.mxu0 0.0
        %1345 = vmatpush1.msra.mxu0 0.0
        %1346 = vmatprep.subr.mxu0 0.0
        %1347 = vmatpush1.msra.mxu0 0.0
        %1348 = vmatprep.subr.mxu0 0.0
        %1349 = vmatpush1.msra.mxu0 0.0
        %1350 = vmatprep.subr.mxu0 0.0
        %1351 = vmatpush1.msra.mxu0 0.0
        %1352 = vmatprep.subr.mxu0 0.0
        %1353 = vmatpush1.msra.mxu0 0.0
        %1354 = vmatprep.subr.mxu0 0.0
        %1355 = vmatpush1.msra.mxu0 0.0
        %1356 = vmatprep.subr.mxu0 0.0
        %1357 = vmatpush1.msra.mxu0 0.0
        %1358 = vmatprep.subr.mxu0 0.0
        %1359 = vmatpush1.msra.mxu0 0.0
        %1360 = vmatprep.subr.mxu0 0.0
        %1361 = vmatpush1.msra.mxu0 0.0
        %1362 = vmatprep.subr.mxu0 0.0
        %1363 = vmatpush1.msra.mxu0 0.0
        %1364 = vmatprep.subr.mxu0 0.0
        %1365 = vmatpush1.msra.mxu0 0.0
        %1366 = vmatprep.subr.mxu0 0.0
        %1367 = vmatpush1.msra.mxu0 0.0
        %1368 = vmatprep.subr.mxu0 0.0
        %1369 = vmatpush1.msra.mxu0 0.0
        %1370 = vmatprep.subr.mxu0 0.0
        %1371 = vmatpush1.msra.mxu0 0.0
        %1372 = vmatprep.subr.mxu0 0.0
        %1373 = vmatpush1.msra.mxu0 %v923
        %1374 = vmatprep.subr.mxu0 0.0
        %1375 = vmatpush1.msra.mxu0 %v922
        %1376 = vmatprep.subr.mxu0 0.0
        %1377 = vmatpush2.msra.mxu0 0.0
        %1378 = vmatprep.subr.mxu0 0.0
        %1379 = vmatpush2.msra.mxu0 0.0
        %1380 = vmatprep.subr.mxu0 0.0
        %1381 = vmatpush2.msra.mxu0 0.0
        %1382 = vmatprep.subr.mxu0 0.0
        %1383 = vmatpush2.msra.mxu0 0.0
        %1384 = vmatprep.subr.mxu0 0.0
        %1385 = vmatpush2.msra.mxu0 0.0
        %1386 = vmatprep.subr.mxu0 0.0
        %1387 = vmatpush2.msra.mxu0 0.0
        %1388 = vmatprep.subr.mxu0 0.0
        %1389 = vmatpush2.msra.mxu0 0.0
        %1390 = vmatprep.subr.mxu0 0.0
        %1391 = vmatpush2.msra.mxu0 0.0
        %1392 = vmatprep.subr.mxu0 0.0
        %1393 = vmatpush2.msra.mxu0 0.0
        %1394 = vmatprep.subr.mxu0 0.0
        %1395 = vmatpush2.msra.mxu0 0.0
        %1396 = vmatprep.subr.mxu0 0.0
        %1397 = vmatpush2.msra.mxu0 0.0
        %1398 = vmatprep.subr.mxu0 0.0
        %1399 = vmatpush2.msra.mxu0 0.0
        %1400 = vmatprep.subr.mxu0 0.0
        %1401 = vmatpush2.msra.mxu0 0.0
        %1402 = vmatprep.subr.mxu0 0.0
        %1403 = vmatpush2.msra.mxu0 0.0
        %1404 = vmatprep.subr.mxu0 0.0
        %1405 = vmatpush2.msra.mxu0 0.0
        %1406 = vmatprep.subr.mxu0 0.0
        %1407 = vmatpush2.msra.mxu0 0.0
        %1408 = vmatprep.mubr.f32.mxu0 0.0
        %1409 = vmatmul.mubr.f32.gmra.mxu0 %v1249
        %v1410 = vpop.f32.mrf.mxu0
        %v1411 = vadd.f32 %v1090, %v1410
        %v1412 = vpop.f32.mrf.mxu0
        %1413 = vmatprep.mubr.f32.mxu0 0.0
        %1414 = vmatmul.mubr.f32.gmra.mxu0 %v1252
        %v1415 = vpop.f32.mrf.mxu0
        %v1416 = vadd.f32 %v1095, %v1415
        %v1417 = vpop.f32.mrf.mxu0
        %1418 = vmatprep.mubr.f32.mxu0 0.0
        %1419 = vmatmul.mubr.f32.gmra.mxu0 %v1255
        %v1420 = vpop.f32.mrf.mxu0
        %v1421 = vadd.f32 %v1100, %v1420
        %v1422 = vpop.f32.mrf.mxu0
        %1423 = vmatprep.mubr.f32.mxu0 0.0
        %1424 = vmatmul.mubr.f32.gmra.mxu0 %v1258
        %v1425 = vpop.f32.mrf.mxu0
        %v1426 = vadd.f32 %v1105, %v1425
        %v1427 = vpop.f32.mrf.mxu0
        %1428 = vmatprep.mubr.f32.mxu0 0.0
        %1429 = vmatmul.mubr.f32.gmra.mxu0 %v1261
        %v1430 = vpop.f32.mrf.mxu0
        %v1431 = vadd.f32 %v1110, %v1430
        %v1432 = vpop.f32.mrf.mxu0
        %1433 = vmatprep.mubr.f32.mxu0 0.0
        %1434 = vmatmul.mubr.f32.gmra.mxu0 %v1264
        %v1435 = vpop.f32.mrf.mxu0
        %v1436 = vadd.f32 %v1115, %v1435
        %v1437 = vpop.f32.mrf.mxu0
        %1438 = vmatprep.mubr.f32.mxu0 0.0
        %1439 = vmatmul.mubr.f32.gmra.mxu0 %v1267
        %v1440 = vpop.f32.mrf.mxu0
        %v1441 = vadd.f32 %v1120, %v1440
        %v1442 = vpop.f32.mrf.mxu0
        %1443 = vmatprep.mubr.f32.mxu0 0.0
        %1444 = vmatmul.mubr.f32.gmra.mxu0 %v1270
        %v1445 = vpop.f32.mrf.mxu0
        %v1446 = vadd.f32 %v1125, %v1445
        %v1447 = vpop.f32.mrf.mxu0
        %1448 = vmatprep.mubr.f32.mxu0 0.0
        %1449 = vmatmul.mubr.f32.gmra.mxu0 %v1273
        %v1450 = vpop.f32.mrf.mxu0
        %v1451 = vadd.f32 %v1130, %v1450
        %v1452 = vpop.f32.mrf.mxu0
        %1453 = vmatprep.mubr.f32.mxu0 0.0
        %1454 = vmatmul.mubr.f32.gmra.mxu0 %v1276
        %v1455 = vpop.f32.mrf.mxu0
        %v1456 = vadd.f32 %v1135, %v1455
        %v1457 = vpop.f32.mrf.mxu0
        %1458 = vmatprep.mubr.f32.mxu0 0.0
        %1459 = vmatmul.mubr.f32.gmra.mxu0 %v1279
        %v1460 = vpop.f32.mrf.mxu0
        %v1461 = vadd.f32 %v1140, %v1460
        %v1462 = vpop.f32.mrf.mxu0
        %1463 = vmatprep.mubr.f32.mxu0 0.0
        %1464 = vmatmul.mubr.f32.gmra.mxu0 %v1282
        %v1465 = vpop.f32.mrf.mxu0
        %v1466 = vadd.f32 %v1145, %v1465
        %v1467 = vpop.f32.mrf.mxu0
        %1468 = vmatprep.mubr.f32.mxu0 0.0
        %1469 = vmatmul.mubr.f32.gmra.mxu0 %v1285
        %v1470 = vpop.f32.mrf.mxu0
        %v1471 = vadd.f32 %v1150, %v1470
        %v1472 = vpop.f32.mrf.mxu0
        %1473 = vmatprep.mubr.f32.mxu0 0.0
        %1474 = vmatmul.mubr.f32.gmra.mxu0 %v1288
        %v1475 = vpop.f32.mrf.mxu0
        %v1476 = vadd.f32 %v1155, %v1475
        %v1477 = vpop.f32.mrf.mxu0
        %1478 = vmatprep.mubr.f32.mxu0 0.0
        %1479 = vmatmul.mubr.f32.gmra.mxu0 %v1291
        %v1480 = vpop.f32.mrf.mxu0
        %v1481 = vadd.f32 %v1160, %v1480
        %v1482 = vpop.f32.mrf.mxu0
        %1483 = vmatprep.mubr.f32.mxu0 0.0
        %1484 = vmatmul.mubr.f32.gmra.mxu0 %v1294
        %v1485 = vpop.f32.mrf.mxu0
        %v1486 = vadd.f32 %v1165, %v1485
        %v1487 = vpop.f32.mrf.mxu0
        %1488 = vmatprep.mubr.f32.mxu0 0.0
        %1489 = vmatmul.mubr.f32.gmra.mxu0 %v1297
        %v1490 = vpop.f32.mrf.mxu0
        %v1491 = vadd.f32 %v1170, %v1490
        %v1492 = vpop.f32.mrf.mxu0
        %1493 = vmatprep.mubr.f32.mxu0 0.0
        %1494 = vmatmul.mubr.f32.gmra.mxu0 %v1300
        %v1495 = vpop.f32.mrf.mxu0
        %v1496 = vadd.f32 %v1175, %v1495
        %v1497 = vpop.f32.mrf.mxu0
        %1498 = vmatprep.mubr.f32.mxu0 0.0
        %1499 = vmatmul.mubr.f32.gmra.mxu0 %v1303
        %v1500 = vpop.f32.mrf.mxu0
        %v1501 = vadd.f32 %v1180, %v1500
        %v1502 = vpop.f32.mrf.mxu0
        %1503 = vmatprep.mubr.f32.mxu0 0.0
        %1504 = vmatmul.mubr.f32.gmra.mxu0 %v1306
        %v1505 = vpop.f32.mrf.mxu0
        %v1506 = vadd.f32 %v1185, %v1505
        %v1507 = vpop.f32.mrf.mxu0
        %1508 = vmatprep.mubr.f32.mxu0 0.0
        %1509 = vmatmul.mubr.f32.gmra.mxu0 %v1309
        %v1510 = vpop.f32.mrf.mxu0
        %v1511 = vadd.f32 %v1190, %v1510
        %v1512 = vpop.f32.mrf.mxu0
        %1513 = vmatprep.mubr.f32.mxu0 0.0
        %1514 = vmatmul.mubr.f32.gmra.mxu0 %v1312
        %v1515 = vpop.f32.mrf.mxu0
        %v1516 = vadd.f32 %v1195, %v1515
        %v1517 = vpop.f32.mrf.mxu0
        %1518 = vmatprep.mubr.f32.mxu0 0.0
        %1519 = vmatmul.mubr.f32.gmra.mxu0 %v1315
        %v1520 = vpop.f32.mrf.mxu0
        %v1521 = vadd.f32 %v1200, %v1520
        %v1522 = vpop.f32.mrf.mxu0
        %1523 = vmatprep.mubr.f32.mxu0 0.0
        %1524 = vmatmul.mubr.f32.gmra.mxu0 %v1318
        %v1525 = vpop.f32.mrf.mxu0
        %v1526 = vadd.f32 %v1205, %v1525
        %v1527 = vpop.f32.mrf.mxu0
        %1528 = vmatprep.mubr.f32.mxu0 0.0
        %1529 = vmatmul.mubr.f32.gmra.mxu0 %v1321
        %v1530 = vpop.f32.mrf.mxu0
        %v1531 = vadd.f32 %v1210, %v1530
        %v1532 = vpop.f32.mrf.mxu0
        %1533 = vmatprep.mubr.f32.mxu0 0.0
        %1534 = vmatmul.mubr.f32.gmra.mxu0 %v1324
        %v1535 = vpop.f32.mrf.mxu0
        %v1536 = vadd.f32 %v1215, %v1535
        %v1537 = vpop.f32.mrf.mxu0
        %1538 = vmatprep.mubr.f32.mxu0 0.0
        %1539 = vmatmul.mubr.f32.gmra.mxu0 %v1327
        %v1540 = vpop.f32.mrf.mxu0
        %v1541 = vadd.f32 %v1220, %v1540
        %v1542 = vpop.f32.mrf.mxu0
        %1543 = vmatprep.mubr.f32.mxu0 0.0
        %1544 = vmatmul.mubr.f32.gmra.mxu0 %v1330
        %v1545 = vpop.f32.mrf.mxu0
        %v1546 = vadd.f32 %v1225, %v1545
        %v1547 = vpop.f32.mrf.mxu0
        %1548 = vmatprep.mubr.f32.mxu0 0.0
        %1549 = vmatmul.mubr.f32.gmra.mxu0 %v1333
        %v1550 = vpop.f32.mrf.mxu0
        %v1551 = vadd.f32 %v1230, %v1550
        %v1552 = vpop.f32.mrf.mxu0
        %1553 = vmatprep.mubr.f32.mxu0 0.0
        %1554 = vmatmul.mubr.f32.gmra.mxu0 %v1336
        %v1555 = vpop.f32.mrf.mxu0
        %v1556 = vadd.f32 %v1235, %v1555
        %v1557 = vpop.f32.mrf.mxu0
        %1558 = vmatprep.mubr.f32.mxu0 0.0
        %1559 = vmatmul.mubr.f32.gmra.mxu0 %v1339
        %v1560 = vpop.f32.mrf.mxu0
        %v1561 = vadd.f32 %v1240, %v1560
        %v1562 = vpop.f32.mrf.mxu0
        %1563 = vmatprep.mubr.f32.mxu0 0.0
        %1564 = vmatmul.mubr.f32.gmra.mxu0 %v1342
        %v1565 = vpop.f32.mrf.mxu0
        %v1566 = vadd.f32 %v1245, %v1565
        %v1567 = vpop.f32.mrf.mxu0
        %1568 = vdwg.mxu0
        %s1569 = scalar_lea.vmem %s2, 32
        %v1570 = vld [vmem:[%s1569] sm:$0xff]
        %v1571 = vld [vmem:[%s1569 + $0x8] sm:$0xff]
        %v1573 = vsel %vm322, %v858, 0
        %v1576 = vsel %vm322, %v859, 0
        %v1579 = vsel %vm322, %v860, 0
        %v1582 = vsel %vm322, %v861, 0
        %v1585 = vsel %vm322, %v862, 0
        %v1588 = vsel %vm322, %v863, 0
        %v1591 = vsel %vm322, %v864, 0
        %v1594 = vsel %vm322, %v865, 0
        %v1597 = vsel %vm322, %v866, 0
        %v1600 = vsel %vm322, %v867, 0
        %v1603 = vsel %vm322, %v868, 0
        %v1606 = vsel %vm322, %v869, 0
        %v1609 = vsel %vm322, %v870, 0
        %v1612 = vsel %vm322, %v871, 0
        %v1615 = vsel %vm322, %v872, 0
        %v1618 = vsel %vm322, %v873, 0
        %v1621 = vsel %vm322, %v874, 0
        %v1624 = vsel %vm322, %v875, 0
        %v1627 = vsel %vm322, %v876, 0
        %v1630 = vsel %vm322, %v877, 0
        %v1633 = vsel %vm322, %v878, 0
        %v1636 = vsel %vm322, %v879, 0
        %v1639 = vsel %vm322, %v880, 0
        %v1642 = vsel %vm322, %v881, 0
        %v1645 = vsel %vm322, %v882, 0
        %v1648 = vsel %vm322, %v883, 0
        %v1651 = vsel %vm322, %v884, 0
        %v1654 = vsel %vm322, %v885, 0
        %v1657 = vsel %vm322, %v886, 0
        %v1660 = vsel %vm322, %v887, 0
        %v1663 = vsel %vm322, %v888, 0
        %v1666 = vsel %vm322, %v889, 0
        %1668 = vmatprep.subr.mxu0 0.0
        %1669 = vmatpush1.msra.mxu0 0.0
        %1670 = vmatprep.subr.mxu0 0.0
        %1671 = vmatpush1.msra.mxu0 0.0
        %1672 = vmatprep.subr.mxu0 0.0
        %1673 = vmatpush1.msra.mxu0 0.0
        %1674 = vmatprep.subr.mxu0 0.0
        %1675 = vmatpush1.msra.mxu0 0.0
        %1676 = vmatprep.subr.mxu0 0.0
        %1677 = vmatpush1.msra.mxu0 0.0
        %1678 = vmatprep.subr.mxu0 0.0
        %1679 = vmatpush1.msra.mxu0 0.0
        %1680 = vmatprep.subr.mxu0 0.0
        %1681 = vmatpush1.msra.mxu0 0.0
        %1682 = vmatprep.subr.mxu0 0.0
        %1683 = vmatpush1.msra.mxu0 0.0
        %1684 = vmatprep.subr.mxu0 0.0
        %1685 = vmatpush1.msra.mxu0 0.0
        %1686 = vmatprep.subr.mxu0 0.0
        %1687 = vmatpush1.msra.mxu0 0.0
        %1688 = vmatprep.subr.mxu0 0.0
        %1689 = vmatpush1.msra.mxu0 0.0
        %1690 = vmatprep.subr.mxu0 0.0
        %1691 = vmatpush1.msra.mxu0 0.0
        %1692 = vmatprep.subr.mxu0 0.0
        %1693 = vmatpush1.msra.mxu0 0.0
        %1694 = vmatprep.subr.mxu0 0.0
        %1695 = vmatpush1.msra.mxu0 0.0
        %1696 = vmatprep.subr.mxu0 0.0
        %1697 = vmatpush1.msra.mxu0 %v1571
        %1698 = vmatprep.subr.mxu0 0.0
        %1699 = vmatpush1.msra.mxu0 %v1570
        %1700 = vmatprep.subr.mxu0 0.0
        %1701 = vmatpush2.msra.mxu0 0.0
        %1702 = vmatprep.subr.mxu0 0.0
        %1703 = vmatpush2.msra.mxu0 0.0
        %1704 = vmatprep.subr.mxu0 0.0
        %1705 = vmatpush2.msra.mxu0 0.0
        %1706 = vmatprep.subr.mxu0 0.0
        %1707 = vmatpush2.msra.mxu0 0.0
        %1708 = vmatprep.subr.mxu0 0.0
        %1709 = vmatpush2.msra.mxu0 0.0
        %1710 = vmatprep.subr.mxu0 0.0
        %1711 = vmatpush2.msra.mxu0 0.0
        %1712 = vmatprep.subr.mxu0 0.0
        %1713 = vmatpush2.msra.mxu0 0.0
        %1714 = vmatprep.subr.mxu0 0.0
        %1715 = vmatpush2.msra.mxu0 0.0
        %1716 = vmatprep.subr.mxu0 0.0
        %1717 = vmatpush2.msra.mxu0 0.0
        %1718 = vmatprep.subr.mxu0 0.0
        %1719 = vmatpush2.msra.mxu0 0.0
        %1720 = vmatprep.subr.mxu0 0.0
        %1721 = vmatpush2.msra.mxu0 0.0
        %1722 = vmatprep.subr.mxu0 0.0
        %1723 = vmatpush2.msra.mxu0 0.0
        %1724 = vmatprep.subr.mxu0 0.0
        %1725 = vmatpush2.msra.mxu0 0.0
        %1726 = vmatprep.subr.mxu0 0.0
        %1727 = vmatpush2.msra.mxu0 0.0
        %1728 = vmatprep.subr.mxu0 0.0
        %1729 = vmatpush2.msra.mxu0 0.0
        %1730 = vmatprep.subr.mxu0 0.0
        %1731 = vmatpush2.msra.mxu0 0.0
        %1732 = vmatprep.mubr.f32.mxu0 0.0
        %1733 = vmatmul.mubr.f32.gmra.mxu0 %v1573
        %v1734 = vpop.f32.mrf.mxu0
        %v1735 = vadd.f32 0.0, %v1734
        %v1736 = vpop.f32.mrf.mxu0
        %1737 = vmatprep.mubr.f32.mxu0 0.0
        %1738 = vmatmul.mubr.f32.gmra.mxu0 %v1576
        %v1739 = vpop.f32.mrf.mxu0
        %v1740 = vadd.f32 0.0, %v1739
        %v1741 = vpop.f32.mrf.mxu0
        %1742 = vmatprep.mubr.f32.mxu0 0.0
        %1743 = vmatmul.mubr.f32.gmra.mxu0 %v1579
        %v1744 = vpop.f32.mrf.mxu0
        %v1745 = vadd.f32 0.0, %v1744
        %v1746 = vpop.f32.mrf.mxu0
        %1747 = vmatprep.mubr.f32.mxu0 0.0
        %1748 = vmatmul.mubr.f32.gmra.mxu0 %v1582
        %v1749 = vpop.f32.mrf.mxu0
        %v1750 = vadd.f32 0.0, %v1749
        %v1751 = vpop.f32.mrf.mxu0
        %1752 = vmatprep.mubr.f32.mxu0 0.0
        %1753 = vmatmul.mubr.f32.gmra.mxu0 %v1585
        %v1754 = vpop.f32.mrf.mxu0
        %v1755 = vadd.f32 0.0, %v1754
        %v1756 = vpop.f32.mrf.mxu0
        %1757 = vmatprep.mubr.f32.mxu0 0.0
        %1758 = vmatmul.mubr.f32.gmra.mxu0 %v1588
        %v1759 = vpop.f32.mrf.mxu0
        %v1760 = vadd.f32 0.0, %v1759
        %v1761 = vpop.f32.mrf.mxu0
        %1762 = vmatprep.mubr.f32.mxu0 0.0
        %1763 = vmatmul.mubr.f32.gmra.mxu0 %v1591
        %v1764 = vpop.f32.mrf.mxu0
        %v1765 = vadd.f32 0.0, %v1764
        %v1766 = vpop.f32.mrf.mxu0
        %1767 = vmatprep.mubr.f32.mxu0 0.0
        %1768 = vmatmul.mubr.f32.gmra.mxu0 %v1594
        %v1769 = vpop.f32.mrf.mxu0
        %v1770 = vadd.f32 0.0, %v1769
        %v1771 = vpop.f32.mrf.mxu0
        %1772 = vmatprep.mubr.f32.mxu0 0.0
        %1773 = vmatmul.mubr.f32.gmra.mxu0 %v1597
        %v1774 = vpop.f32.mrf.mxu0
        %v1775 = vadd.f32 0.0, %v1774
        %v1776 = vpop.f32.mrf.mxu0
        %1777 = vmatprep.mubr.f32.mxu0 0.0
        %1778 = vmatmul.mubr.f32.gmra.mxu0 %v1600
        %v1779 = vpop.f32.mrf.mxu0
        %v1780 = vadd.f32 0.0, %v1779
        %v1781 = vpop.f32.mrf.mxu0
        %1782 = vmatprep.mubr.f32.mxu0 0.0
        %1783 = vmatmul.mubr.f32.gmra.mxu0 %v1603
        %v1784 = vpop.f32.mrf.mxu0
        %v1785 = vadd.f32 0.0, %v1784
        %v1786 = vpop.f32.mrf.mxu0
        %1787 = vmatprep.mubr.f32.mxu0 0.0
        %1788 = vmatmul.mubr.f32.gmra.mxu0 %v1606
        %v1789 = vpop.f32.mrf.mxu0
        %v1790 = vadd.f32 0.0, %v1789
        %v1791 = vpop.f32.mrf.mxu0
        %1792 = vmatprep.mubr.f32.mxu0 0.0
        %1793 = vmatmul.mubr.f32.gmra.mxu0 %v1609
        %v1794 = vpop.f32.mrf.mxu0
        %v1795 = vadd.f32 0.0, %v1794
        %v1796 = vpop.f32.mrf.mxu0
        %1797 = vmatprep.mubr.f32.mxu0 0.0
        %1798 = vmatmul.mubr.f32.gmra.mxu0 %v1612
        %v1799 = vpop.f32.mrf.mxu0
        %v1800 = vadd.f32 0.0, %v1799
        %v1801 = vpop.f32.mrf.mxu0
        %1802 = vmatprep.mubr.f32.mxu0 0.0
        %1803 = vmatmul.mubr.f32.gmra.mxu0 %v1615
        %v1804 = vpop.f32.mrf.mxu0
        %v1805 = vadd.f32 0.0, %v1804
        %v1806 = vpop.f32.mrf.mxu0
        %1807 = vmatprep.mubr.f32.mxu0 0.0
        %1808 = vmatmul.mubr.f32.gmra.mxu0 %v1618
        %v1809 = vpop.f32.mrf.mxu0
        %v1810 = vadd.f32 0.0, %v1809
        %v1811 = vpop.f32.mrf.mxu0
        %1812 = vmatprep.mubr.f32.mxu0 0.0
        %1813 = vmatmul.mubr.f32.gmra.mxu0 %v1621
        %v1814 = vpop.f32.mrf.mxu0
        %v1815 = vadd.f32 0.0, %v1814
        %v1816 = vpop.f32.mrf.mxu0
        %1817 = vmatprep.mubr.f32.mxu0 0.0
        %1818 = vmatmul.mubr.f32.gmra.mxu0 %v1624
        %v1819 = vpop.f32.mrf.mxu0
        %v1820 = vadd.f32 0.0, %v1819
        %v1821 = vpop.f32.mrf.mxu0
        %1822 = vmatprep.mubr.f32.mxu0 0.0
        %1823 = vmatmul.mubr.f32.gmra.mxu0 %v1627
        %v1824 = vpop.f32.mrf.mxu0
        %v1825 = vadd.f32 0.0, %v1824
        %v1826 = vpop.f32.mrf.mxu0
        %1827 = vmatprep.mubr.f32.mxu0 0.0
        %1828 = vmatmul.mubr.f32.gmra.mxu0 %v1630
        %v1829 = vpop.f32.mrf.mxu0
        %v1830 = vadd.f32 0.0, %v1829
        %v1831 = vpop.f32.mrf.mxu0
        %1832 = vmatprep.mubr.f32.mxu0 0.0
        %1833 = vmatmul.mubr.f32.gmra.mxu0 %v1633
        %v1834 = vpop.f32.mrf.mxu0
        %v1835 = vadd.f32 0.0, %v1834
        %v1836 = vpop.f32.mrf.mxu0
        %1837 = vmatprep.mubr.f32.mxu0 0.0
        %1838 = vmatmul.mubr.f32.gmra.mxu0 %v1636
        %v1839 = vpop.f32.mrf.mxu0
        %v1840 = vadd.f32 0.0, %v1839
        %v1841 = vpop.f32.mrf.mxu0
        %1842 = vmatprep.mubr.f32.mxu0 0.0
        %1843 = vmatmul.mubr.f32.gmra.mxu0 %v1639
        %v1844 = vpop.f32.mrf.mxu0
        %v1845 = vadd.f32 0.0, %v1844
        %v1846 = vpop.f32.mrf.mxu0
        %1847 = vmatprep.mubr.f32.mxu0 0.0
        %1848 = vmatmul.mubr.f32.gmra.mxu0 %v1642
        %v1849 = vpop.f32.mrf.mxu0
        %v1850 = vadd.f32 0.0, %v1849
        %v1851 = vpop.f32.mrf.mxu0
        %1852 = vmatprep.mubr.f32.mxu0 0.0
        %1853 = vmatmul.mubr.f32.gmra.mxu0 %v1645
        %v1854 = vpop.f32.mrf.mxu0
        %v1855 = vadd.f32 0.0, %v1854
        %v1856 = vpop.f32.mrf.mxu0
        %1857 = vmatprep.mubr.f32.mxu0 0.0
        %1858 = vmatmul.mubr.f32.gmra.mxu0 %v1648
        %v1859 = vpop.f32.mrf.mxu0
        %v1860 = vadd.f32 0.0, %v1859
        %v1861 = vpop.f32.mrf.mxu0
        %1862 = vmatprep.mubr.f32.mxu0 0.0
        %1863 = vmatmul.mubr.f32.gmra.mxu0 %v1651
        %v1864 = vpop.f32.mrf.mxu0
        %v1865 = vadd.f32 0.0, %v1864
        %v1866 = vpop.f32.mrf.mxu0
        %1867 = vmatprep.mubr.f32.mxu0 0.0
        %1868 = vmatmul.mubr.f32.gmra.mxu0 %v1654
        %v1869 = vpop.f32.mrf.mxu0
        %v1870 = vadd.f32 0.0, %v1869
        %v1871 = vpop.f32.mrf.mxu0
        %1872 = vmatprep.mubr.f32.mxu0 0.0
        %1873 = vmatmul.mubr.f32.gmra.mxu0 %v1657
        %v1874 = vpop.f32.mrf.mxu0
        %v1875 = vadd.f32 0.0, %v1874
        %v1876 = vpop.f32.mrf.mxu0
        %1877 = vmatprep.mubr.f32.mxu0 0.0
        %1878 = vmatmul.mubr.f32.gmra.mxu0 %v1660
        %v1879 = vpop.f32.mrf.mxu0
        %v1880 = vadd.f32 0.0, %v1879
        %v1881 = vpop.f32.mrf.mxu0
        %1882 = vmatprep.mubr.f32.mxu0 0.0
        %1883 = vmatmul.mubr.f32.gmra.mxu0 %v1663
        %v1884 = vpop.f32.mrf.mxu0
        %v1885 = vadd.f32 0.0, %v1884
        %v1886 = vpop.f32.mrf.mxu0
        %1887 = vmatprep.mubr.f32.mxu0 0.0
        %1888 = vmatmul.mubr.f32.gmra.mxu0 %v1666
        %v1889 = vpop.f32.mrf.mxu0
        %v1890 = vadd.f32 0.0, %v1889
        %v1891 = vpop.f32.mrf.mxu0
        %1892 = vdwg.mxu0
        %v1893 = vadd.f32 %v1411, %v1735
        %v1894 = vadd.f32 %v1416, %v1740
        %v1895 = vadd.f32 %v1421, %v1745
        %v1896 = vadd.f32 %v1426, %v1750
        %v1897 = vadd.f32 %v1431, %v1755
        %v1898 = vadd.f32 %v1436, %v1760
        %v1899 = vadd.f32 %v1441, %v1765
        %v1900 = vadd.f32 %v1446, %v1770
        %v1901 = vadd.f32 %v1451, %v1775
        %v1902 = vadd.f32 %v1456, %v1780
        %v1903 = vadd.f32 %v1461, %v1785
        %v1904 = vadd.f32 %v1466, %v1790
        %v1905 = vadd.f32 %v1471, %v1795
        %v1906 = vadd.f32 %v1476, %v1800
        %v1907 = vadd.f32 %v1481, %v1805
        %v1908 = vadd.f32 %v1486, %v1810
        %v1909 = vadd.f32 %v1491, %v1815
        %v1910 = vadd.f32 %v1496, %v1820
        %v1911 = vadd.f32 %v1501, %v1825
        %v1912 = vadd.f32 %v1506, %v1830
        %v1913 = vadd.f32 %v1511, %v1835
        %v1914 = vadd.f32 %v1516, %v1840
        %v1915 = vadd.f32 %v1521, %v1845
        %v1916 = vadd.f32 %v1526, %v1850
        %v1917 = vadd.f32 %v1531, %v1855
        %v1918 = vadd.f32 %v1536, %v1860
        %v1919 = vadd.f32 %v1541, %v1865
        %v1920 = vadd.f32 %v1546, %v1870
        %v1921 = vadd.f32 %v1551, %v1875
        %v1922 = vadd.f32 %v1556, %v1880
        %v1923 = vadd.f32 %v1561, %v1885
        %v1924 = vadd.f32 %v1566, %v1890
        %s1925 = scalar_lea.vmem %s2, 48
        %v1926 = vld [vmem:[%s1925] sm:$0xff]
        %v1927 = vld [vmem:[%s1925 + $0x8] sm:$0xff]
        %v1929 = vsel %vm322, %v890, 0
        %v1932 = vsel %vm322, %v891, 0
        %v1935 = vsel %vm322, %v892, 0
        %v1938 = vsel %vm322, %v893, 0
        %v1941 = vsel %vm322, %v894, 0
        %v1944 = vsel %vm322, %v895, 0
        %v1947 = vsel %vm322, %v896, 0
        %v1950 = vsel %vm322, %v897, 0
        %v1953 = vsel %vm322, %v898, 0
        %v1956 = vsel %vm322, %v899, 0
        %v1959 = vsel %vm322, %v900, 0
        %v1962 = vsel %vm322, %v901, 0
        %v1965 = vsel %vm322, %v902, 0
        %v1968 = vsel %vm322, %v903, 0
        %v1971 = vsel %vm322, %v904, 0
        %v1974 = vsel %vm322, %v905, 0
        %v1977 = vsel %vm322, %v906, 0
        %v1980 = vsel %vm322, %v907, 0
        %v1983 = vsel %vm322, %v908, 0
        %v1986 = vsel %vm322, %v909, 0
        %v1989 = vsel %vm322, %v910, 0
        %v1992 = vsel %vm322, %v911, 0
        %v1995 = vsel %vm322, %v912, 0
        %v1998 = vsel %vm322, %v913, 0
        %v2001 = vsel %vm322, %v914, 0
        %v2004 = vsel %vm322, %v915, 0
        %v2007 = vsel %vm322, %v916, 0
        %v2010 = vsel %vm322, %v917, 0
        %v2013 = vsel %vm322, %v918, 0
        %v2016 = vsel %vm322, %v919, 0
        %v2019 = vsel %vm322, %v920, 0
        %v2022 = vsel %vm322, %v921, 0
        %2024 = vmatprep.subr.mxu0 0.0
        %2025 = vmatpush1.msra.mxu0 0.0
        %2026 = vmatprep.subr.mxu0 0.0
        %2027 = vmatpush1.msra.mxu0 0.0
        %2028 = vmatprep.subr.mxu0 0.0
        %2029 = vmatpush1.msra.mxu0 0.0
        %2030 = vmatprep.subr.mxu0 0.0
        %2031 = vmatpush1.msra.mxu0 0.0
        %2032 = vmatprep.subr.mxu0 0.0
        %2033 = vmatpush1.msra.mxu0 0.0
        %2034 = vmatprep.subr.mxu0 0.0
        %2035 = vmatpush1.msra.mxu0 0.0
        %2036 = vmatprep.subr.mxu0 0.0
        %2037 = vmatpush1.msra.mxu0 0.0
        %2038 = vmatprep.subr.mxu0 0.0
        %2039 = vmatpush1.msra.mxu0 0.0
        %2040 = vmatprep.subr.mxu0 0.0
        %2041 = vmatpush1.msra.mxu0 0.0
        %2042 = vmatprep.subr.mxu0 0.0
        %2043 = vmatpush1.msra.mxu0 0.0
        %2044 = vmatprep.subr.mxu0 0.0
        %2045 = vmatpush1.msra.mxu0 0.0
        %2046 = vmatprep.subr.mxu0 0.0
        %2047 = vmatpush1.msra.mxu0 0.0
        %2048 = vmatprep.subr.mxu0 0.0
        %2049 = vmatpush1.msra.mxu0 0.0
        %2050 = vmatprep.subr.mxu0 0.0
        %2051 = vmatpush1.msra.mxu0 0.0
        %2052 = vmatprep.subr.mxu0 0.0
        %2053 = vmatpush1.msra.mxu0 %v1927
        %2054 = vmatprep.subr.mxu0 0.0
        %2055 = vmatpush1.msra.mxu0 %v1926
        %2056 = vmatprep.subr.mxu0 0.0
        %2057 = vmatpush2.msra.mxu0 0.0
        %2058 = vmatprep.subr.mxu0 0.0
        %2059 = vmatpush2.msra.mxu0 0.0
        %2060 = vmatprep.subr.mxu0 0.0
        %2061 = vmatpush2.msra.mxu0 0.0
        %2062 = vmatprep.subr.mxu0 0.0
        %2063 = vmatpush2.msra.mxu0 0.0
        %2064 = vmatprep.subr.mxu0 0.0
        %2065 = vmatpush2.msra.mxu0 0.0
        %2066 = vmatprep.subr.mxu0 0.0
        %2067 = vmatpush2.msra.mxu0 0.0
        %2068 = vmatprep.subr.mxu0 0.0
        %2069 = vmatpush2.msra.mxu0 0.0
        %2070 = vmatprep.subr.mxu0 0.0
        %2071 = vmatpush2.msra.mxu0 0.0
        %2072 = vmatprep.subr.mxu0 0.0
        %2073 = vmatpush2.msra.mxu0 0.0
        %2074 = vmatprep.subr.mxu0 0.0
        %2075 = vmatpush2.msra.mxu0 0.0
        %2076 = vmatprep.subr.mxu0 0.0
        %2077 = vmatpush2.msra.mxu0 0.0
        %2078 = vmatprep.subr.mxu0 0.0
        %2079 = vmatpush2.msra.mxu0 0.0
        %2080 = vmatprep.subr.mxu0 0.0
        %2081 = vmatpush2.msra.mxu0 0.0
        %2082 = vmatprep.subr.mxu0 0.0
        %2083 = vmatpush2.msra.mxu0 0.0
        %2084 = vmatprep.subr.mxu0 0.0
        %2085 = vmatpush2.msra.mxu0 0.0
        %2086 = vmatprep.subr.mxu0 0.0
        %2087 = vmatpush2.msra.mxu0 0.0
        %2088 = vmatprep.mubr.f32.mxu0 0.0
        %2089 = vmatmul.mubr.f32.gmra.mxu0 %v1929
        %v2090 = vpop.f32.mrf.mxu0
        %v2091 = vadd.f32 0.0, %v2090
        %v2092 = vpop.f32.mrf.mxu0
        %2093 = vmatprep.mubr.f32.mxu0 0.0
        %2094 = vmatmul.mubr.f32.gmra.mxu0 %v1932
        %v2095 = vpop.f32.mrf.mxu0
        %v2096 = vadd.f32 0.0, %v2095
        %v2097 = vpop.f32.mrf.mxu0
        %2098 = vmatprep.mubr.f32.mxu0 0.0
        %2099 = vmatmul.mubr.f32.gmra.mxu0 %v1935
        %v2100 = vpop.f32.mrf.mxu0
        %v2101 = vadd.f32 0.0, %v2100
        %v2102 = vpop.f32.mrf.mxu0
        %2103 = vmatprep.mubr.f32.mxu0 0.0
        %2104 = vmatmul.mubr.f32.gmra.mxu0 %v1938
        %v2105 = vpop.f32.mrf.mxu0
        %v2106 = vadd.f32 0.0, %v2105
        %v2107 = vpop.f32.mrf.mxu0
        %2108 = vmatprep.mubr.f32.mxu0 0.0
        %2109 = vmatmul.mubr.f32.gmra.mxu0 %v1941
        %v2110 = vpop.f32.mrf.mxu0
        %v2111 = vadd.f32 0.0, %v2110
        %v2112 = vpop.f32.mrf.mxu0
        %2113 = vmatprep.mubr.f32.mxu0 0.0
        %2114 = vmatmul.mubr.f32.gmra.mxu0 %v1944
        %v2115 = vpop.f32.mrf.mxu0
        %v2116 = vadd.f32 0.0, %v2115
        %v2117 = vpop.f32.mrf.mxu0
        %2118 = vmatprep.mubr.f32.mxu0 0.0
        %2119 = vmatmul.mubr.f32.gmra.mxu0 %v1947
        %v2120 = vpop.f32.mrf.mxu0
        %v2121 = vadd.f32 0.0, %v2120
        %v2122 = vpop.f32.mrf.mxu0
        %2123 = vmatprep.mubr.f32.mxu0 0.0
        %2124 = vmatmul.mubr.f32.gmra.mxu0 %v1950
        %v2125 = vpop.f32.mrf.mxu0
        %v2126 = vadd.f32 0.0, %v2125
        %v2127 = vpop.f32.mrf.mxu0
        %2128 = vmatprep.mubr.f32.mxu0 0.0
        %2129 = vmatmul.mubr.f32.gmra.mxu0 %v1953
        %v2130 = vpop.f32.mrf.mxu0
        %v2131 = vadd.f32 0.0, %v2130
        %v2132 = vpop.f32.mrf.mxu0
        %2133 = vmatprep.mubr.f32.mxu0 0.0
        %2134 = vmatmul.mubr.f32.gmra.mxu0 %v1956
        %v2135 = vpop.f32.mrf.mxu0
        %v2136 = vadd.f32 0.0, %v2135
        %v2137 = vpop.f32.mrf.mxu0
        %2138 = vmatprep.mubr.f32.mxu0 0.0
        %2139 = vmatmul.mubr.f32.gmra.mxu0 %v1959
        %v2140 = vpop.f32.mrf.mxu0
        %v2141 = vadd.f32 0.0, %v2140
        %v2142 = vpop.f32.mrf.mxu0
        %2143 = vmatprep.mubr.f32.mxu0 0.0
        %2144 = vmatmul.mubr.f32.gmra.mxu0 %v1962
        %v2145 = vpop.f32.mrf.mxu0
        %v2146 = vadd.f32 0.0, %v2145
        %v2147 = vpop.f32.mrf.mxu0
        %2148 = vmatprep.mubr.f32.mxu0 0.0
        %2149 = vmatmul.mubr.f32.gmra.mxu0 %v1965
        %v2150 = vpop.f32.mrf.mxu0
        %v2151 = vadd.f32 0.0, %v2150
        %v2152 = vpop.f32.mrf.mxu0
        %2153 = vmatprep.mubr.f32.mxu0 0.0
        %2154 = vmatmul.mubr.f32.gmra.mxu0 %v1968
        %v2155 = vpop.f32.mrf.mxu0
        %v2156 = vadd.f32 0.0, %v2155
        %v2157 = vpop.f32.mrf.mxu0
        %2158 = vmatprep.mubr.f32.mxu0 0.0
        %2159 = vmatmul.mubr.f32.gmra.mxu0 %v1971
        %v2160 = vpop.f32.mrf.mxu0
        %v2161 = vadd.f32 0.0, %v2160
        %v2162 = vpop.f32.mrf.mxu0
        %2163 = vmatprep.mubr.f32.mxu0 0.0
        %2164 = vmatmul.mubr.f32.gmra.mxu0 %v1974
        %v2165 = vpop.f32.mrf.mxu0
        %v2166 = vadd.f32 0.0, %v2165
        %v2167 = vpop.f32.mrf.mxu0
        %2168 = vmatprep.mubr.f32.mxu0 0.0
        %2169 = vmatmul.mubr.f32.gmra.mxu0 %v1977
        %v2170 = vpop.f32.mrf.mxu0
        %v2171 = vadd.f32 0.0, %v2170
        %v2172 = vpop.f32.mrf.mxu0
        %2173 = vmatprep.mubr.f32.mxu0 0.0
        %2174 = vmatmul.mubr.f32.gmra.mxu0 %v1980
        %v2175 = vpop.f32.mrf.mxu0
        %v2176 = vadd.f32 0.0, %v2175
        %v2177 = vpop.f32.mrf.mxu0
        %2178 = vmatprep.mubr.f32.mxu0 0.0
        %2179 = vmatmul.mubr.f32.gmra.mxu0 %v1983
        %v2180 = vpop.f32.mrf.mxu0
        %v2181 = vadd.f32 0.0, %v2180
        %v2182 = vpop.f32.mrf.mxu0
        %2183 = vmatprep.mubr.f32.mxu0 0.0
        %2184 = vmatmul.mubr.f32.gmra.mxu0 %v1986
        %v2185 = vpop.f32.mrf.mxu0
        %v2186 = vadd.f32 0.0, %v2185
        %v2187 = vpop.f32.mrf.mxu0
        %2188 = vmatprep.mubr.f32.mxu0 0.0
        %2189 = vmatmul.mubr.f32.gmra.mxu0 %v1989
        %v2190 = vpop.f32.mrf.mxu0
        %v2191 = vadd.f32 0.0, %v2190
        %v2192 = vpop.f32.mrf.mxu0
        %2193 = vmatprep.mubr.f32.mxu0 0.0
        %2194 = vmatmul.mubr.f32.gmra.mxu0 %v1992
        %v2195 = vpop.f32.mrf.mxu0
        %v2196 = vadd.f32 0.0, %v2195
        %v2197 = vpop.f32.mrf.mxu0
        %2198 = vmatprep.mubr.f32.mxu0 0.0
        %2199 = vmatmul.mubr.f32.gmra.mxu0 %v1995
        %v2200 = vpop.f32.mrf.mxu0
        %v2201 = vadd.f32 0.0, %v2200
        %v2202 = vpop.f32.mrf.mxu0
        %2203 = vmatprep.mubr.f32.mxu0 0.0
        %2204 = vmatmul.mubr.f32.gmra.mxu0 %v1998
        %v2205 = vpop.f32.mrf.mxu0
        %v2206 = vadd.f32 0.0, %v2205
        %v2207 = vpop.f32.mrf.mxu0
        %2208 = vmatprep.mubr.f32.mxu0 0.0
        %2209 = vmatmul.mubr.f32.gmra.mxu0 %v2001
        %v2210 = vpop.f32.mrf.mxu0
        %v2211 = vadd.f32 0.0, %v2210
        %v2212 = vpop.f32.mrf.mxu0
        %2213 = vmatprep.mubr.f32.mxu0 0.0
        %2214 = vmatmul.mubr.f32.gmra.mxu0 %v2004
        %v2215 = vpop.f32.mrf.mxu0
        %v2216 = vadd.f32 0.0, %v2215
        %v2217 = vpop.f32.mrf.mxu0
        %2218 = vmatprep.mubr.f32.mxu0 0.0
        %2219 = vmatmul.mubr.f32.gmra.mxu0 %v2007
        %v2220 = vpop.f32.mrf.mxu0
        %v2221 = vadd.f32 0.0, %v2220
        %v2222 = vpop.f32.mrf.mxu0
        %2223 = vmatprep.mubr.f32.mxu0 0.0
        %2224 = vmatmul.mubr.f32.gmra.mxu0 %v2010
        %v2225 = vpop.f32.mrf.mxu0
        %v2226 = vadd.f32 0.0, %v2225
        %v2227 = vpop.f32.mrf.mxu0
        %2228 = vmatprep.mubr.f32.mxu0 0.0
        %2229 = vmatmul.mubr.f32.gmra.mxu0 %v2013
        %v2230 = vpop.f32.mrf.mxu0
        %v2231 = vadd.f32 0.0, %v2230
        %v2232 = vpop.f32.mrf.mxu0
        %2233 = vmatprep.mubr.f32.mxu0 0.0
        %2234 = vmatmul.mubr.f32.gmra.mxu0 %v2016
        %v2235 = vpop.f32.mrf.mxu0
        %v2236 = vadd.f32 0.0, %v2235
        %v2237 = vpop.f32.mrf.mxu0
        %2238 = vmatprep.mubr.f32.mxu0 0.0
        %2239 = vmatmul.mubr.f32.gmra.mxu0 %v2019
        %v2240 = vpop.f32.mrf.mxu0
        %v2241 = vadd.f32 0.0, %v2240
        %v2242 = vpop.f32.mrf.mxu0
        %2243 = vmatprep.mubr.f32.mxu0 0.0
        %2244 = vmatmul.mubr.f32.gmra.mxu0 %v2022
        %v2245 = vpop.f32.mrf.mxu0
        %v2246 = vadd.f32 0.0, %v2245
        %v2247 = vpop.f32.mrf.mxu0
        %2248 = vdwg.mxu0
        %v2249 = vadd.f32 %v1893, %v2091
        %v2250 = vadd.f32 %v1894, %v2096
        %v2251 = vadd.f32 %v1895, %v2101
        %v2252 = vadd.f32 %v1896, %v2106
        %v2253 = vadd.f32 %v1897, %v2111
        %v2254 = vadd.f32 %v1898, %v2116
        %v2255 = vadd.f32 %v1899, %v2121
        %v2256 = vadd.f32 %v1900, %v2126
        %v2257 = vadd.f32 %v1901, %v2131
        %v2258 = vadd.f32 %v1902, %v2136
        %v2259 = vadd.f32 %v1903, %v2141
        %v2260 = vadd.f32 %v1904, %v2146
        %v2261 = vadd.f32 %v1905, %v2151
        %v2262 = vadd.f32 %v1906, %v2156
        %v2263 = vadd.f32 %v1907, %v2161
        %v2264 = vadd.f32 %v1908, %v2166
        %v2265 = vadd.f32 %v1909, %v2171
        %v2266 = vadd.f32 %v1910, %v2176
        %v2267 = vadd.f32 %v1911, %v2181
        %v2268 = vadd.f32 %v1912, %v2186
        %v2269 = vadd.f32 %v1913, %v2191
        %v2270 = vadd.f32 %v1914, %v2196
        %v2271 = vadd.f32 %v1915, %v2201
        %v2272 = vadd.f32 %v1916, %v2206
        %v2273 = vadd.f32 %v1917, %v2211
        %v2274 = vadd.f32 %v1918, %v2216
        %v2275 = vadd.f32 %v1919, %v2221
        %v2276 = vadd.f32 %v1920, %v2226
        %v2277 = vadd.f32 %v1921, %v2231
        %v2278 = vadd.f32 %v1922, %v2236
        %v2279 = vadd.f32 %v1923, %v2241
        %v2280 = vadd.f32 %v1924, %v2246
        %vm2281 = vcmp.gt.f32.partialorder %v2249, 0.0
        %vm2282 = vcmp.gt.f32.partialorder %v2250, 0.0
        %vm2283 = vcmp.gt.f32.partialorder %v2251, 0.0
        %vm2284 = vcmp.gt.f32.partialorder %v2252, 0.0
        %vm2285 = vcmp.gt.f32.partialorder %v2253, 0.0
        %vm2286 = vcmp.gt.f32.partialorder %v2254, 0.0
        %vm2287 = vcmp.gt.f32.partialorder %v2255, 0.0
        %vm2288 = vcmp.gt.f32.partialorder %v2256, 0.0
        %vm2289 = vcmp.gt.f32.partialorder %v2257, 0.0
        %vm2290 = vcmp.gt.f32.partialorder %v2258, 0.0
        %vm2291 = vcmp.gt.f32.partialorder %v2259, 0.0
        %vm2292 = vcmp.gt.f32.partialorder %v2260, 0.0
        %vm2293 = vcmp.gt.f32.partialorder %v2261, 0.0
        %vm2294 = vcmp.gt.f32.partialorder %v2262, 0.0
        %vm2295 = vcmp.gt.f32.partialorder %v2263, 0.0
        %vm2296 = vcmp.gt.f32.partialorder %v2264, 0.0
        %vm2297 = vcmp.gt.f32.partialorder %v2265, 0.0
        %vm2298 = vcmp.gt.f32.partialorder %v2266, 0.0
        %vm2299 = vcmp.gt.f32.partialorder %v2267, 0.0
        %vm2300 = vcmp.gt.f32.partialorder %v2268, 0.0
        %vm2301 = vcmp.gt.f32.partialorder %v2269, 0.0
        %vm2302 = vcmp.gt.f32.partialorder %v2270, 0.0
        %vm2303 = vcmp.gt.f32.partialorder %v2271, 0.0
        %vm2304 = vcmp.gt.f32.partialorder %v2272, 0.0
        %vm2305 = vcmp.gt.f32.partialorder %v2273, 0.0
        %vm2306 = vcmp.gt.f32.partialorder %v2274, 0.0
        %vm2307 = vcmp.gt.f32.partialorder %v2275, 0.0
        %vm2308 = vcmp.gt.f32.partialorder %v2276, 0.0
        %vm2309 = vcmp.gt.f32.partialorder %v2277, 0.0
        %vm2310 = vcmp.gt.f32.partialorder %v2278, 0.0
        %vm2311 = vcmp.gt.f32.partialorder %v2279, 0.0
        %vm2312 = vcmp.gt.f32.partialorder %v2280, 0.0
        %v2313 = vstv %s287
        %v2314 = vmul.f32 %v2313, %v2249
        %v2315 = vmul.f32 %v2313, %v2250
        %v2316 = vmul.f32 %v2313, %v2251
        %v2317 = vmul.f32 %v2313, %v2252
        %v2318 = vmul.f32 %v2313, %v2253
        %v2319 = vmul.f32 %v2313, %v2254
        %v2320 = vmul.f32 %v2313, %v2255
        %v2321 = vmul.f32 %v2313, %v2256
        %v2322 = vmul.f32 %v2313, %v2257
        %v2323 = vmul.f32 %v2313, %v2258
        %v2324 = vmul.f32 %v2313, %v2259
        %v2325 = vmul.f32 %v2313, %v2260
        %v2326 = vmul.f32 %v2313, %v2261
        %v2327 = vmul.f32 %v2313, %v2262
        %v2328 = vmul.f32 %v2313, %v2263
        %v2329 = vmul.f32 %v2313, %v2264
        %v2330 = vmul.f32 %v2313, %v2265
        %v2331 = vmul.f32 %v2313, %v2266
        %v2332 = vmul.f32 %v2313, %v2267
        %v2333 = vmul.f32 %v2313, %v2268
        %v2334 = vmul.f32 %v2313, %v2269
        %v2335 = vmul.f32 %v2313, %v2270
        %v2336 = vmul.f32 %v2313, %v2271
        %v2337 = vmul.f32 %v2313, %v2272
        %v2338 = vmul.f32 %v2313, %v2273
        %v2339 = vmul.f32 %v2313, %v2274
        %v2340 = vmul.f32 %v2313, %v2275
        %v2341 = vmul.f32 %v2313, %v2276
        %v2342 = vmul.f32 %v2313, %v2277
        %v2343 = vmul.f32 %v2313, %v2278
        %v2344 = vmul.f32 %v2313, %v2279
        %v2345 = vmul.f32 %v2313, %v2280
        %v2346 = vsel %vm2281, %v2249, %v2314
        %v2347 = vsel %vm2282, %v2250, %v2315
        %v2348 = vsel %vm2283, %v2251, %v2316
        %v2349 = vsel %vm2284, %v2252, %v2317
        %v2350 = vsel %vm2285, %v2253, %v2318
        %v2351 = vsel %vm2286, %v2254, %v2319
        %v2352 = vsel %vm2287, %v2255, %v2320
        %v2353 = vsel %vm2288, %v2256, %v2321
        %v2354 = vsel %vm2289, %v2257, %v2322
        %v2355 = vsel %vm2290, %v2258, %v2323
        %v2356 = vsel %vm2291, %v2259, %v2324
        %v2357 = vsel %vm2292, %v2260, %v2325
        %v2358 = vsel %vm2293, %v2261, %v2326
        %v2359 = vsel %vm2294, %v2262, %v2327
        %v2360 = vsel %vm2295, %v2263, %v2328
        %v2361 = vsel %vm2296, %v2264, %v2329
        %v2362 = vsel %vm2297, %v2265, %v2330
        %v2363 = vsel %vm2298, %v2266, %v2331
        %v2364 = vsel %vm2299, %v2267, %v2332
        %v2365 = vsel %vm2300, %v2268, %v2333
        %v2366 = vsel %vm2301, %v2269, %v2334
        %v2367 = vsel %vm2302, %v2270, %v2335
        %v2368 = vsel %vm2303, %v2271, %v2336
        %v2369 = vsel %vm2304, %v2272, %v2337
        %v2370 = vsel %vm2305, %v2273, %v2338
        %v2371 = vsel %vm2306, %v2274, %v2339
        %v2372 = vsel %vm2307, %v2275, %v2340
        %v2373 = vsel %vm2308, %v2276, %v2341
        %v2374 = vsel %vm2309, %v2277, %v2342
        %v2375 = vsel %vm2310, %v2278, %v2343
        %v2376 = vsel %vm2311, %v2279, %v2344
        %v2377 = vsel %vm2312, %v2280, %v2345
        %v2378 = vld [vmem:[%s4] sm:$0xff]
        %v2379 = vld [vmem:[%s4 + $0x8] sm:$0xff]
        %2380 = vmatprep.subr.mxu0 0.0
        %2381 = vmatpush1.msra.mxu0 0.0
        %2382 = vmatprep.subr.mxu0 0.0
        %2383 = vmatpush1.msra.mxu0 0.0
        %2384 = vmatprep.subr.mxu0 0.0
        %2385 = vmatpush1.msra.mxu0 0.0
        %2386 = vmatprep.subr.mxu0 0.0
        %2387 = vmatpush1.msra.mxu0 0.0
        %2388 = vmatprep.subr.mxu0 0.0
        %2389 = vmatpush1.msra.mxu0 0.0
        %2390 = vmatprep.subr.mxu0 0.0
        %2391 = vmatpush1.msra.mxu0 0.0
        %2392 = vmatprep.subr.mxu0 0.0
        %2393 = vmatpush1.msra.mxu0 0.0
        %2394 = vmatprep.subr.mxu0 0.0
        %2395 = vmatpush1.msra.mxu0 0.0
        %2396 = vmatprep.subr.mxu0 0.0
        %2397 = vmatpush1.msra.mxu0 0.0
        %2398 = vmatprep.subr.mxu0 0.0
        %2399 = vmatpush1.msra.mxu0 0.0
        %2400 = vmatprep.subr.mxu0 0.0
        %2401 = vmatpush1.msra.mxu0 0.0
        %2402 = vmatprep.subr.mxu0 0.0
        %2403 = vmatpush1.msra.mxu0 0.0
        %2404 = vmatprep.subr.mxu0 0.0
        %2405 = vmatpush1.msra.mxu0 0.0
        %2406 = vmatprep.subr.mxu0 0.0
        %2407 = vmatpush1.msra.mxu0 0.0
        %2408 = vmatprep.subr.mxu0 0.0
        %2409 = vmatpush1.msra.mxu0 %v2379
        %2410 = vmatprep.subr.mxu0 0.0
        %2411 = vmatpush1.msra.mxu0 %v2378
        %2412 = vmatprep.subr.mxu0 0.0
        %2413 = vmatpush2.msra.mxu0 0.0
        %2414 = vmatprep.subr.mxu0 0.0
        %2415 = vmatpush2.msra.mxu0 0.0
        %2416 = vmatprep.subr.mxu0 0.0
        %2417 = vmatpush2.msra.mxu0 0.0
        %2418 = vmatprep.subr.mxu0 0.0
        %2419 = vmatpush2.msra.mxu0 0.0
        %2420 = vmatprep.subr.mxu0 0.0
        %2421 = vmatpush2.msra.mxu0 0.0
        %2422 = vmatprep.subr.mxu0 0.0
        %2423 = vmatpush2.msra.mxu0 0.0
        %2424 = vmatprep.subr.mxu0 0.0
        %2425 = vmatpush2.msra.mxu0 0.0
        %2426 = vmatprep.subr.mxu0 0.0
        %2427 = vmatpush2.msra.mxu0 0.0
        %2428 = vmatprep.subr.mxu0 0.0
        %2429 = vmatpush2.msra.mxu0 0.0
        %2430 = vmatprep.subr.mxu0 0.0
        %2431 = vmatpush2.msra.mxu0 0.0
        %2432 = vmatprep.subr.mxu0 0.0
        %2433 = vmatpush2.msra.mxu0 0.0
        %2434 = vmatprep.subr.mxu0 0.0
        %2435 = vmatpush2.msra.mxu0 0.0
        %2436 = vmatprep.subr.mxu0 0.0
        %2437 = vmatpush2.msra.mxu0 0.0
        %2438 = vmatprep.subr.mxu0 0.0
        %2439 = vmatpush2.msra.mxu0 0.0
        %2440 = vmatprep.subr.mxu0 0.0
        %2441 = vmatpush2.msra.mxu0 0.0
        %2442 = vmatprep.subr.mxu0 0.0
        %2443 = vmatpush2.msra.mxu0 0.0
        %2444 = vmatprep.mubr.f32.mxu0 0.0
        %2445 = vmatmul.mubr.f32.gmra.mxu0 %v324
        %v2446 = vpop.f32.mrf.mxu0
        %v2447 = vadd.f32 0.0, %v2446
        %v2448 = vpop.f32.mrf.mxu0
        %2449 = vmatprep.mubr.f32.mxu0 0.0
        %2450 = vmatmul.mubr.f32.gmra.mxu0 %v327
        %v2451 = vpop.f32.mrf.mxu0
        %v2452 = vadd.f32 0.0, %v2451
        %v2453 = vpop.f32.mrf.mxu0
        %2454 = vmatprep.mubr.f32.mxu0 0.0
        %2455 = vmatmul.mubr.f32.gmra.mxu0 %v330
        %v2456 = vpop.f32.mrf.mxu0
        %v2457 = vadd.f32 0.0, %v2456
        %v2458 = vpop.f32.mrf.mxu0
        %2459 = vmatprep.mubr.f32.mxu0 0.0
        %2460 = vmatmul.mubr.f32.gmra.mxu0 %v333
        %v2461 = vpop.f32.mrf.mxu0
        %v2462 = vadd.f32 0.0, %v2461
        %v2463 = vpop.f32.mrf.mxu0
        %2464 = vmatprep.mubr.f32.mxu0 0.0
        %2465 = vmatmul.mubr.f32.gmra.mxu0 %v336
        %v2466 = vpop.f32.mrf.mxu0
        %v2467 = vadd.f32 0.0, %v2466
        %v2468 = vpop.f32.mrf.mxu0
        %2469 = vmatprep.mubr.f32.mxu0 0.0
        %2470 = vmatmul.mubr.f32.gmra.mxu0 %v339
        %v2471 = vpop.f32.mrf.mxu0
        %v2472 = vadd.f32 0.0, %v2471
        %v2473 = vpop.f32.mrf.mxu0
        %2474 = vmatprep.mubr.f32.mxu0 0.0
        %2475 = vmatmul.mubr.f32.gmra.mxu0 %v342
        %v2476 = vpop.f32.mrf.mxu0
        %v2477 = vadd.f32 0.0, %v2476
        %v2478 = vpop.f32.mrf.mxu0
        %2479 = vmatprep.mubr.f32.mxu0 0.0
        %2480 = vmatmul.mubr.f32.gmra.mxu0 %v345
        %v2481 = vpop.f32.mrf.mxu0
        %v2482 = vadd.f32 0.0, %v2481
        %v2483 = vpop.f32.mrf.mxu0
        %2484 = vmatprep.mubr.f32.mxu0 0.0
        %2485 = vmatmul.mubr.f32.gmra.mxu0 %v348
        %v2486 = vpop.f32.mrf.mxu0
        %v2487 = vadd.f32 0.0, %v2486
        %v2488 = vpop.f32.mrf.mxu0
        %2489 = vmatprep.mubr.f32.mxu0 0.0
        %2490 = vmatmul.mubr.f32.gmra.mxu0 %v351
        %v2491 = vpop.f32.mrf.mxu0
        %v2492 = vadd.f32 0.0, %v2491
        %v2493 = vpop.f32.mrf.mxu0
        %2494 = vmatprep.mubr.f32.mxu0 0.0
        %2495 = vmatmul.mubr.f32.gmra.mxu0 %v354
        %v2496 = vpop.f32.mrf.mxu0
        %v2497 = vadd.f32 0.0, %v2496
        %v2498 = vpop.f32.mrf.mxu0
        %2499 = vmatprep.mubr.f32.mxu0 0.0
        %2500 = vmatmul.mubr.f32.gmra.mxu0 %v357
        %v2501 = vpop.f32.mrf.mxu0
        %v2502 = vadd.f32 0.0, %v2501
        %v2503 = vpop.f32.mrf.mxu0
        %2504 = vmatprep.mubr.f32.mxu0 0.0
        %2505 = vmatmul.mubr.f32.gmra.mxu0 %v360
        %v2506 = vpop.f32.mrf.mxu0
        %v2507 = vadd.f32 0.0, %v2506
        %v2508 = vpop.f32.mrf.mxu0
        %2509 = vmatprep.mubr.f32.mxu0 0.0
        %2510 = vmatmul.mubr.f32.gmra.mxu0 %v363
        %v2511 = vpop.f32.mrf.mxu0
        %v2512 = vadd.f32 0.0, %v2511
        %v2513 = vpop.f32.mrf.mxu0
        %2514 = vmatprep.mubr.f32.mxu0 0.0
        %2515 = vmatmul.mubr.f32.gmra.mxu0 %v366
        %v2516 = vpop.f32.mrf.mxu0
        %v2517 = vadd.f32 0.0, %v2516
        %v2518 = vpop.f32.mrf.mxu0
        %2519 = vmatprep.mubr.f32.mxu0 0.0
        %2520 = vmatmul.mubr.f32.gmra.mxu0 %v369
        %v2521 = vpop.f32.mrf.mxu0
        %v2522 = vadd.f32 0.0, %v2521
        %v2523 = vpop.f32.mrf.mxu0
        %2524 = vmatprep.mubr.f32.mxu0 0.0
        %2525 = vmatmul.mubr.f32.gmra.mxu0 %v372
        %v2526 = vpop.f32.mrf.mxu0
        %v2527 = vadd.f32 0.0, %v2526
        %v2528 = vpop.f32.mrf.mxu0
        %2529 = vmatprep.mubr.f32.mxu0 0.0
        %2530 = vmatmul.mubr.f32.gmra.mxu0 %v375
        %v2531 = vpop.f32.mrf.mxu0
        %v2532 = vadd.f32 0.0, %v2531
        %v2533 = vpop.f32.mrf.mxu0
        %2534 = vmatprep.mubr.f32.mxu0 0.0
        %2535 = vmatmul.mubr.f32.gmra.mxu0 %v378
        %v2536 = vpop.f32.mrf.mxu0
        %v2537 = vadd.f32 0.0, %v2536
        %v2538 = vpop.f32.mrf.mxu0
        %2539 = vmatprep.mubr.f32.mxu0 0.0
        %2540 = vmatmul.mubr.f32.gmra.mxu0 %v381
        %v2541 = vpop.f32.mrf.mxu0
        %v2542 = vadd.f32 0.0, %v2541
        %v2543 = vpop.f32.mrf.mxu0
        %2544 = vmatprep.mubr.f32.mxu0 0.0
        %2545 = vmatmul.mubr.f32.gmra.mxu0 %v384
        %v2546 = vpop.f32.mrf.mxu0
        %v2547 = vadd.f32 0.0, %v2546
        %v2548 = vpop.f32.mrf.mxu0
        %2549 = vmatprep.mubr.f32.mxu0 0.0
        %2550 = vmatmul.mubr.f32.gmra.mxu0 %v387
        %v2551 = vpop.f32.mrf.mxu0
        %v2552 = vadd.f32 0.0, %v2551
        %v2553 = vpop.f32.mrf.mxu0
        %2554 = vmatprep.mubr.f32.mxu0 0.0
        %2555 = vmatmul.mubr.f32.gmra.mxu0 %v390
        %v2556 = vpop.f32.mrf.mxu0
        %v2557 = vadd.f32 0.0, %v2556
        %v2558 = vpop.f32.mrf.mxu0
        %2559 = vmatprep.mubr.f32.mxu0 0.0
        %2560 = vmatmul.mubr.f32.gmra.mxu0 %v393
        %v2561 = vpop.f32.mrf.mxu0
        %v2562 = vadd.f32 0.0, %v2561
        %v2563 = vpop.f32.mrf.mxu0
        %2564 = vmatprep.mubr.f32.mxu0 0.0
        %2565 = vmatmul.mubr.f32.gmra.mxu0 %v396
        %v2566 = vpop.f32.mrf.mxu0
        %v2567 = vadd.f32 0.0, %v2566
        %v2568 = vpop.f32.mrf.mxu0
        %2569 = vmatprep.mubr.f32.mxu0 0.0
        %2570 = vmatmul.mubr.f32.gmra.mxu0 %v399
        %v2571 = vpop.f32.mrf.mxu0
        %v2572 = vadd.f32 0.0, %v2571
        %v2573 = vpop.f32.mrf.mxu0
        %2574 = vmatprep.mubr.f32.mxu0 0.0
        %2575 = vmatmul.mubr.f32.gmra.mxu0 %v402
        %v2576 = vpop.f32.mrf.mxu0
        %v2577 = vadd.f32 0.0, %v2576
        %v2578 = vpop.f32.mrf.mxu0
        %2579 = vmatprep.mubr.f32.mxu0 0.0
        %2580 = vmatmul.mubr.f32.gmra.mxu0 %v405
        %v2581 = vpop.f32.mrf.mxu0
        %v2582 = vadd.f32 0.0, %v2581
        %v2583 = vpop.f32.mrf.mxu0
        %2584 = vmatprep.mubr.f32.mxu0 0.0
        %2585 = vmatmul.mubr.f32.gmra.mxu0 %v408
        %v2586 = vpop.f32.mrf.mxu0
        %v2587 = vadd.f32 0.0, %v2586
        %v2588 = vpop.f32.mrf.mxu0
        %2589 = vmatprep.mubr.f32.mxu0 0.0
        %2590 = vmatmul.mubr.f32.gmra.mxu0 %v411
        %v2591 = vpop.f32.mrf.mxu0
        %v2592 = vadd.f32 0.0, %v2591
        %v2593 = vpop.f32.mrf.mxu0
        %2594 = vmatprep.mubr.f32.mxu0 0.0
        %2595 = vmatmul.mubr.f32.gmra.mxu0 %v414
        %v2596 = vpop.f32.mrf.mxu0
        %v2597 = vadd.f32 0.0, %v2596
        %v2598 = vpop.f32.mrf.mxu0
        %2599 = vmatprep.mubr.f32.mxu0 0.0
        %2600 = vmatmul.mubr.f32.gmra.mxu0 %v417
        %v2601 = vpop.f32.mrf.mxu0
        %v2602 = vadd.f32 0.0, %v2601
        %v2603 = vpop.f32.mrf.mxu0
        %2604 = vdwg.mxu0
        %vm2605 = vcmask 64512
        %2606 = vst.msk [vmem:[#allocation3] sm:$0xff] %vm2605, 0.0
        %2607 = vst.msk [vmem:[#allocation3 + $0x8] sm:$0xff] %vm2605, 0.0
        %vm2608 = vcmask 58368
        %2609 = vst.msk [vmem:[#allocation3 + $0x10] sm:$0x3] %vm2608, 0.0
        %2610 = vst.msk [vmem:[#allocation3 + $0x18] sm:$0xff] %vm2605, 0.0
        %2611 = vst.msk [vmem:[#allocation3 + $0x20] sm:$0xff] %vm2605, 0.0
        %2612 = vst.msk [vmem:[#allocation3 + $0x28] sm:$0x3] %vm2608, 0.0
        %2613 = vst.msk [vmem:[#allocation3 + $0x30] sm:$0xff] %vm2605, 0.0
        %2614 = vst.msk [vmem:[#allocation3 + $0x38] sm:$0xff] %vm2605, 0.0
        %2615 = vst.msk [vmem:[#allocation3 + $0x40] sm:$0x3] %vm2608, 0.0
        %2616 = vst.msk [vmem:[#allocation3 + $0x48] sm:$0xff] %vm2605, 0.0
        %2617 = vst.msk [vmem:[#allocation3 + $0x50] sm:$0xff] %vm2605, 0.0
        %2618 = vst.msk [vmem:[#allocation3 + $0x58] sm:$0x3] %vm2608, 0.0
        %2619 = vst.msk [vmem:[#allocation3 + $0x60] sm:$0xff] %vm2605, 0.0
        %2620 = vst.msk [vmem:[#allocation3 + $0x68] sm:$0xff] %vm2605, 0.0
        %2621 = vst.msk [vmem:[#allocation3 + $0x70] sm:$0x3] %vm2608, 0.0
        %2622 = vst.msk [vmem:[#allocation3 + $0x78] sm:$0xff] %vm2605, 0.0
        %2623 = vst.msk [vmem:[#allocation3 + $0x80] sm:$0xff] %vm2605, 0.0
        %2624 = vst.msk [vmem:[#allocation3 + $0x88] sm:$0x3] %vm2608, 0.0
        %2625 = vst.msk [vmem:[#allocation3 + $0x90] sm:$0xff] %vm2605, 0.0
        %2626 = vst.msk [vmem:[#allocation3 + $0x98] sm:$0xff] %vm2605, 0.0
        %2627 = vst.msk [vmem:[#allocation3 + $0xa0] sm:$0x3] %vm2608, 0.0
        %2628 = vst.msk [vmem:[#allocation3 + $0xa8] sm:$0xff] %vm2605, 0.0
        %2629 = vst.msk [vmem:[#allocation3 + $0xb0] sm:$0xff] %vm2605, 0.0
        %2630 = vst.msk [vmem:[#allocation3 + $0xb8] sm:$0x3] %vm2608, 0.0
        %2631 = vst.msk [vmem:[#allocation3 + $0xc0] sm:$0xff] %vm2605, 0.0
        %2632 = vst.msk [vmem:[#allocation3 + $0xc8] sm:$0xff] %vm2605, 0.0
        %2633 = vst.msk [vmem:[#allocation3 + $0xd0] sm:$0x3] %vm2608, 0.0
        %2634 = vst.msk [vmem:[#allocation3 + $0xd8] sm:$0xff] %vm2605, 0.0
        %2635 = vst.msk [vmem:[#allocation3 + $0xe0] sm:$0xff] %vm2605, 0.0
        %2636 = vst.msk [vmem:[#allocation3 + $0xe8] sm:$0x3] %vm2608, 0.0
        %2637 = vst.msk [vmem:[#allocation3 + $0xf0] sm:$0xff] %vm2605, 0.0
        %2638 = vst.msk [vmem:[#allocation3 + $0xf8] sm:$0xff] %vm2605, 0.0
        %2639 = vst.msk [vmem:[#allocation3 + $0x100] sm:$0x3] %vm2608, 0.0
        %2640 = vst.msk [vmem:[#allocation3 + $0x108] sm:$0xff] %vm2605, 0.0
        %2641 = vst.msk [vmem:[#allocation3 + $0x110] sm:$0xff] %vm2605, 0.0
        %2642 = vst.msk [vmem:[#allocation3 + $0x118] sm:$0x3] %vm2608, 0.0
        %2643 = vst.msk [vmem:[#allocation3 + $0x120] sm:$0xff] %vm2605, 0.0
        %2644 = vst.msk [vmem:[#allocation3 + $0x128] sm:$0xff] %vm2605, 0.0
        %2645 = vst.msk [vmem:[#allocation3 + $0x130] sm:$0x3] %vm2608, 0.0
        %2646 = vst.msk [vmem:[#allocation3 + $0x138] sm:$0xff] %vm2605, 0.0
        %2647 = vst.msk [vmem:[#allocation3 + $0x140] sm:$0xff] %vm2605, 0.0
        %2648 = vst.msk [vmem:[#allocation3 + $0x148] sm:$0x3] %vm2608, 0.0
        %2649 = vst.msk [vmem:[#allocation3 + $0x150] sm:$0xff] %vm2605, 0.0
        %2650 = vst.msk [vmem:[#allocation3 + $0x158] sm:$0xff] %vm2605, 0.0
        %2651 = vst.msk [vmem:[#allocation3 + $0x160] sm:$0x3] %vm2608, 0.0
        %2652 = vst.msk [vmem:[#allocation3 + $0x168] sm:$0xff] %vm2605, 0.0
        %2653 = vst.msk [vmem:[#allocation3 + $0x170] sm:$0xff] %vm2605, 0.0
        %2654 = vst.msk [vmem:[#allocation3 + $0x178] sm:$0x3] %vm2608, 0.0
        %2655 = vst.msk [vmem:[#allocation3 + $0x1] sm:$0xff] %vm2605, %v2447
        %2656 = vst.msk [vmem:[#allocation3 + $0x9] sm:$0xff] %vm2605, %v2452
        %2657 = vst.msk [vmem:[#allocation3 + $0x19] sm:$0xff] %vm2605, %v2457
        %2658 = vst.msk [vmem:[#allocation3 + $0x21] sm:$0xff] %vm2605, %v2462
        %2659 = vst.msk [vmem:[#allocation3 + $0x31] sm:$0xff] %vm2605, %v2467
        %2660 = vst.msk [vmem:[#allocation3 + $0x39] sm:$0xff] %vm2605, %v2472
        %2661 = vst.msk [vmem:[#allocation3 + $0x49] sm:$0xff] %vm2605, %v2477
        %2662 = vst.msk [vmem:[#allocation3 + $0x51] sm:$0xff] %vm2605, %v2482
        %2663 = vst.msk [vmem:[#allocation3 + $0x61] sm:$0xff] %vm2605, %v2487
        %2664 = vst.msk [vmem:[#allocation3 + $0x69] sm:$0xff] %vm2605, %v2492
        %2665 = vst.msk [vmem:[#allocation3 + $0x79] sm:$0xff] %vm2605, %v2497
        %2666 = vst.msk [vmem:[#allocation3 + $0x81] sm:$0xff] %vm2605, %v2502
        %2667 = vst.msk [vmem:[#allocation3 + $0x91] sm:$0xff] %vm2605, %v2507
        %2668 = vst.msk [vmem:[#allocation3 + $0x99] sm:$0xff] %vm2605, %v2512
        %2669 = vst.msk [vmem:[#allocation3 + $0xa9] sm:$0xff] %vm2605, %v2517
        %2670 = vst.msk [vmem:[#allocation3 + $0xb1] sm:$0xff] %vm2605, %v2522
        %2671 = vst.msk [vmem:[#allocation3 + $0xc1] sm:$0xff] %vm2605, %v2527
        %2672 = vst.msk [vmem:[#allocation3 + $0xc9] sm:$0xff] %vm2605, %v2532
        %2673 = vst.msk [vmem:[#allocation3 + $0xd9] sm:$0xff] %vm2605, %v2537
        %2674 = vst.msk [vmem:[#allocation3 + $0xe1] sm:$0xff] %vm2605, %v2542
        %2675 = vst.msk [vmem:[#allocation3 + $0xf1] sm:$0xff] %vm2605, %v2547
        %2676 = vst.msk [vmem:[#allocation3 + $0xf9] sm:$0xff] %vm2605, %v2552
        %2677 = vst.msk [vmem:[#allocation3 + $0x109] sm:$0xff] %vm2605, %v2557
        %2678 = vst.msk [vmem:[#allocation3 + $0x111] sm:$0xff] %vm2605, %v2562
        %2679 = vst.msk [vmem:[#allocation3 + $0x121] sm:$0xff] %vm2605, %v2567
        %2680 = vst.msk [vmem:[#allocation3 + $0x129] sm:$0xff] %vm2605, %v2572
        %2681 = vst.msk [vmem:[#allocation3 + $0x139] sm:$0xff] %vm2605, %v2577
        %2682 = vst.msk [vmem:[#allocation3 + $0x141] sm:$0xff] %vm2605, %v2582
        %2683 = vst.msk [vmem:[#allocation3 + $0x151] sm:$0xff] %vm2605, %v2587
        %2684 = vst.msk [vmem:[#allocation3 + $0x159] sm:$0xff] %vm2605, %v2592
        %2685 = vst.msk [vmem:[#allocation3 + $0x169] sm:$0xff] %vm2605, %v2597
        %2686 = vst.msk [vmem:[#allocation3 + $0x171] sm:$0xff] %vm2605, %v2602
        %v2687 = vld [vmem:[#allocation3] sm:$0xff]
        %v2688 = vld [vmem:[#allocation3 + $0x8] sm:$0xff]
        %v2689 = vld [vmem:[#allocation3 + $0x18] sm:$0xff]
        %v2690 = vld [vmem:[#allocation3 + $0x20] sm:$0xff]
        %v2691 = vld [vmem:[#allocation3 + $0x30] sm:$0xff]
        %v2692 = vld [vmem:[#allocation3 + $0x38] sm:$0xff]
        %v2693 = vld [vmem:[#allocation3 + $0x48] sm:$0xff]
        %v2694 = vld [vmem:[#allocation3 + $0x50] sm:$0xff]
        %v2695 = vld [vmem:[#allocation3 + $0x60] sm:$0xff]
        %v2696 = vld [vmem:[#allocation3 + $0x68] sm:$0xff]
        %v2697 = vld [vmem:[#allocation3 + $0x78] sm:$0xff]
        %v2698 = vld [vmem:[#allocation3 + $0x80] sm:$0xff]
        %v2699 = vld [vmem:[#allocation3 + $0x90] sm:$0xff]
        %v2700 = vld [vmem:[#allocation3 + $0x98] sm:$0xff]
        %v2701 = vld [vmem:[#allocation3 + $0xa8] sm:$0xff]
        %v2702 = vld [vmem:[#allocation3 + $0xb0] sm:$0xff]
        %v2703 = vld [vmem:[#allocation3 + $0xc0] sm:$0xff]
        %v2704 = vld [vmem:[#allocation3 + $0xc8] sm:$0xff]
        %v2705 = vld [vmem:[#allocation3 + $0xd8] sm:$0xff]
        %v2706 = vld [vmem:[#allocation3 + $0xe0] sm:$0xff]
        %v2707 = vld [vmem:[#allocation3 + $0xf0] sm:$0xff]
        %v2708 = vld [vmem:[#allocation3 + $0xf8] sm:$0xff]
        %v2709 = vld [vmem:[#allocation3 + $0x108] sm:$0xff]
        %v2710 = vld [vmem:[#allocation3 + $0x110] sm:$0xff]
        %v2711 = vld [vmem:[#allocation3 + $0x120] sm:$0xff]
        %v2712 = vld [vmem:[#allocation3 + $0x128] sm:$0xff]
        %v2713 = vld [vmem:[#allocation3 + $0x138] sm:$0xff]
        %v2714 = vld [vmem:[#allocation3 + $0x140] sm:$0xff]
        %v2715 = vld [vmem:[#allocation3 + $0x150] sm:$0xff]
        %v2716 = vld [vmem:[#allocation3 + $0x158] sm:$0xff]
        %v2717 = vld [vmem:[#allocation3 + $0x168] sm:$0xff]
        %v2718 = vld [vmem:[#allocation3 + $0x170] sm:$0xff]
        %v2719 = vld [vmem:[#allocation3 + $0x2] sm:$0xff]
        %v2720 = vld [vmem:[#allocation3 + $0xa] sm:$0xff]
        %v2721 = vld [vmem:[#allocation3 + $0x1a] sm:$0xff]
        %v2722 = vld [vmem:[#allocation3 + $0x22] sm:$0xff]
        %v2723 = vld [vmem:[#allocation3 + $0x32] sm:$0xff]
        %v2724 = vld [vmem:[#allocation3 + $0x3a] sm:$0xff]
        %v2725 = vld [vmem:[#allocation3 + $0x4a] sm:$0xff]
        %v2726 = vld [vmem:[#allocation3 + $0x52] sm:$0xff]
        %v2727 = vld [vmem:[#allocation3 + $0x62] sm:$0xff]
        %v2728 = vld [vmem:[#allocation3 + $0x6a] sm:$0xff]
        %v2729 = vld [vmem:[#allocation3 + $0x7a] sm:$0xff]
        %v2730 = vld [vmem:[#allocation3 + $0x82] sm:$0xff]
        %v2731 = vld [vmem:[#allocation3 + $0x92] sm:$0xff]
        %v2732 = vld [vmem:[#allocation3 + $0x9a] sm:$0xff]
        %v2733 = vld [vmem:[#allocation3 + $0xaa] sm:$0xff]
        %v2734 = vld [vmem:[#allocation3 + $0xb2] sm:$0xff]
        %v2735 = vld [vmem:[#allocation3 + $0xc2] sm:$0xff]
        %v2736 = vld [vmem:[#allocation3 + $0xca] sm:$0xff]
        %v2737 = vld [vmem:[#allocation3 + $0xda] sm:$0xff]
        %v2738 = vld [vmem:[#allocation3 + $0xe2] sm:$0xff]
        %v2739 = vld [vmem:[#allocation3 + $0xf2] sm:$0xff]
        %v2740 = vld [vmem:[#allocation3 + $0xfa] sm:$0xff]
        %v2741 = vld [vmem:[#allocation3 + $0x10a] sm:$0xff]
        %v2742 = vld [vmem:[#allocation3 + $0x112] sm:$0xff]
        %v2743 = vld [vmem:[#allocation3 + $0x122] sm:$0xff]
        %v2744 = vld [vmem:[#allocation3 + $0x12a] sm:$0xff]
        %v2745 = vld [vmem:[#allocation3 + $0x13a] sm:$0xff]
        %v2746 = vld [vmem:[#allocation3 + $0x142] sm:$0xff]
        %v2747 = vld [vmem:[#allocation3 + $0x152] sm:$0xff]
        %v2748 = vld [vmem:[#allocation3 + $0x15a] sm:$0xff]
        %v2749 = vld [vmem:[#allocation3 + $0x16a] sm:$0xff]
        %v2750 = vld [vmem:[#allocation3 + $0x172] sm:$0xff]
        %v2751 = vlaneseq
        %v2752 = vshrl.u32 %v2751, 7
        %v2753 = vadd.s32 %v2752, 8
        %vm2754 = vcmp.eq.s32.totalorder %v2752, 0
        %vm2755 = vcmp.eq.s32.totalorder %v2753, 0
        %v2756 = vsel %vm2754, 1, 0
        %v2757 = vsel %vm2755, 1, 0
        %v2758 = vcvt.s32.f32 %v2756
        %v2759 = vcvt.s32.f32 %v2757
        %vm2760 = vcmp.eq.s32.totalorder %v2752, 15
        %vm2761 = vcmp.eq.s32.totalorder %v2753, 15
        %v2762 = vsel %vm2760, 1, 0
        %v2763 = vsel %vm2761, 1, 0
        %v2764 = vcvt.s32.f32 %v2762
        %v2765 = vcvt.s32.f32 %v2763
        %v2766 = vmul.f32 %v2758, %v2447
        %v2767 = vmul.f32 %v2759, %v2452
        %v2768 = vmul.f32 %v2758, %v2457
        %v2769 = vmul.f32 %v2759, %v2462
        %v2770 = vmul.f32 %v2758, %v2467
        %v2771 = vmul.f32 %v2759, %v2472
        %v2772 = vmul.f32 %v2758, %v2477
        %v2773 = vmul.f32 %v2759, %v2482
        %v2774 = vmul.f32 %v2758, %v2487
        %v2775 = vmul.f32 %v2759, %v2492
        %v2776 = vmul.f32 %v2758, %v2497
        %v2777 = vmul.f32 %v2759, %v2502
        %v2778 = vmul.f32 %v2758, %v2507
        %v2779 = vmul.f32 %v2759, %v2512
        %v2780 = vmul.f32 %v2758, %v2517
        %v2781 = vmul.f32 %v2759, %v2522
        %v2782 = vmul.f32 %v2758, %v2527
        %v2783 = vmul.f32 %v2759, %v2532
        %v2784 = vmul.f32 %v2758, %v2537
        %v2785 = vmul.f32 %v2759, %v2542
        %v2786 = vmul.f32 %v2758, %v2547
        %v2787 = vmul.f32 %v2759, %v2552
        %v2788 = vmul.f32 %v2758, %v2557
        %v2789 = vmul.f32 %v2759, %v2562
        %v2790 = vmul.f32 %v2758, %v2567
        %v2791 = vmul.f32 %v2759, %v2572
        %v2792 = vmul.f32 %v2758, %v2577
        %v2793 = vmul.f32 %v2759, %v2582
        %v2794 = vmul.f32 %v2758, %v2587
        %v2795 = vmul.f32 %v2759, %v2592
        %v2796 = vmul.f32 %v2758, %v2597
        %v2797 = vmul.f32 %v2759, %v2602
        %v2798 = vadd.f32 %v2687, %v2766
        %v2799 = vadd.f32 %v2688, %v2767
        %v2800 = vadd.f32 %v2689, %v2768
        %v2801 = vadd.f32 %v2690, %v2769
        %v2802 = vadd.f32 %v2691, %v2770
        %v2803 = vadd.f32 %v2692, %v2771
        %v2804 = vadd.f32 %v2693, %v2772
        %v2805 = vadd.f32 %v2694, %v2773
        %v2806 = vadd.f32 %v2695, %v2774
        %v2807 = vadd.f32 %v2696, %v2775
        %v2808 = vadd.f32 %v2697, %v2776
        %v2809 = vadd.f32 %v2698, %v2777
        %v2810 = vadd.f32 %v2699, %v2778
        %v2811 = vadd.f32 %v2700, %v2779
        %v2812 = vadd.f32 %v2701, %v2780
        %v2813 = vadd.f32 %v2702, %v2781
        %v2814 = vadd.f32 %v2703, %v2782
        %v2815 = vadd.f32 %v2704, %v2783
        %v2816 = vadd.f32 %v2705, %v2784
        %v2817 = vadd.f32 %v2706, %v2785
        %v2818 = vadd.f32 %v2707, %v2786
        %v2819 = vadd.f32 %v2708, %v2787
        %v2820 = vadd.f32 %v2709, %v2788
        %v2821 = vadd.f32 %v2710, %v2789
        %v2822 = vadd.f32 %v2711, %v2790
        %v2823 = vadd.f32 %v2712, %v2791
        %v2824 = vadd.f32 %v2713, %v2792
        %v2825 = vadd.f32 %v2714, %v2793
        %v2826 = vadd.f32 %v2715, %v2794
        %v2827 = vadd.f32 %v2716, %v2795
        %v2828 = vadd.f32 %v2717, %v2796
        %v2829 = vadd.f32 %v2718, %v2797
        %v2830 = vmul.f32 %v2764, %v2447
        %v2831 = vmul.f32 %v2765, %v2452
        %v2832 = vmul.f32 %v2764, %v2457
        %v2833 = vmul.f32 %v2765, %v2462
        %v2834 = vmul.f32 %v2764, %v2467
        %v2835 = vmul.f32 %v2765, %v2472
        %v2836 = vmul.f32 %v2764, %v2477
        %v2837 = vmul.f32 %v2765, %v2482
        %v2838 = vmul.f32 %v2764, %v2487
        %v2839 = vmul.f32 %v2765, %v2492
        %v2840 = vmul.f32 %v2764, %v2497
        %v2841 = vmul.f32 %v2765, %v2502
        %v2842 = vmul.f32 %v2764, %v2507
        %v2843 = vmul.f32 %v2765, %v2512
        %v2844 = vmul.f32 %v2764, %v2517
        %v2845 = vmul.f32 %v2765, %v2522
        %v2846 = vmul.f32 %v2764, %v2527
        %v2847 = vmul.f32 %v2765, %v2532
        %v2848 = vmul.f32 %v2764, %v2537
        %v2849 = vmul.f32 %v2765, %v2542
        %v2850 = vmul.f32 %v2764, %v2547
        %v2851 = vmul.f32 %v2765, %v2552
        %v2852 = vmul.f32 %v2764, %v2557
        %v2853 = vmul.f32 %v2765, %v2562
        %v2854 = vmul.f32 %v2764, %v2567
        %v2855 = vmul.f32 %v2765, %v2572
        %v2856 = vmul.f32 %v2764, %v2577
        %v2857 = vmul.f32 %v2765, %v2582
        %v2858 = vmul.f32 %v2764, %v2587
        %v2859 = vmul.f32 %v2765, %v2592
        %v2860 = vmul.f32 %v2764, %v2597
        %v2861 = vmul.f32 %v2765, %v2602
        %v2862 = vadd.f32 %v2719, %v2830
        %v2863 = vadd.f32 %v2720, %v2831
        %v2864 = vadd.f32 %v2721, %v2832
        %v2865 = vadd.f32 %v2722, %v2833
        %v2866 = vadd.f32 %v2723, %v2834
        %v2867 = vadd.f32 %v2724, %v2835
        %v2868 = vadd.f32 %v2725, %v2836
        %v2869 = vadd.f32 %v2726, %v2837
        %v2870 = vadd.f32 %v2727, %v2838
        %v2871 = vadd.f32 %v2728, %v2839
        %v2872 = vadd.f32 %v2729, %v2840
        %v2873 = vadd.f32 %v2730, %v2841
        %v2874 = vadd.f32 %v2731, %v2842
        %v2875 = vadd.f32 %v2732, %v2843
        %v2876 = vadd.f32 %v2733, %v2844
        %v2877 = vadd.f32 %v2734, %v2845
        %v2878 = vadd.f32 %v2735, %v2846
        %v2879 = vadd.f32 %v2736, %v2847
        %v2880 = vadd.f32 %v2737, %v2848
        %v2881 = vadd.f32 %v2738, %v2849
        %v2882 = vadd.f32 %v2739, %v2850
        %v2883 = vadd.f32 %v2740, %v2851
        %v2884 = vadd.f32 %v2741, %v2852
        %v2885 = vadd.f32 %v2742, %v2853
        %v2886 = vadd.f32 %v2743, %v2854
        %v2887 = vadd.f32 %v2744, %v2855
        %v2888 = vadd.f32 %v2745, %v2856
        %v2889 = vadd.f32 %v2746, %v2857
        %v2890 = vadd.f32 %v2747, %v2858
        %v2891 = vadd.f32 %v2748, %v2859
        %v2892 = vadd.f32 %v2749, %v2860
        %v2893 = vadd.f32 %v2750, %v2861
        %v2894 = vmul.f32 %v2798, 0.25
        %v2895 = vmul.f32 %v2799, 0.25
        %v2896 = vmul.f32 %v2800, 0.25
        %v2897 = vmul.f32 %v2801, 0.25
        %v2898 = vmul.f32 %v2802, 0.25
        %v2899 = vmul.f32 %v2803, 0.25
        %v2900 = vmul.f32 %v2804, 0.25
        %v2901 = vmul.f32 %v2805, 0.25
        %v2902 = vmul.f32 %v2806, 0.25
        %v2903 = vmul.f32 %v2807, 0.25
        %v2904 = vmul.f32 %v2808, 0.25
        %v2905 = vmul.f32 %v2809, 0.25
        %v2906 = vmul.f32 %v2810, 0.25
        %v2907 = vmul.f32 %v2811, 0.25
        %v2908 = vmul.f32 %v2812, 0.25
        %v2909 = vmul.f32 %v2813, 0.25
        %v2910 = vmul.f32 %v2814, 0.25
        %v2911 = vmul.f32 %v2815, 0.25
        %v2912 = vmul.f32 %v2816, 0.25
        %v2913 = vmul.f32 %v2817, 0.25
        %v2914 = vmul.f32 %v2818, 0.25
        %v2915 = vmul.f32 %v2819, 0.25
        %v2916 = vmul.f32 %v2820, 0.25
        %v2917 = vmul.f32 %v2821, 0.25
        %v2918 = vmul.f32 %v2822, 0.25
        %v2919 = vmul.f32 %v2823, 0.25
        %v2920 = vmul.f32 %v2824, 0.25
        %v2921 = vmul.f32 %v2825, 0.25
        %v2922 = vmul.f32 %v2826, 0.25
        %v2923 = vmul.f32 %v2827, 0.25
        %v2924 = vmul.f32 %v2828, 0.25
        %v2925 = vmul.f32 %v2829, 0.25
        %v2926 = vmul.f32 %v2447, 0.75
        %v2927 = vmul.f32 %v2452, 0.75
        %v2928 = vmul.f32 %v2457, 0.75
        %v2929 = vmul.f32 %v2462, 0.75
        %v2930 = vmul.f32 %v2467, 0.75
        %v2931 = vmul.f32 %v2472, 0.75
        %v2932 = vmul.f32 %v2477, 0.75
        %v2933 = vmul.f32 %v2482, 0.75
        %v2934 = vmul.f32 %v2487, 0.75
        %v2935 = vmul.f32 %v2492, 0.75
        %v2936 = vmul.f32 %v2497, 0.75
        %v2937 = vmul.f32 %v2502, 0.75
        %v2938 = vmul.f32 %v2507, 0.75
        %v2939 = vmul.f32 %v2512, 0.75
        %v2940 = vmul.f32 %v2517, 0.75
        %v2941 = vmul.f32 %v2522, 0.75
        %v2942 = vmul.f32 %v2527, 0.75
        %v2943 = vmul.f32 %v2532, 0.75
        %v2944 = vmul.f32 %v2537, 0.75
        %v2945 = vmul.f32 %v2542, 0.75
        %v2946 = vmul.f32 %v2547, 0.75
        %v2947 = vmul.f32 %v2552, 0.75
        %v2948 = vmul.f32 %v2557, 0.75
        %v2949 = vmul.f32 %v2562, 0.75
        %v2950 = vmul.f32 %v2567, 0.75
        %v2951 = vmul.f32 %v2572, 0.75
        %v2952 = vmul.f32 %v2577, 0.75
        %v2953 = vmul.f32 %v2582, 0.75
        %v2954 = vmul.f32 %v2587, 0.75
        %v2955 = vmul.f32 %v2592, 0.75
        %v2956 = vmul.f32 %v2597, 0.75
        %v2957 = vmul.f32 %v2602, 0.75
        %v2958 = vadd.f32 %v2894, %v2926
        %v2959 = vadd.f32 %v2895, %v2927
        %v2960 = vadd.f32 %v2896, %v2928
        %v2961 = vadd.f32 %v2897, %v2929
        %v2962 = vadd.f32 %v2898, %v2930
        %v2963 = vadd.f32 %v2899, %v2931
        %v2964 = vadd.f32 %v2900, %v2932
        %v2965 = vadd.f32 %v2901, %v2933
        %v2966 = vadd.f32 %v2902, %v2934
        %v2967 = vadd.f32 %v2903, %v2935
        %v2968 = vadd.f32 %v2904, %v2936
        %v2969 = vadd.f32 %v2905, %v2937
        %v2970 = vadd.f32 %v2906, %v2938
        %v2971 = vadd.f32 %v2907, %v2939
        %v2972 = vadd.f32 %v2908, %v2940
        %v2973 = vadd.f32 %v2909, %v2941
        %v2974 = vadd.f32 %v2910, %v2942
        %v2975 = vadd.f32 %v2911, %v2943
        %v2976 = vadd.f32 %v2912, %v2944
        %v2977 = vadd.f32 %v2913, %v2945
        %v2978 = vadd.f32 %v2914, %v2946
        %v2979 = vadd.f32 %v2915, %v2947
        %v2980 = vadd.f32 %v2916, %v2948
        %v2981 = vadd.f32 %v2917, %v2949
        %v2982 = vadd.f32 %v2918, %v2950
        %v2983 = vadd.f32 %v2919, %v2951
        %v2984 = vadd.f32 %v2920, %v2952
        %v2985 = vadd.f32 %v2921, %v2953
        %v2986 = vadd.f32 %v2922, %v2954
        %v2987 = vadd.f32 %v2923, %v2955
        %v2988 = vadd.f32 %v2924, %v2956
        %v2989 = vadd.f32 %v2925, %v2957
        %v2990 = vmul.f32 %v2862, 0.25
        %v2991 = vmul.f32 %v2863, 0.25
        %v2992 = vmul.f32 %v2864, 0.25
        %v2993 = vmul.f32 %v2865, 0.25
        %v2994 = vmul.f32 %v2866, 0.25
        %v2995 = vmul.f32 %v2867, 0.25
        %v2996 = vmul.f32 %v2868, 0.25
        %v2997 = vmul.f32 %v2869, 0.25
        %v2998 = vmul.f32 %v2870, 0.25
        %v2999 = vmul.f32 %v2871, 0.25
        %v3000 = vmul.f32 %v2872, 0.25
        %v3001 = vmul.f32 %v2873, 0.25
        %v3002 = vmul.f32 %v2874, 0.25
        %v3003 = vmul.f32 %v2875, 0.25
        %v3004 = vmul.f32 %v2876, 0.25
        %v3005 = vmul.f32 %v2877, 0.25
        %v3006 = vmul.f32 %v2878, 0.25
        %v3007 = vmul.f32 %v2879, 0.25
        %v3008 = vmul.f32 %v2880, 0.25
        %v3009 = vmul.f32 %v2881, 0.25
        %v3010 = vmul.f32 %v2882, 0.25
        %v3011 = vmul.f32 %v2883, 0.25
        %v3012 = vmul.f32 %v2884, 0.25
        %v3013 = vmul.f32 %v2885, 0.25
        %v3014 = vmul.f32 %v2886, 0.25
        %v3015 = vmul.f32 %v2887, 0.25
        %v3016 = vmul.f32 %v2888, 0.25
        %v3017 = vmul.f32 %v2889, 0.25
        %v3018 = vmul.f32 %v2890, 0.25
        %v3019 = vmul.f32 %v2891, 0.25
        %v3020 = vmul.f32 %v2892, 0.25
        %v3021 = vmul.f32 %v2893, 0.25
        %v3022 = vadd.f32 %v2926, %v2990
        %v3023 = vadd.f32 %v2927, %v2991
        %v3024 = vadd.f32 %v2928, %v2992
        %v3025 = vadd.f32 %v2929, %v2993
        %v3026 = vadd.f32 %v2930, %v2994
        %v3027 = vadd.f32 %v2931, %v2995
        %v3028 = vadd.f32 %v2932, %v2996
        %v3029 = vadd.f32 %v2933, %v2997
        %v3030 = vadd.f32 %v2934, %v2998
        %v3031 = vadd.f32 %v2935, %v2999
        %v3032 = vadd.f32 %v2936, %v3000
        %v3033 = vadd.f32 %v2937, %v3001
        %v3034 = vadd.f32 %v2938, %v3002
        %v3035 = vadd.f32 %v2939, %v3003
        %v3036 = vadd.f32 %v2940, %v3004
        %v3037 = vadd.f32 %v2941, %v3005
        %v3038 = vadd.f32 %v2942, %v3006
        %v3039 = vadd.f32 %v2943, %v3007
        %v3040 = vadd.f32 %v2944, %v3008
        %v3041 = vadd.f32 %v2945, %v3009
        %v3042 = vadd.f32 %v2946, %v3010
        %v3043 = vadd.f32 %v2947, %v3011
        %v3044 = vadd.f32 %v2948, %v3012
        %v3045 = vadd.f32 %v2949, %v3013
        %v3046 = vadd.f32 %v2950, %v3014
        %v3047 = vadd.f32 %v2951, %v3015
        %v3048 = vadd.f32 %v2952, %v3016
        %v3049 = vadd.f32 %v2953, %v3017
        %v3050 = vadd.f32 %v2954, %v3018
        %v3051 = vadd.f32 %v2955, %v3019
        %v3052 = vadd.f32 %v2956, %v3020
        %v3053 = vadd.f32 %v2957, %v3021
        %v3054 = vmul.f32 %v2958, 0.25
        %v3055 = vmul.f32 %v2959, 0.25
        %v3056 = vmul.f32 %v2960, 0.25
        %v3057 = vmul.f32 %v2961, 0.25
        %v3058 = vmul.f32 %v2962, 0.25
        %v3059 = vmul.f32 %v2963, 0.25
        %v3060 = vmul.f32 %v2964, 0.25
        %v3061 = vmul.f32 %v2965, 0.25
        %v3062 = vmul.f32 %v2966, 0.25
        %v3063 = vmul.f32 %v2967, 0.25
        %v3064 = vmul.f32 %v2968, 0.25
        %v3065 = vmul.f32 %v2969, 0.25
        %v3066 = vmul.f32 %v2970, 0.25
        %v3067 = vmul.f32 %v2971, 0.25
        %v3068 = vmul.f32 %v2972, 0.25
        %v3069 = vmul.f32 %v2973, 0.25
        %v3070 = vmul.f32 %v2974, 0.25
        %v3071 = vmul.f32 %v2975, 0.25
        %v3072 = vmul.f32 %v2976, 0.25
        %v3073 = vmul.f32 %v2977, 0.25
        %v3074 = vmul.f32 %v2978, 0.25
        %v3075 = vmul.f32 %v2979, 0.25
        %v3076 = vmul.f32 %v2980, 0.25
        %v3077 = vmul.f32 %v2981, 0.25
        %v3078 = vmul.f32 %v2982, 0.25
        %v3079 = vmul.f32 %v2983, 0.25
        %v3080 = vmul.f32 %v2984, 0.25
        %v3081 = vmul.f32 %v2985, 0.25
        %v3082 = vmul.f32 %v2986, 0.25
        %v3083 = vmul.f32 %v2987, 0.25
        %v3084 = vmul.f32 %v2958, 0.75
        %v3085 = vmul.f32 %v2959, 0.75
        %v3086 = vmul.f32 %v2960, 0.75
        %v3087 = vmul.f32 %v2961, 0.75
        %v3088 = vmul.f32 %v2962, 0.75
        %v3089 = vmul.f32 %v2963, 0.75
        %v3090 = vmul.f32 %v2964, 0.75
        %v3091 = vmul.f32 %v2965, 0.75
        %v3092 = vmul.f32 %v2966, 0.75
        %v3093 = vmul.f32 %v2967, 0.75
        %v3094 = vmul.f32 %v2968, 0.75
        %v3095 = vmul.f32 %v2969, 0.75
        %v3096 = vmul.f32 %v2970, 0.75
        %v3097 = vmul.f32 %v2971, 0.75
        %v3098 = vmul.f32 %v2972, 0.75
        %v3099 = vmul.f32 %v2973, 0.75
        %v3100 = vmul.f32 %v2974, 0.75
        %v3101 = vmul.f32 %v2975, 0.75
        %v3102 = vmul.f32 %v2976, 0.75
        %v3103 = vmul.f32 %v2977, 0.75
        %v3104 = vmul.f32 %v2978, 0.75
        %v3105 = vmul.f32 %v2979, 0.75
        %v3106 = vmul.f32 %v2980, 0.75
        %v3107 = vmul.f32 %v2981, 0.75
        %v3108 = vmul.f32 %v2982, 0.75
        %v3109 = vmul.f32 %v2983, 0.75
        %v3110 = vmul.f32 %v2984, 0.75
        %v3111 = vmul.f32 %v2985, 0.75
        %v3112 = vmul.f32 %v2986, 0.75
        %v3113 = vmul.f32 %v2987, 0.75
        %v3114 = vmul.f32 %v2988, 0.75
        %v3115 = vmul.f32 %v2989, 0.75
        %v3116 = vadd.f32 %v3054, %v3084
        %v3117 = vadd.f32 %v3055, %v3085
        %v3118 = vadd.f32 %v3054, %v3086
        %v3119 = vadd.f32 %v3055, %v3087
        %v3120 = vadd.f32 %v3056, %v3088
        %v3121 = vadd.f32 %v3057, %v3089
        %v3122 = vadd.f32 %v3058, %v3090
        %v3123 = vadd.f32 %v3059, %v3091
        %v3124 = vadd.f32 %v3060, %v3092
        %v3125 = vadd.f32 %v3061, %v3093
        %v3126 = vadd.f32 %v3062, %v3094
        %v3127 = vadd.f32 %v3063, %v3095
        %v3128 = vadd.f32 %v3064, %v3096
        %v3129 = vadd.f32 %v3065, %v3097
        %v3130 = vadd.f32 %v3066, %v3098
        %v3131 = vadd.f32 %v3067, %v3099
        %v3132 = vadd.f32 %v3068, %v3100
        %v3133 = vadd.f32 %v3069, %v3101
        %v3134 = vadd.f32 %v3070, %v3102
        %v3135 = vadd.f32 %v3071, %v3103
        %v3136 = vadd.f32 %v3072, %v3104
        %v3137 = vadd.f32 %v3073, %v3105
        %v3138 = vadd.f32 %v3074, %v3106
        %v3139 = vadd.f32 %v3075, %v3107
        %v3140 = vadd.f32 %v3076, %v3108
        %v3141 = vadd.f32 %v3077, %v3109
        %v3142 = vadd.f32 %v3078, %v3110
        %v3143 = vadd.f32 %v3079, %v3111
        %v3144 = vadd.f32 %v3080, %v3112
        %v3145 = vadd.f32 %v3081, %v3113
        %v3146 = vadd.f32 %v3082, %v3114
        %v3147 = vadd.f32 %v3083, %v3115
        %v3148 = vmul.f32 %v3022, 0.25
        %v3149 = vmul.f32 %v3023, 0.25
        %v3150 = vmul.f32 %v3024, 0.25
        %v3151 = vmul.f32 %v3025, 0.25
        %v3152 = vmul.f32 %v3026, 0.25
        %v3153 = vmul.f32 %v3027, 0.25
        %v3154 = vmul.f32 %v3028, 0.25
        %v3155 = vmul.f32 %v3029, 0.25
        %v3156 = vmul.f32 %v3030, 0.25
        %v3157 = vmul.f32 %v3031, 0.25
        %v3158 = vmul.f32 %v3032, 0.25
        %v3159 = vmul.f32 %v3033, 0.25
        %v3160 = vmul.f32 %v3034, 0.25
        %v3161 = vmul.f32 %v3035, 0.25
        %v3162 = vmul.f32 %v3036, 0.25
        %v3163 = vmul.f32 %v3037, 0.25
        %v3164 = vmul.f32 %v3038, 0.25
        %v3165 = vmul.f32 %v3039, 0.25
        %v3166 = vmul.f32 %v3040, 0.25
        %v3167 = vmul.f32 %v3041, 0.25
        %v3168 = vmul.f32 %v3042, 0.25
        %v3169 = vmul.f32 %v3043, 0.25
        %v3170 = vmul.f32 %v3044, 0.25
        %v3171 = vmul.f32 %v3045, 0.25
        %v3172 = vmul.f32 %v3046, 0.25
        %v3173 = vmul.f32 %v3047, 0.25
        %v3174 = vmul.f32 %v3048, 0.25
        %v3175 = vmul.f32 %v3049, 0.25
        %v3176 = vmul.f32 %v3050, 0.25
        %v3177 = vmul.f32 %v3051, 0.25
        %v3178 = vmul.f32 %v3022, 0.75
        %v3179 = vmul.f32 %v3023, 0.75
        %v3180 = vmul.f32 %v3024, 0.75
        %v3181 = vmul.f32 %v3025, 0.75
        %v3182 = vmul.f32 %v3026, 0.75
        %v3183 = vmul.f32 %v3027, 0.75
        %v3184 = vmul.f32 %v3028, 0.75
        %v3185 = vmul.f32 %v3029, 0.75
        %v3186 = vmul.f32 %v3030, 0.75
        %v3187 = vmul.f32 %v3031, 0.75
        %v3188 = vmul.f32 %v3032, 0.75
        %v3189 = vmul.f32 %v3033, 0.75
        %v3190 = vmul.f32 %v3034, 0.75
        %v3191 = vmul.f32 %v3035, 0.75
        %v3192 = vmul.f32 %v3036, 0.75
        %v3193 = vmul.f32 %v3037, 0.75
        %v3194 = vmul.f32 %v3038, 0.75
        %v3195 = vmul.f32 %v3039, 0.75
        %v3196 = vmul.f32 %v3040, 0.75
        %v3197 = vmul.f32 %v3041, 0.75
        %v3198 = vmul.f32 %v3042, 0.75
        %v3199 = vmul.f32 %v3043, 0.75
        %v3200 = vmul.f32 %v3044, 0.75
        %v3201 = vmul.f32 %v3045, 0.75
        %v3202 = vmul.f32 %v3046, 0.75
        %v3203 = vmul.f32 %v3047, 0.75
        %v3204 = vmul.f32 %v3048, 0.75
        %v3205 = vmul.f32 %v3049, 0.75
        %v3206 = vmul.f32 %v3050, 0.75
        %v3207 = vmul.f32 %v3051, 0.75
        %v3208 = vmul.f32 %v3052, 0.75
        %v3209 = vmul.f32 %v3053, 0.75
        %v3210 = vadd.f32 %v3148, %v3178
        %v3211 = vadd.f32 %v3149, %v3179
        %v3212 = vadd.f32 %v3148, %v3180
        %v3213 = vadd.f32 %v3149, %v3181
        %v3214 = vadd.f32 %v3150, %v3182
        %v3215 = vadd.f32 %v3151, %v3183
        %v3216 = vadd.f32 %v3152, %v3184
        %v3217 = vadd.f32 %v3153, %v3185
        %v3218 = vadd.f32 %v3154, %v3186
        %v3219 = vadd.f32 %v3155, %v3187
        %v3220 = vadd.f32 %v3156, %v3188
        %v3221 = vadd.f32 %v3157, %v3189
        %v3222 = vadd.f32 %v3158, %v3190
        %v3223 = vadd.f32 %v3159, %v3191
        %v3224 = vadd.f32 %v3160, %v3192
        %v3225 = vadd.f32 %v3161, %v3193
        %v3226 = vadd.f32 %v3162, %v3194
        %v3227 = vadd.f32 %v3163, %v3195
        %v3228 = vadd.f32 %v3164, %v3196
        %v3229 = vadd.f32 %v3165, %v3197
        %v3230 = vadd.f32 %v3166, %v3198
        %v3231 = vadd.f32 %v3167, %v3199
        %v3232 = vadd.f32 %v3168, %v3200
        %v3233 = vadd.f32 %v3169, %v3201
        %v3234 = vadd.f32 %v3170, %v3202
        %v3235 = vadd.f32 %v3171, %v3203
        %v3236 = vadd.f32 %v3172, %v3204
        %v3237 = vadd.f32 %v3173, %v3205
        %v3238 = vadd.f32 %v3174, %v3206
        %v3239 = vadd.f32 %v3175, %v3207
        %v3240 = vadd.f32 %v3176, %v3208
        %v3241 = vadd.f32 %v3177, %v3209
        %v3242 = vmul.f32 %v2988, 0.25
        %v3243 = vmul.f32 %v2989, 0.25
        %v3244 = vadd.f32 %v3084, %v3056
        %v3245 = vadd.f32 %v3085, %v3057
        %v3246 = vadd.f32 %v3086, %v3058
        %v3247 = vadd.f32 %v3087, %v3059
        %v3248 = vadd.f32 %v3088, %v3060
        %v3249 = vadd.f32 %v3089, %v3061
        %v3250 = vadd.f32 %v3090, %v3062
        %v3251 = vadd.f32 %v3091, %v3063
        %v3252 = vadd.f32 %v3092, %v3064
        %v3253 = vadd.f32 %v3093, %v3065
        %v3254 = vadd.f32 %v3094, %v3066
        %v3255 = vadd.f32 %v3095, %v3067
        %v3256 = vadd.f32 %v3096, %v3068
        %v3257 = vadd.f32 %v3097, %v3069
        %v3258 = vadd.f32 %v3098, %v3070
        %v3259 = vadd.f32 %v3099, %v3071
        %v3260 = vadd.f32 %v3100, %v3072
        %v3261 = vadd.f32 %v3101, %v3073
        %v3262 = vadd.f32 %v3102, %v3074
        %v3263 = vadd.f32 %v3103, %v3075
        %v3264 = vadd.f32 %v3104, %v3076
        %v3265 = vadd.f32 %v3105, %v3077
        %v3266 = vadd.f32 %v3106, %v3078
        %v3267 = vadd.f32 %v3107, %v3079
        %v3268 = vadd.f32 %v3108, %v3080
        %v3269 = vadd.f32 %v3109, %v3081
        %v3270 = vadd.f32 %v3110, %v3082
        %v3271 = vadd.f32 %v3111, %v3083
        %v3272 = vadd.f32 %v3112, %v3242
        %v3273 = vadd.f32 %v3113, %v3243
        %v3274 = vadd.f32 %v3114, %v3242
        %v3275 = vadd.f32 %v3115, %v3243
        %v3276 = vmul.f32 %v3052, 0.25
        %v3277 = vmul.f32 %v3053, 0.25
        %v3278 = vadd.f32 %v3178, %v3150
        %v3279 = vadd.f32 %v3179, %v3151
        %v3280 = vadd.f32 %v3180, %v3152
        %v3281 = vadd.f32 %v3181, %v3153
        %v3282 = vadd.f32 %v3182, %v3154
        %v3283 = vadd.f32 %v3183, %v3155
        %v3284 = vadd.f32 %v3184, %v3156
        %v3285 = vadd.f32 %v3185, %v3157
        %v3286 = vadd.f32 %v3186, %v3158
        %v3287 = vadd.f32 %v3187, %v3159
        %v3288 = vadd.f32 %v3188, %v3160
        %v3289 = vadd.f32 %v3189, %v3161
        %v3290 = vadd.f32 %v3190, %v3162
        %v3291 = vadd.f32 %v3191, %v3163
        %v3292 = vadd.f32 %v3192, %v3164
        %v3293 = vadd.f32 %v3193, %v3165
        %v3294 = vadd.f32 %v3194, %v3166
        %v3295 = vadd.f32 %v3195, %v3167
        %v3296 = vadd.f32 %v3196, %v3168
        %v3297 = vadd.f32 %v3197, %v3169
        %v3298 = vadd.f32 %v3198, %v3170
        %v3299 = vadd.f32 %v3199, %v3171
        %v3300 = vadd.f32 %v3200, %v3172
        %v3301 = vadd.f32 %v3201, %v3173
        %v3302 = vadd.f32 %v3202, %v3174
        %v3303 = vadd.f32 %v3203, %v3175
        %v3304 = vadd.f32 %v3204, %v3176
        %v3305 = vadd.f32 %v3205, %v3177
        %v3306 = vadd.f32 %v3206, %v3276
        %v3307 = vadd.f32 %v3207, %v3277
        %v3308 = vadd.f32 %v3208, %v3276
        %v3309 = vadd.f32 %v3209, %v3277
        %v3310 = vld [vmem:[%s3] sm:$0xff]
        %v3311 = vld [vmem:[%s3 + $0x8] sm:$0xff]
        %v3312 = vld [vmem:[%s3 + $0x10] sm:$0xff]
        %v3313 = vld [vmem:[%s3 + $0x18] sm:$0xff]
        %v3314 = vld [vmem:[%s3 + $0x20] sm:$0xff]
        %v3315 = vld [vmem:[%s3 + $0x28] sm:$0xff]
        %v3316 = vld [vmem:[%s3 + $0x30] sm:$0xff]
        %v3317 = vld [vmem:[%s3 + $0x38] sm:$0xff]
        %vm3318 = vcmask 523264
        %v3320 = vsel %vm3318, %v2346, 0
        %v3323 = vsel %vm3318, %v2347, 0
        %v3326 = vsel %vm3318, %v2348, 0
        %v3329 = vsel %vm3318, %v2349, 0
        %v3332 = vsel %vm3318, %v2350, 0
        %v3335 = vsel %vm3318, %v2351, 0
        %v3338 = vsel %vm3318, %v2352, 0
        %v3341 = vsel %vm3318, %v2353, 0
        %v3344 = vsel %vm3318, %v2354, 0
        %v3347 = vsel %vm3318, %v2355, 0
        %v3350 = vsel %vm3318, %v2356, 0
        %v3353 = vsel %vm3318, %v2357, 0
        %v3356 = vsel %vm3318, %v2358, 0
        %v3359 = vsel %vm3318, %v2359, 0
        %v3362 = vsel %vm3318, %v2360, 0
        %v3365 = vsel %vm3318, %v2361, 0
        %v3368 = vsel %vm3318, %v2362, 0
        %v3371 = vsel %vm3318, %v2363, 0
        %v3374 = vsel %vm3318, %v2364, 0
        %v3377 = vsel %vm3318, %v2365, 0
        %v3380 = vsel %vm3318, %v2366, 0
        %v3383 = vsel %vm3318, %v2367, 0
        %v3386 = vsel %vm3318, %v2368, 0
        %v3389 = vsel %vm3318, %v2369, 0
        %v3392 = vsel %vm3318, %v2370, 0
        %v3395 = vsel %vm3318, %v2371, 0
        %v3398 = vsel %vm3318, %v2372, 0
        %v3401 = vsel %vm3318, %v2373, 0
        %v3404 = vsel %vm3318, %v2374, 0
        %v3407 = vsel %vm3318, %v2375, 0
        %v3410 = vsel %vm3318, %v2376, 0
        %v3413 = vsel %vm3318, %v2377, 0
        %3415 = vmatprep.subr.mxu0 0.0
        %3416 = vmatpush1.msra.mxu0 0.0
        %3417 = vmatprep.subr.mxu0 0.0
        %3418 = vmatpush1.msra.mxu0 0.0
        %3419 = vmatprep.subr.mxu0 0.0
        %3420 = vmatpush1.msra.mxu0 0.0
        %3421 = vmatprep.subr.mxu0 0.0
        %3422 = vmatpush1.msra.mxu0 0.0
        %3423 = vmatprep.subr.mxu0 0.0
        %3424 = vmatpush1.msra.mxu0 0.0
        %3425 = vmatprep.subr.mxu0 0.0
        %3426 = vmatpush1.msra.mxu0 0.0
        %3427 = vmatprep.subr.mxu0 0.0
        %3428 = vmatpush1.msra.mxu0 0.0
        %3429 = vmatprep.subr.mxu0 0.0
        %3430 = vmatpush1.msra.mxu0 0.0
        %3431 = vmatprep.subr.mxu0 0.0
        %3432 = vmatpush1.msra.mxu0 %v3317
        %3433 = vmatprep.subr.mxu0 0.0
        %3434 = vmatpush1.msra.mxu0 %v3316
        %3435 = vmatprep.subr.mxu0 0.0
        %3436 = vmatpush1.msra.mxu0 %v3315
        %3437 = vmatprep.subr.mxu0 0.0
        %3438 = vmatpush1.msra.mxu0 %v3314
        %3439 = vmatprep.subr.mxu0 0.0
        %3440 = vmatpush1.msra.mxu0 %v3313
        %3441 = vmatprep.subr.mxu0 0.0
        %3442 = vmatpush1.msra.mxu0 %v3312
        %3443 = vmatprep.subr.mxu0 0.0
        %3444 = vmatpush1.msra.mxu0 %v3311
        %3445 = vmatprep.subr.mxu0 0.0
        %3446 = vmatpush1.msra.mxu0 %v3310
        %3447 = vmatprep.subr.mxu0 0.0
        %3448 = vmatpush2.msra.mxu0 0.0
        %3449 = vmatprep.subr.mxu0 0.0
        %3450 = vmatpush2.msra.mxu0 0.0
        %3451 = vmatprep.subr.mxu0 0.0
        %3452 = vmatpush2.msra.mxu0 0.0
        %3453 = vmatprep.subr.mxu0 0.0
        %3454 = vmatpush2.msra.mxu0 0.0
        %3455 = vmatprep.subr.mxu0 0.0
        %3456 = vmatpush2.msra.mxu0 0.0
        %3457 = vmatprep.subr.mxu0 0.0
        %3458 = vmatpush2.msra.mxu0 0.0
        %3459 = vmatprep.subr.mxu0 0.0
        %3460 = vmatpush2.msra.mxu0 0.0
        %3461 = vmatprep.subr.mxu0 0.0
        %3462 = vmatpush2.msra.mxu0 0.0
        %3463 = vmatprep.subr.mxu0 0.0
        %3464 = vmatpush2.msra.mxu0 0.0
        %3465 = vmatprep.subr.mxu0 0.0
        %3466 = vmatpush2.msra.mxu0 0.0
        %3467 = vmatprep.subr.mxu0 0.0
        %3468 = vmatpush2.msra.mxu0 0.0
        %3469 = vmatprep.subr.mxu0 0.0
        %3470 = vmatpush2.msra.mxu0 0.0
        %3471 = vmatprep.subr.mxu0 0.0
        %3472 = vmatpush2.msra.mxu0 0.0
        %3473 = vmatprep.subr.mxu0 0.0
        %3474 = vmatpush2.msra.mxu0 0.0
        %3475 = vmatprep.subr.mxu0 0.0
        %3476 = vmatpush2.msra.mxu0 0.0
        %3477 = vmatprep.subr.mxu0 0.0
        %3478 = vmatpush2.msra.mxu0 0.0
        %3479 = vmatprep.mubr.f32.mxu0 0.0
        %3480 = vmatmul.mubr.f32.gmra.mxu0 %v3320
        %v3481 = vpop.f32.mrf.mxu0
        %v3482 = vadd.f32 %v3116, %v3481
        %v3483 = vpop.f32.mrf.mxu0
        %3484 = vmatprep.mubr.f32.mxu0 0.0
        %3485 = vmatmul.mubr.f32.gmra.mxu0 %v3323
        %v3486 = vpop.f32.mrf.mxu0
        %v3487 = vadd.f32 %v3117, %v3486
        %v3488 = vpop.f32.mrf.mxu0
        %3489 = vmatprep.mubr.f32.mxu0 0.0
        %3490 = vmatmul.mubr.f32.gmra.mxu0 %v3326
        %v3491 = vpop.f32.mrf.mxu0
        %v3492 = vadd.f32 %v3118, %v3491
        %v3493 = vpop.f32.mrf.mxu0
        %3494 = vmatprep.mubr.f32.mxu0 0.0
        %3495 = vmatmul.mubr.f32.gmra.mxu0 %v3329
        %v3496 = vpop.f32.mrf.mxu0
        %v3497 = vadd.f32 %v3119, %v3496
        %v3498 = vpop.f32.mrf.mxu0
        %3499 = vmatprep.mubr.f32.mxu0 0.0
        %3500 = vmatmul.mubr.f32.gmra.mxu0 %v3332
        %v3501 = vpop.f32.mrf.mxu0
        %v3502 = vadd.f32 %v3120, %v3501
        %v3503 = vpop.f32.mrf.mxu0
        %3504 = vmatprep.mubr.f32.mxu0 0.0
        %3505 = vmatmul.mubr.f32.gmra.mxu0 %v3335
        %v3506 = vpop.f32.mrf.mxu0
        %v3507 = vadd.f32 %v3121, %v3506
        %v3508 = vpop.f32.mrf.mxu0
        %3509 = vmatprep.mubr.f32.mxu0 0.0
        %3510 = vmatmul.mubr.f32.gmra.mxu0 %v3338
        %v3511 = vpop.f32.mrf.mxu0
        %v3512 = vadd.f32 %v3122, %v3511
        %v3513 = vpop.f32.mrf.mxu0
        %3514 = vmatprep.mubr.f32.mxu0 0.0
        %3515 = vmatmul.mubr.f32.gmra.mxu0 %v3341
        %v3516 = vpop.f32.mrf.mxu0
        %v3517 = vadd.f32 %v3123, %v3516
        %v3518 = vpop.f32.mrf.mxu0
        %3519 = vmatprep.mubr.f32.mxu0 0.0
        %3520 = vmatmul.mubr.f32.gmra.mxu0 %v3344
        %v3521 = vpop.f32.mrf.mxu0
        %v3522 = vadd.f32 %v3124, %v3521
        %v3523 = vpop.f32.mrf.mxu0
        %3524 = vmatprep.mubr.f32.mxu0 0.0
        %3525 = vmatmul.mubr.f32.gmra.mxu0 %v3347
        %v3526 = vpop.f32.mrf.mxu0
        %v3527 = vadd.f32 %v3125, %v3526
        %v3528 = vpop.f32.mrf.mxu0
        %3529 = vmatprep.mubr.f32.mxu0 0.0
        %3530 = vmatmul.mubr.f32.gmra.mxu0 %v3350
        %v3531 = vpop.f32.mrf.mxu0
        %v3532 = vadd.f32 %v3126, %v3531
        %v3533 = vpop.f32.mrf.mxu0
        %3534 = vmatprep.mubr.f32.mxu0 0.0
        %3535 = vmatmul.mubr.f32.gmra.mxu0 %v3353
        %v3536 = vpop.f32.mrf.mxu0
        %v3537 = vadd.f32 %v3127, %v3536
        %v3538 = vpop.f32.mrf.mxu0
        %3539 = vmatprep.mubr.f32.mxu0 0.0
        %3540 = vmatmul.mubr.f32.gmra.mxu0 %v3356
        %v3541 = vpop.f32.mrf.mxu0
        %v3542 = vadd.f32 %v3128, %v3541
        %v3543 = vpop.f32.mrf.mxu0
        %3544 = vmatprep.mubr.f32.mxu0 0.0
        %3545 = vmatmul.mubr.f32.gmra.mxu0 %v3359
        %v3546 = vpop.f32.mrf.mxu0
        %v3547 = vadd.f32 %v3129, %v3546
        %v3548 = vpop.f32.mrf.mxu0
        %3549 = vmatprep.mubr.f32.mxu0 0.0
        %3550 = vmatmul.mubr.f32.gmra.mxu0 %v3362
        %v3551 = vpop.f32.mrf.mxu0
        %v3552 = vadd.f32 %v3130, %v3551
        %v3553 = vpop.f32.mrf.mxu0
        %3554 = vmatprep.mubr.f32.mxu0 0.0
        %3555 = vmatmul.mubr.f32.gmra.mxu0 %v3365
        %v3556 = vpop.f32.mrf.mxu0
        %v3557 = vadd.f32 %v3131, %v3556
        %v3558 = vpop.f32.mrf.mxu0
        %3559 = vmatprep.mubr.f32.mxu0 0.0
        %3560 = vmatmul.mubr.f32.gmra.mxu0 %v3368
        %v3561 = vpop.f32.mrf.mxu0
        %v3562 = vadd.f32 %v3132, %v3561
        %v3563 = vpop.f32.mrf.mxu0
        %3564 = vmatprep.mubr.f32.mxu0 0.0
        %3565 = vmatmul.mubr.f32.gmra.mxu0 %v3371
        %v3566 = vpop.f32.mrf.mxu0
        %v3567 = vadd.f32 %v3133, %v3566
        %v3568 = vpop.f32.mrf.mxu0
        %3569 = vmatprep.mubr.f32.mxu0 0.0
        %3570 = vmatmul.mubr.f32.gmra.mxu0 %v3374
        %v3571 = vpop.f32.mrf.mxu0
        %v3572 = vadd.f32 %v3134, %v3571
        %v3573 = vpop.f32.mrf.mxu0
        %3574 = vmatprep.mubr.f32.mxu0 0.0
        %3575 = vmatmul.mubr.f32.gmra.mxu0 %v3377
        %v3576 = vpop.f32.mrf.mxu0
        %v3577 = vadd.f32 %v3135, %v3576
        %v3578 = vpop.f32.mrf.mxu0
        %3579 = vmatprep.mubr.f32.mxu0 0.0
        %3580 = vmatmul.mubr.f32.gmra.mxu0 %v3380
        %v3581 = vpop.f32.mrf.mxu0
        %v3582 = vadd.f32 %v3136, %v3581
        %v3583 = vpop.f32.mrf.mxu0
        %3584 = vmatprep.mubr.f32.mxu0 0.0
        %3585 = vmatmul.mubr.f32.gmra.mxu0 %v3383
        %v3586 = vpop.f32.mrf.mxu0
        %v3587 = vadd.f32 %v3137, %v3586
        %v3588 = vpop.f32.mrf.mxu0
        %3589 = vmatprep.mubr.f32.mxu0 0.0
        %3590 = vmatmul.mubr.f32.gmra.mxu0 %v3386
        %v3591 = vpop.f32.mrf.mxu0
        %v3592 = vadd.f32 %v3138, %v3591
        %v3593 = vpop.f32.mrf.mxu0
        %3594 = vmatprep.mubr.f32.mxu0 0.0
        %3595 = vmatmul.mubr.f32.gmra.mxu0 %v3389
        %v3596 = vpop.f32.mrf.mxu0
        %v3597 = vadd.f32 %v3139, %v3596
        %v3598 = vpop.f32.mrf.mxu0
        %3599 = vmatprep.mubr.f32.mxu0 0.0
        %3600 = vmatmul.mubr.f32.gmra.mxu0 %v3392
        %v3601 = vpop.f32.mrf.mxu0
        %v3602 = vadd.f32 %v3140, %v3601
        %v3603 = vpop.f32.mrf.mxu0
        %3604 = vmatprep.mubr.f32.mxu0 0.0
        %3605 = vmatmul.mubr.f32.gmra.mxu0 %v3395
        %v3606 = vpop.f32.mrf.mxu0
        %v3607 = vadd.f32 %v3141, %v3606
        %v3608 = vpop.f32.mrf.mxu0
        %3609 = vmatprep.mubr.f32.mxu0 0.0
        %3610 = vmatmul.mubr.f32.gmra.mxu0 %v3398
        %v3611 = vpop.f32.mrf.mxu0
        %v3612 = vadd.f32 %v3142, %v3611
        %v3613 = vpop.f32.mrf.mxu0
        %3614 = vmatprep.mubr.f32.mxu0 0.0
        %3615 = vmatmul.mubr.f32.gmra.mxu0 %v3401
        %v3616 = vpop.f32.mrf.mxu0
        %v3617 = vadd.f32 %v3143, %v3616
        %v3618 = vpop.f32.mrf.mxu0
        %3619 = vmatprep.mubr.f32.mxu0 0.0
        %3620 = vmatmul.mubr.f32.gmra.mxu0 %v3404
        %v3621 = vpop.f32.mrf.mxu0
        %v3622 = vadd.f32 %v3144, %v3621
        %v3623 = vpop.f32.mrf.mxu0
        %3624 = vmatprep.mubr.f32.mxu0 0.0
        %3625 = vmatmul.mubr.f32.gmra.mxu0 %v3407
        %v3626 = vpop.f32.mrf.mxu0
        %v3627 = vadd.f32 %v3145, %v3626
        %v3628 = vpop.f32.mrf.mxu0
        %3629 = vmatprep.mubr.f32.mxu0 0.0
        %3630 = vmatmul.mubr.f32.gmra.mxu0 %v3410
        %v3631 = vpop.f32.mrf.mxu0
        %v3632 = vadd.f32 %v3146, %v3631
        %v3633 = vpop.f32.mrf.mxu0
        %3634 = vmatprep.mubr.f32.mxu0 0.0
        %3635 = vmatmul.mubr.f32.gmra.mxu0 %v3413
        %v3636 = vpop.f32.mrf.mxu0
        %v3637 = vadd.f32 %v3147, %v3636
        %v3638 = vpop.f32.mrf.mxu0
        %3639 = vdwg.mxu0
        %3640 = vst.msk [vmem:[%s285] sm:$0xff] %vm2605, %v3482
        %3641 = vst.msk [vmem:[%s285 + $0x8] sm:$0xff] %vm2605, %v3487
        %3642 = vst.msk [vmem:[%s285 + $0x10] sm:$0xff] %vm2605, %v3492
        %3643 = vst.msk [vmem:[%s285 + $0x18] sm:$0xff] %vm2605, %v3497
        %3644 = vst.msk [vmem:[%s285 + $0x20] sm:$0xff] %vm2605, %v3502
        %3645 = vst.msk [vmem:[%s285 + $0x28] sm:$0xff] %vm2605, %v3507
        %3646 = vst.msk [vmem:[%s285 + $0x30] sm:$0xff] %vm2605, %v3512
        %3647 = vst.msk [vmem:[%s285 + $0x38] sm:$0xff] %vm2605, %v3517
        %3648 = vst.msk [vmem:[%s285 + $0x40] sm:$0xff] %vm2605, %v3522
        %3649 = vst.msk [vmem:[%s285 + $0x48] sm:$0xff] %vm2605, %v3527
        %3650 = vst.msk [vmem:[%s285 + $0x50] sm:$0xff] %vm2605, %v3532
        %3651 = vst.msk [vmem:[%s285 + $0x58] sm:$0xff] %vm2605, %v3537
        %3652 = vst.msk [vmem:[%s285 + $0x60] sm:$0xff] %vm2605, %v3542
        %3653 = vst.msk [vmem:[%s285 + $0x68] sm:$0xff] %vm2605, %v3547
        %3654 = vst.msk [vmem:[%s285 + $0x70] sm:$0xff] %vm2605, %v3552
        %3655 = vst.msk [vmem:[%s285 + $0x78] sm:$0xff] %vm2605, %v3557
        %3656 = vst.msk [vmem:[%s285 + $0x80] sm:$0xff] %vm2605, %v3562
        %3657 = vst.msk [vmem:[%s285 + $0x88] sm:$0xff] %vm2605, %v3567
        %3658 = vst.msk [vmem:[%s285 + $0x90] sm:$0xff] %vm2605, %v3572
        %3659 = vst.msk [vmem:[%s285 + $0x98] sm:$0xff] %vm2605, %v3577
        %3660 = vst.msk [vmem:[%s285 + $0xa0] sm:$0xff] %vm2605, %v3582
        %3661 = vst.msk [vmem:[%s285 + $0xa8] sm:$0xff] %vm2605, %v3587
        %3662 = vst.msk [vmem:[%s285 + $0xb0] sm:$0xff] %vm2605, %v3592
        %3663 = vst.msk [vmem:[%s285 + $0xb8] sm:$0xff] %vm2605, %v3597
        %3664 = vst.msk [vmem:[%s285 + $0xc0] sm:$0xff] %vm2605, %v3602
        %3665 = vst.msk [vmem:[%s285 + $0xc8] sm:$0xff] %vm2605, %v3607
        %3666 = vst.msk [vmem:[%s285 + $0xd0] sm:$0xff] %vm2605, %v3612
        %3667 = vst.msk [vmem:[%s285 + $0xd8] sm:$0xff] %vm2605, %v3617
        %3668 = vst.msk [vmem:[%s285 + $0xe0] sm:$0xff] %vm2605, %v3622
        %3669 = vst.msk [vmem:[%s285 + $0xe8] sm:$0xff] %vm2605, %v3627
        %3670 = vst.msk [vmem:[%s285 + $0xf0] sm:$0xff] %vm2605, %v3632
        %3671 = vst.msk [vmem:[%s285 + $0xf8] sm:$0xff] %vm2605, %v3637
        %s3672 = scalar_lea.vmem %s3, 64
        %v3673 = vld [vmem:[%s3672] sm:$0xff]
        %v3674 = vld [vmem:[%s3672 + $0x8] sm:$0xff]
        %v3675 = vld [vmem:[%s3672 + $0x10] sm:$0xff]
        %v3676 = vld [vmem:[%s3672 + $0x18] sm:$0xff]
        %v3677 = vld [vmem:[%s3672 + $0x20] sm:$0xff]
        %v3678 = vld [vmem:[%s3672 + $0x28] sm:$0xff]
        %v3679 = vld [vmem:[%s3672 + $0x30] sm:$0xff]
        %v3680 = vld [vmem:[%s3672 + $0x38] sm:$0xff]
        %3681 = vmatprep.subr.mxu0 0.0
        %3682 = vmatpush1.msra.mxu0 0.0
        %3683 = vmatprep.subr.mxu0 0.0
        %3684 = vmatpush1.msra.mxu0 0.0
        %3685 = vmatprep.subr.mxu0 0.0
        %3686 = vmatpush1.msra.mxu0 0.0
        %3687 = vmatprep.subr.mxu0 0.0
        %3688 = vmatpush1.msra.mxu0 0.0
        %3689 = vmatprep.subr.mxu0 0.0
        %3690 = vmatpush1.msra.mxu0 0.0
        %3691 = vmatprep.subr.mxu0 0.0
        %3692 = vmatpush1.msra.mxu0 0.0
        %3693 = vmatprep.subr.mxu0 0.0
        %3694 = vmatpush1.msra.mxu0 0.0
        %3695 = vmatprep.subr.mxu0 0.0
        %3696 = vmatpush1.msra.mxu0 0.0
        %3697 = vmatprep.subr.mxu0 0.0
        %3698 = vmatpush1.msra.mxu0 %v3680
        %3699 = vmatprep.subr.mxu0 0.0
        %3700 = vmatpush1.msra.mxu0 %v3679
        %3701 = vmatprep.subr.mxu0 0.0
        %3702 = vmatpush1.msra.mxu0 %v3678
        %3703 = vmatprep.subr.mxu0 0.0
        %3704 = vmatpush1.msra.mxu0 %v3677
        %3705 = vmatprep.subr.mxu0 0.0
        %3706 = vmatpush1.msra.mxu0 %v3676
        %3707 = vmatprep.subr.mxu0 0.0
        %3708 = vmatpush1.msra.mxu0 %v3675
        %3709 = vmatprep.subr.mxu0 0.0
        %3710 = vmatpush1.msra.mxu0 %v3674
        %3711 = vmatprep.subr.mxu0 0.0
        %3712 = vmatpush1.msra.mxu0 %v3673
        %3713 = vmatprep.subr.mxu0 0.0
        %3714 = vmatpush2.msra.mxu0 0.0
        %3715 = vmatprep.subr.mxu0 0.0
        %3716 = vmatpush2.msra.mxu0 0.0
        %3717 = vmatprep.subr.mxu0 0.0
        %3718 = vmatpush2.msra.mxu0 0.0
        %3719 = vmatprep.subr.mxu0 0.0
        %3720 = vmatpush2.msra.mxu0 0.0
        %3721 = vmatprep.subr.mxu0 0.0
        %3722 = vmatpush2.msra.mxu0 0.0
        %3723 = vmatprep.subr.mxu0 0.0
        %3724 = vmatpush2.msra.mxu0 0.0
        %3725 = vmatprep.subr.mxu0 0.0
        %3726 = vmatpush2.msra.mxu0 0.0
        %3727 = vmatprep.subr.mxu0 0.0
        %3728 = vmatpush2.msra.mxu0 0.0
        %3729 = vmatprep.subr.mxu0 0.0
        %3730 = vmatpush2.msra.mxu0 0.0
        %3731 = vmatprep.subr.mxu0 0.0
        %3732 = vmatpush2.msra.mxu0 0.0
        %3733 = vmatprep.subr.mxu0 0.0
        %3734 = vmatpush2.msra.mxu0 0.0
        %3735 = vmatprep.subr.mxu0 0.0
        %3736 = vmatpush2.msra.mxu0 0.0
        %3737 = vmatprep.subr.mxu0 0.0
        %3738 = vmatpush2.msra.mxu0 0.0
        %3739 = vmatprep.subr.mxu0 0.0
        %3740 = vmatpush2.msra.mxu0 0.0
        %3741 = vmatprep.subr.mxu0 0.0
        %3742 = vmatpush2.msra.mxu0 0.0
        %3743 = vmatprep.subr.mxu0 0.0
        %3744 = vmatpush2.msra.mxu0 0.0
        %3745 = vmatprep.mubr.f32.mxu0 0.0
        %3746 = vmatmul.mubr.f32.gmra.mxu0 %v3320
        %v3747 = vpop.f32.mrf.mxu0
        %v3748 = vadd.f32 %v3210, %v3747
        %v3749 = vpop.f32.mrf.mxu0
        %3750 = vmatprep.mubr.f32.mxu0 0.0
        %3751 = vmatmul.mubr.f32.gmra.mxu0 %v3323
        %v3752 = vpop.f32.mrf.mxu0
        %v3753 = vadd.f32 %v3211, %v3752
        %v3754 = vpop.f32.mrf.mxu0
        %3755 = vmatprep.mubr.f32.mxu0 0.0
        %3756 = vmatmul.mubr.f32.gmra.mxu0 %v3326
        %v3757 = vpop.f32.mrf.mxu0
        %v3758 = vadd.f32 %v3212, %v3757
        %v3759 = vpop.f32.mrf.mxu0
        %3760 = vmatprep.mubr.f32.mxu0 0.0
        %3761 = vmatmul.mubr.f32.gmra.mxu0 %v3329
        %v3762 = vpop.f32.mrf.mxu0
        %v3763 = vadd.f32 %v3213, %v3762
        %v3764 = vpop.f32.mrf.mxu0
        %3765 = vmatprep.mubr.f32.mxu0 0.0
        %3766 = vmatmul.mubr.f32.gmra.mxu0 %v3332
        %v3767 = vpop.f32.mrf.mxu0
        %v3768 = vadd.f32 %v3214, %v3767
        %v3769 = vpop.f32.mrf.mxu0
        %3770 = vmatprep.mubr.f32.mxu0 0.0
        %3771 = vmatmul.mubr.f32.gmra.mxu0 %v3335
        %v3772 = vpop.f32.mrf.mxu0
        %v3773 = vadd.f32 %v3215, %v3772
        %v3774 = vpop.f32.mrf.mxu0
        %3775 = vmatprep.mubr.f32.mxu0 0.0
        %3776 = vmatmul.mubr.f32.gmra.mxu0 %v3338
        %v3777 = vpop.f32.mrf.mxu0
        %v3778 = vadd.f32 %v3216, %v3777
        %v3779 = vpop.f32.mrf.mxu0
        %3780 = vmatprep.mubr.f32.mxu0 0.0
        %3781 = vmatmul.mubr.f32.gmra.mxu0 %v3341
        %v3782 = vpop.f32.mrf.mxu0
        %v3783 = vadd.f32 %v3217, %v3782
        %v3784 = vpop.f32.mrf.mxu0
        %3785 = vmatprep.mubr.f32.mxu0 0.0
        %3786 = vmatmul.mubr.f32.gmra.mxu0 %v3344
        %v3787 = vpop.f32.mrf.mxu0
        %v3788 = vadd.f32 %v3218, %v3787
        %v3789 = vpop.f32.mrf.mxu0
        %3790 = vmatprep.mubr.f32.mxu0 0.0
        %3791 = vmatmul.mubr.f32.gmra.mxu0 %v3347
        %v3792 = vpop.f32.mrf.mxu0
        %v3793 = vadd.f32 %v3219, %v3792
        %v3794 = vpop.f32.mrf.mxu0
        %3795 = vmatprep.mubr.f32.mxu0 0.0
        %3796 = vmatmul.mubr.f32.gmra.mxu0 %v3350
        %v3797 = vpop.f32.mrf.mxu0
        %v3798 = vadd.f32 %v3220, %v3797
        %v3799 = vpop.f32.mrf.mxu0
        %3800 = vmatprep.mubr.f32.mxu0 0.0
        %3801 = vmatmul.mubr.f32.gmra.mxu0 %v3353
        %v3802 = vpop.f32.mrf.mxu0
        %v3803 = vadd.f32 %v3221, %v3802
        %v3804 = vpop.f32.mrf.mxu0
        %3805 = vmatprep.mubr.f32.mxu0 0.0
        %3806 = vmatmul.mubr.f32.gmra.mxu0 %v3356
        %v3807 = vpop.f32.mrf.mxu0
        %v3808 = vadd.f32 %v3222, %v3807
        %v3809 = vpop.f32.mrf.mxu0
        %3810 = vmatprep.mubr.f32.mxu0 0.0
        %3811 = vmatmul.mubr.f32.gmra.mxu0 %v3359
        %v3812 = vpop.f32.mrf.mxu0
        %v3813 = vadd.f32 %v3223, %v3812
        %v3814 = vpop.f32.mrf.mxu0
        %3815 = vmatprep.mubr.f32.mxu0 0.0
        %3816 = vmatmul.mubr.f32.gmra.mxu0 %v3362
        %v3817 = vpop.f32.mrf.mxu0
        %v3818 = vadd.f32 %v3224, %v3817
        %v3819 = vpop.f32.mrf.mxu0
        %3820 = vmatprep.mubr.f32.mxu0 0.0
        %3821 = vmatmul.mubr.f32.gmra.mxu0 %v3365
        %v3822 = vpop.f32.mrf.mxu0
        %v3823 = vadd.f32 %v3225, %v3822
        %v3824 = vpop.f32.mrf.mxu0
        %3825 = vmatprep.mubr.f32.mxu0 0.0
        %3826 = vmatmul.mubr.f32.gmra.mxu0 %v3368
        %v3827 = vpop.f32.mrf.mxu0
        %v3828 = vadd.f32 %v3226, %v3827
        %v3829 = vpop.f32.mrf.mxu0
        %3830 = vmatprep.mubr.f32.mxu0 0.0
        %3831 = vmatmul.mubr.f32.gmra.mxu0 %v3371
        %v3832 = vpop.f32.mrf.mxu0
        %v3833 = vadd.f32 %v3227, %v3832
        %v3834 = vpop.f32.mrf.mxu0
        %3835 = vmatprep.mubr.f32.mxu0 0.0
        %3836 = vmatmul.mubr.f32.gmra.mxu0 %v3374
        %v3837 = vpop.f32.mrf.mxu0
        %v3838 = vadd.f32 %v3228, %v3837
        %v3839 = vpop.f32.mrf.mxu0
        %3840 = vmatprep.mubr.f32.mxu0 0.0
        %3841 = vmatmul.mubr.f32.gmra.mxu0 %v3377
        %v3842 = vpop.f32.mrf.mxu0
        %v3843 = vadd.f32 %v3229, %v3842
        %v3844 = vpop.f32.mrf.mxu0
        %3845 = vmatprep.mubr.f32.mxu0 0.0
        %3846 = vmatmul.mubr.f32.gmra.mxu0 %v3380
        %v3847 = vpop.f32.mrf.mxu0
        %v3848 = vadd.f32 %v3230, %v3847
        %v3849 = vpop.f32.mrf.mxu0
        %3850 = vmatprep.mubr.f32.mxu0 0.0
        %3851 = vmatmul.mubr.f32.gmra.mxu0 %v3383
        %v3852 = vpop.f32.mrf.mxu0
        %v3853 = vadd.f32 %v3231, %v3852
        %v3854 = vpop.f32.mrf.mxu0
        %3855 = vmatprep.mubr.f32.mxu0 0.0
        %3856 = vmatmul.mubr.f32.gmra.mxu0 %v3386
        %v3857 = vpop.f32.mrf.mxu0
        %v3858 = vadd.f32 %v3232, %v3857
        %v3859 = vpop.f32.mrf.mxu0
        %3860 = vmatprep.mubr.f32.mxu0 0.0
        %3861 = vmatmul.mubr.f32.gmra.mxu0 %v3389
        %v3862 = vpop.f32.mrf.mxu0
        %v3863 = vadd.f32 %v3233, %v3862
        %v3864 = vpop.f32.mrf.mxu0
        %3865 = vmatprep.mubr.f32.mxu0 0.0
        %3866 = vmatmul.mubr.f32.gmra.mxu0 %v3392
        %v3867 = vpop.f32.mrf.mxu0
        %v3868 = vadd.f32 %v3234, %v3867
        %v3869 = vpop.f32.mrf.mxu0
        %3870 = vmatprep.mubr.f32.mxu0 0.0
        %3871 = vmatmul.mubr.f32.gmra.mxu0 %v3395
        %v3872 = vpop.f32.mrf.mxu0
        %v3873 = vadd.f32 %v3235, %v3872
        %v3874 = vpop.f32.mrf.mxu0
        %3875 = vmatprep.mubr.f32.mxu0 0.0
        %3876 = vmatmul.mubr.f32.gmra.mxu0 %v3398
        %v3877 = vpop.f32.mrf.mxu0
        %v3878 = vadd.f32 %v3236, %v3877
        %v3879 = vpop.f32.mrf.mxu0
        %3880 = vmatprep.mubr.f32.mxu0 0.0
        %3881 = vmatmul.mubr.f32.gmra.mxu0 %v3401
        %v3882 = vpop.f32.mrf.mxu0
        %v3883 = vadd.f32 %v3237, %v3882
        %v3884 = vpop.f32.mrf.mxu0
        %3885 = vmatprep.mubr.f32.mxu0 0.0
        %3886 = vmatmul.mubr.f32.gmra.mxu0 %v3404
        %v3887 = vpop.f32.mrf.mxu0
        %v3888 = vadd.f32 %v3238, %v3887
        %v3889 = vpop.f32.mrf.mxu0
        %3890 = vmatprep.mubr.f32.mxu0 0.0
        %3891 = vmatmul.mubr.f32.gmra.mxu0 %v3407
        %v3892 = vpop.f32.mrf.mxu0
        %v3893 = vadd.f32 %v3239, %v3892
        %v3894 = vpop.f32.mrf.mxu0
        %3895 = vmatprep.mubr.f32.mxu0 0.0
        %3896 = vmatmul.mubr.f32.gmra.mxu0 %v3410
        %v3897 = vpop.f32.mrf.mxu0
        %v3898 = vadd.f32 %v3240, %v3897
        %v3899 = vpop.f32.mrf.mxu0
        %3900 = vmatprep.mubr.f32.mxu0 0.0
        %3901 = vmatmul.mubr.f32.gmra.mxu0 %v3413
        %v3902 = vpop.f32.mrf.mxu0
        %v3903 = vadd.f32 %v3241, %v3902
        %v3904 = vpop.f32.mrf.mxu0
        %3905 = vdwg.mxu0
        %s3906 = scalar_lea.vmem %s285, 256
        %3907 = vst.msk [vmem:[%s3906] sm:$0xff] %vm2605, %v3748
        %3908 = vst.msk [vmem:[%s3906 + $0x8] sm:$0xff] %vm2605, %v3753
        %3909 = vst.msk [vmem:[%s3906 + $0x10] sm:$0xff] %vm2605, %v3758
        %3910 = vst.msk [vmem:[%s3906 + $0x18] sm:$0xff] %vm2605, %v3763
        %3911 = vst.msk [vmem:[%s3906 + $0x20] sm:$0xff] %vm2605, %v3768
        %3912 = vst.msk [vmem:[%s3906 + $0x28] sm:$0xff] %vm2605, %v3773
        %3913 = vst.msk [vmem:[%s3906 + $0x30] sm:$0xff] %vm2605, %v3778
        %3914 = vst.msk [vmem:[%s3906 + $0x38] sm:$0xff] %vm2605, %v3783
        %3915 = vst.msk [vmem:[%s3906 + $0x40] sm:$0xff] %vm2605, %v3788
        %3916 = vst.msk [vmem:[%s3906 + $0x48] sm:$0xff] %vm2605, %v3793
        %3917 = vst.msk [vmem:[%s3906 + $0x50] sm:$0xff] %vm2605, %v3798
        %3918 = vst.msk [vmem:[%s3906 + $0x58] sm:$0xff] %vm2605, %v3803
        %3919 = vst.msk [vmem:[%s3906 + $0x60] sm:$0xff] %vm2605, %v3808
        %3920 = vst.msk [vmem:[%s3906 + $0x68] sm:$0xff] %vm2605, %v3813
        %3921 = vst.msk [vmem:[%s3906 + $0x70] sm:$0xff] %vm2605, %v3818
        %3922 = vst.msk [vmem:[%s3906 + $0x78] sm:$0xff] %vm2605, %v3823
        %3923 = vst.msk [vmem:[%s3906 + $0x80] sm:$0xff] %vm2605, %v3828
        %3924 = vst.msk [vmem:[%s3906 + $0x88] sm:$0xff] %vm2605, %v3833
        %3925 = vst.msk [vmem:[%s3906 + $0x90] sm:$0xff] %vm2605, %v3838
        %3926 = vst.msk [vmem:[%s3906 + $0x98] sm:$0xff] %vm2605, %v3843
        %3927 = vst.msk [vmem:[%s3906 + $0xa0] sm:$0xff] %vm2605, %v3848
        %3928 = vst.msk [vmem:[%s3906 + $0xa8] sm:$0xff] %vm2605, %v3853
        %3929 = vst.msk [vmem:[%s3906 + $0xb0] sm:$0xff] %vm2605, %v3858
        %3930 = vst.msk [vmem:[%s3906 + $0xb8] sm:$0xff] %vm2605, %v3863
        %3931 = vst.msk [vmem:[%s3906 + $0xc0] sm:$0xff] %vm2605, %v3868
        %3932 = vst.msk [vmem:[%s3906 + $0xc8] sm:$0xff] %vm2605, %v3873
        %3933 = vst.msk [vmem:[%s3906 + $0xd0] sm:$0xff] %vm2605, %v3878
        %3934 = vst.msk [vmem:[%s3906 + $0xd8] sm:$0xff] %vm2605, %v3883
        %3935 = vst.msk [vmem:[%s3906 + $0xe0] sm:$0xff] %vm2605, %v3888
        %3936 = vst.msk [vmem:[%s3906 + $0xe8] sm:$0xff] %vm2605, %v3893
        %3937 = vst.msk [vmem:[%s3906 + $0xf0] sm:$0xff] %vm2605, %v3898
        %3938 = vst.msk [vmem:[%s3906 + $0xf8] sm:$0xff] %vm2605, %v3903
        %s3939 = scalar_lea.vmem %s3, 128
        %v3940 = vld [vmem:[%s3939] sm:$0xff]
        %v3941 = vld [vmem:[%s3939 + $0x8] sm:$0xff]
        %v3942 = vld [vmem:[%s3939 + $0x10] sm:$0xff]
        %v3943 = vld [vmem:[%s3939 + $0x18] sm:$0xff]
        %v3944 = vld [vmem:[%s3939 + $0x20] sm:$0xff]
        %v3945 = vld [vmem:[%s3939 + $0x28] sm:$0xff]
        %v3946 = vld [vmem:[%s3939 + $0x30] sm:$0xff]
        %v3947 = vld [vmem:[%s3939 + $0x38] sm:$0xff]
        %3948 = vmatprep.subr.mxu0 0.0
        %3949 = vmatpush1.msra.mxu0 0.0
        %3950 = vmatprep.subr.mxu0 0.0
        %3951 = vmatpush1.msra.mxu0 0.0
        %3952 = vmatprep.subr.mxu0 0.0
        %3953 = vmatpush1.msra.mxu0 0.0
        %3954 = vmatprep.subr.mxu0 0.0
        %3955 = vmatpush1.msra.mxu0 0.0
        %3956 = vmatprep.subr.mxu0 0.0
        %3957 = vmatpush1.msra.mxu0 0.0
        %3958 = vmatprep.subr.mxu0 0.0
        %3959 = vmatpush1.msra.mxu0 0.0
        %3960 = vmatprep.subr.mxu0 0.0
        %3961 = vmatpush1.msra.mxu0 0.0
        %3962 = vmatprep.subr.mxu0 0.0
        %3963 = vmatpush1.msra.mxu0 0.0
        %3964 = vmatprep.subr.mxu0 0.0
        %3965 = vmatpush1.msra.mxu0 %v3947
        %3966 = vmatprep.subr.mxu0 0.0
        %3967 = vmatpush1.msra.mxu0 %v3946
        %3968 = vmatprep.subr.mxu0 0.0
        %3969 = vmatpush1.msra.mxu0 %v3945
        %3970 = vmatprep.subr.mxu0 0.0
        %3971 = vmatpush1.msra.mxu0 %v3944
        %3972 = vmatprep.subr.mxu0 0.0
        %3973 = vmatpush1.msra.mxu0 %v3943
        %3974 = vmatprep.subr.mxu0 0.0
        %3975 = vmatpush1.msra.mxu0 %v3942
        %3976 = vmatprep.subr.mxu0 0.0
        %3977 = vmatpush1.msra.mxu0 %v3941
        %3978 = vmatprep.subr.mxu0 0.0
        %3979 = vmatpush1.msra.mxu0 %v3940
        %3980 = vmatprep.subr.mxu0 0.0
        %3981 = vmatpush2.msra.mxu0 0.0
        %3982 = vmatprep.subr.mxu0 0.0
        %3983 = vmatpush2.msra.mxu0 0.0
        %3984 = vmatprep.subr.mxu0 0.0
        %3985 = vmatpush2.msra.mxu0 0.0
        %3986 = vmatprep.subr.mxu0 0.0
        %3987 = vmatpush2.msra.mxu0 0.0
        %3988 = vmatprep.subr.mxu0 0.0
        %3989 = vmatpush2.msra.mxu0 0.0
        %3990 = vmatprep.subr.mxu0 0.0
        %3991 = vmatpush2.msra.mxu0 0.0
        %3992 = vmatprep.subr.mxu0 0.0
        %3993 = vmatpush2.msra.mxu0 0.0
        %3994 = vmatprep.subr.mxu0 0.0
        %3995 = vmatpush2.msra.mxu0 0.0
        %3996 = vmatprep.subr.mxu0 0.0
        %3997 = vmatpush2.msra.mxu0 0.0
        %3998 = vmatprep.subr.mxu0 0.0
        %3999 = vmatpush2.msra.mxu0 0.0
        %4000 = vmatprep.subr.mxu0 0.0
        %4001 = vmatpush2.msra.mxu0 0.0
        %4002 = vmatprep.subr.mxu0 0.0
        %4003 = vmatpush2.msra.mxu0 0.0
        %4004 = vmatprep.subr.mxu0 0.0
        %4005 = vmatpush2.msra.mxu0 0.0
        %4006 = vmatprep.subr.mxu0 0.0
        %4007 = vmatpush2.msra.mxu0 0.0
        %4008 = vmatprep.subr.mxu0 0.0
        %4009 = vmatpush2.msra.mxu0 0.0
        %4010 = vmatprep.subr.mxu0 0.0
        %4011 = vmatpush2.msra.mxu0 0.0
        %4012 = vmatprep.mubr.f32.mxu0 0.0
        %4013 = vmatmul.mubr.f32.gmra.mxu0 %v3320
        %v4014 = vpop.f32.mrf.mxu0
        %v4015 = vadd.f32 %v3244, %v4014
        %v4016 = vpop.f32.mrf.mxu0
        %4017 = vmatprep.mubr.f32.mxu0 0.0
        %4018 = vmatmul.mubr.f32.gmra.mxu0 %v3323
        %v4019 = vpop.f32.mrf.mxu0
        %v4020 = vadd.f32 %v3245, %v4019
        %v4021 = vpop.f32.mrf.mxu0
        %4022 = vmatprep.mubr.f32.mxu0 0.0
        %4023 = vmatmul.mubr.f32.gmra.mxu0 %v3326
        %v4024 = vpop.f32.mrf.mxu0
        %v4025 = vadd.f32 %v3246, %v4024
        %v4026 = vpop.f32.mrf.mxu0
        %4027 = vmatprep.mubr.f32.mxu0 0.0
        %4028 = vmatmul.mubr.f32.gmra.mxu0 %v3329
        %v4029 = vpop.f32.mrf.mxu0
        %v4030 = vadd.f32 %v3247, %v4029
        %v4031 = vpop.f32.mrf.mxu0
        %4032 = vmatprep.mubr.f32.mxu0 0.0
        %4033 = vmatmul.mubr.f32.gmra.mxu0 %v3332
        %v4034 = vpop.f32.mrf.mxu0
        %v4035 = vadd.f32 %v3248, %v4034
        %v4036 = vpop.f32.mrf.mxu0
        %4037 = vmatprep.mubr.f32.mxu0 0.0
        %4038 = vmatmul.mubr.f32.gmra.mxu0 %v3335
        %v4039 = vpop.f32.mrf.mxu0
        %v4040 = vadd.f32 %v3249, %v4039
        %v4041 = vpop.f32.mrf.mxu0
        %4042 = vmatprep.mubr.f32.mxu0 0.0
        %4043 = vmatmul.mubr.f32.gmra.mxu0 %v3338
        %v4044 = vpop.f32.mrf.mxu0
        %v4045 = vadd.f32 %v3250, %v4044
        %v4046 = vpop.f32.mrf.mxu0
        %4047 = vmatprep.mubr.f32.mxu0 0.0
        %4048 = vmatmul.mubr.f32.gmra.mxu0 %v3341
        %v4049 = vpop.f32.mrf.mxu0
        %v4050 = vadd.f32 %v3251, %v4049
        %v4051 = vpop.f32.mrf.mxu0
        %4052 = vmatprep.mubr.f32.mxu0 0.0
        %4053 = vmatmul.mubr.f32.gmra.mxu0 %v3344
        %v4054 = vpop.f32.mrf.mxu0
        %v4055 = vadd.f32 %v3252, %v4054
        %v4056 = vpop.f32.mrf.mxu0
        %4057 = vmatprep.mubr.f32.mxu0 0.0
        %4058 = vmatmul.mubr.f32.gmra.mxu0 %v3347
        %v4059 = vpop.f32.mrf.mxu0
        %v4060 = vadd.f32 %v3253, %v4059
        %v4061 = vpop.f32.mrf.mxu0
        %4062 = vmatprep.mubr.f32.mxu0 0.0
        %4063 = vmatmul.mubr.f32.gmra.mxu0 %v3350
        %v4064 = vpop.f32.mrf.mxu0
        %v4065 = vadd.f32 %v3254, %v4064
        %v4066 = vpop.f32.mrf.mxu0
        %4067 = vmatprep.mubr.f32.mxu0 0.0
        %4068 = vmatmul.mubr.f32.gmra.mxu0 %v3353
        %v4069 = vpop.f32.mrf.mxu0
        %v4070 = vadd.f32 %v3255, %v4069
        %v4071 = vpop.f32.mrf.mxu0
        %4072 = vmatprep.mubr.f32.mxu0 0.0
        %4073 = vmatmul.mubr.f32.gmra.mxu0 %v3356
        %v4074 = vpop.f32.mrf.mxu0
        %v4075 = vadd.f32 %v3256, %v4074
        %v4076 = vpop.f32.mrf.mxu0
        %4077 = vmatprep.mubr.f32.mxu0 0.0
        %4078 = vmatmul.mubr.f32.gmra.mxu0 %v3359
        %v4079 = vpop.f32.mrf.mxu0
        %v4080 = vadd.f32 %v3257, %v4079
        %v4081 = vpop.f32.mrf.mxu0
        %4082 = vmatprep.mubr.f32.mxu0 0.0
        %4083 = vmatmul.mubr.f32.gmra.mxu0 %v3362
        %v4084 = vpop.f32.mrf.mxu0
        %v4085 = vadd.f32 %v3258, %v4084
        %v4086 = vpop.f32.mrf.mxu0
        %4087 = vmatprep.mubr.f32.mxu0 0.0
        %4088 = vmatmul.mubr.f32.gmra.mxu0 %v3365
        %v4089 = vpop.f32.mrf.mxu0
        %v4090 = vadd.f32 %v3259, %v4089
        %v4091 = vpop.f32.mrf.mxu0
        %4092 = vmatprep.mubr.f32.mxu0 0.0
        %4093 = vmatmul.mubr.f32.gmra.mxu0 %v3368
        %v4094 = vpop.f32.mrf.mxu0
        %v4095 = vadd.f32 %v3260, %v4094
        %v4096 = vpop.f32.mrf.mxu0
        %4097 = vmatprep.mubr.f32.mxu0 0.0
        %4098 = vmatmul.mubr.f32.gmra.mxu0 %v3371
        %v4099 = vpop.f32.mrf.mxu0
        %v4100 = vadd.f32 %v3261, %v4099
        %v4101 = vpop.f32.mrf.mxu0
        %4102 = vmatprep.mubr.f32.mxu0 0.0
        %4103 = vmatmul.mubr.f32.gmra.mxu0 %v3374
        %v4104 = vpop.f32.mrf.mxu0
        %v4105 = vadd.f32 %v3262, %v4104
        %v4106 = vpop.f32.mrf.mxu0
        %4107 = vmatprep.mubr.f32.mxu0 0.0
        %4108 = vmatmul.mubr.f32.gmra.mxu0 %v3377
        %v4109 = vpop.f32.mrf.mxu0
        %v4110 = vadd.f32 %v3263, %v4109
        %v4111 = vpop.f32.mrf.mxu0
        %4112 = vmatprep.mubr.f32.mxu0 0.0
        %4113 = vmatmul.mubr.f32.gmra.mxu0 %v3380
        %v4114 = vpop.f32.mrf.mxu0
        %v4115 = vadd.f32 %v3264, %v4114
        %v4116 = vpop.f32.mrf.mxu0
        %4117 = vmatprep.mubr.f32.mxu0 0.0
        %4118 = vmatmul.mubr.f32.gmra.mxu0 %v3383
        %v4119 = vpop.f32.mrf.mxu0
        %v4120 = vadd.f32 %v3265, %v4119
        %v4121 = vpop.f32.mrf.mxu0
        %4122 = vmatprep.mubr.f32.mxu0 0.0
        %4123 = vmatmul.mubr.f32.gmra.mxu0 %v3386
        %v4124 = vpop.f32.mrf.mxu0
        %v4125 = vadd.f32 %v3266, %v4124
        %v4126 = vpop.f32.mrf.mxu0
        %4127 = vmatprep.mubr.f32.mxu0 0.0
        %4128 = vmatmul.mubr.f32.gmra.mxu0 %v3389
        %v4129 = vpop.f32.mrf.mxu0
        %v4130 = vadd.f32 %v3267, %v4129
        %v4131 = vpop.f32.mrf.mxu0
        %4132 = vmatprep.mubr.f32.mxu0 0.0
        %4133 = vmatmul.mubr.f32.gmra.mxu0 %v3392
        %v4134 = vpop.f32.mrf.mxu0
        %v4135 = vadd.f32 %v3268, %v4134
        %v4136 = vpop.f32.mrf.mxu0
        %4137 = vmatprep.mubr.f32.mxu0 0.0
        %4138 = vmatmul.mubr.f32.gmra.mxu0 %v3395
        %v4139 = vpop.f32.mrf.mxu0
        %v4140 = vadd.f32 %v3269, %v4139
        %v4141 = vpop.f32.mrf.mxu0
        %4142 = vmatprep.mubr.f32.mxu0 0.0
        %4143 = vmatmul.mubr.f32.gmra.mxu0 %v3398
        %v4144 = vpop.f32.mrf.mxu0
        %v4145 = vadd.f32 %v3270, %v4144
        %v4146 = vpop.f32.mrf.mxu0
        %4147 = vmatprep.mubr.f32.mxu0 0.0
        %4148 = vmatmul.mubr.f32.gmra.mxu0 %v3401
        %v4149 = vpop.f32.mrf.mxu0
        %v4150 = vadd.f32 %v3271, %v4149
        %v4151 = vpop.f32.mrf.mxu0
        %4152 = vmatprep.mubr.f32.mxu0 0.0
        %4153 = vmatmul.mubr.f32.gmra.mxu0 %v3404
        %v4154 = vpop.f32.mrf.mxu0
        %v4155 = vadd.f32 %v3272, %v4154
        %v4156 = vpop.f32.mrf.mxu0
        %4157 = vmatprep.mubr.f32.mxu0 0.0
        %4158 = vmatmul.mubr.f32.gmra.mxu0 %v3407
        %v4159 = vpop.f32.mrf.mxu0
        %v4160 = vadd.f32 %v3273, %v4159
        %v4161 = vpop.f32.mrf.mxu0
        %4162 = vmatprep.mubr.f32.mxu0 0.0
        %4163 = vmatmul.mubr.f32.gmra.mxu0 %v3410
        %v4164 = vpop.f32.mrf.mxu0
        %v4165 = vadd.f32 %v3274, %v4164
        %v4166 = vpop.f32.mrf.mxu0
        %4167 = vmatprep.mubr.f32.mxu0 0.0
        %4168 = vmatmul.mubr.f32.gmra.mxu0 %v3413
        %v4169 = vpop.f32.mrf.mxu0
        %v4170 = vadd.f32 %v3275, %v4169
        %v4171 = vpop.f32.mrf.mxu0
        %4172 = vdwg.mxu0
        %s4173 = scalar_lea.vmem %s285, 512
        %4174 = vst.msk [vmem:[%s4173] sm:$0xff] %vm2605, %v4015
        %4175 = vst.msk [vmem:[%s4173 + $0x8] sm:$0xff] %vm2605, %v4020
        %4176 = vst.msk [vmem:[%s4173 + $0x10] sm:$0xff] %vm2605, %v4025
        %4177 = vst.msk [vmem:[%s4173 + $0x18] sm:$0xff] %vm2605, %v4030
        %4178 = vst.msk [vmem:[%s4173 + $0x20] sm:$0xff] %vm2605, %v4035
        %4179 = vst.msk [vmem:[%s4173 + $0x28] sm:$0xff] %vm2605, %v4040
        %4180 = vst.msk [vmem:[%s4173 + $0x30] sm:$0xff] %vm2605, %v4045
        %4181 = vst.msk [vmem:[%s4173 + $0x38] sm:$0xff] %vm2605, %v4050
        %4182 = vst.msk [vmem:[%s4173 + $0x40] sm:$0xff] %vm2605, %v4055
        %4183 = vst.msk [vmem:[%s4173 + $0x48] sm:$0xff] %vm2605, %v4060
        %4184 = vst.msk [vmem:[%s4173 + $0x50] sm:$0xff] %vm2605, %v4065
        %4185 = vst.msk [vmem:[%s4173 + $0x58] sm:$0xff] %vm2605, %v4070
        %4186 = vst.msk [vmem:[%s4173 + $0x60] sm:$0xff] %vm2605, %v4075
        %4187 = vst.msk [vmem:[%s4173 + $0x68] sm:$0xff] %vm2605, %v4080
        %4188 = vst.msk [vmem:[%s4173 + $0x70] sm:$0xff] %vm2605, %v4085
        %4189 = vst.msk [vmem:[%s4173 + $0x78] sm:$0xff] %vm2605, %v4090
        %4190 = vst.msk [vmem:[%s4173 + $0x80] sm:$0xff] %vm2605, %v4095
        %4191 = vst.msk [vmem:[%s4173 + $0x88] sm:$0xff] %vm2605, %v4100
        %4192 = vst.msk [vmem:[%s4173 + $0x90] sm:$0xff] %vm2605, %v4105
        %4193 = vst.msk [vmem:[%s4173 + $0x98] sm:$0xff] %vm2605, %v4110
        %4194 = vst.msk [vmem:[%s4173 + $0xa0] sm:$0xff] %vm2605, %v4115
        %4195 = vst.msk [vmem:[%s4173 + $0xa8] sm:$0xff] %vm2605, %v4120
        %4196 = vst.msk [vmem:[%s4173 + $0xb0] sm:$0xff] %vm2605, %v4125
        %4197 = vst.msk [vmem:[%s4173 + $0xb8] sm:$0xff] %vm2605, %v4130
        %4198 = vst.msk [vmem:[%s4173 + $0xc0] sm:$0xff] %vm2605, %v4135
        %4199 = vst.msk [vmem:[%s4173 + $0xc8] sm:$0xff] %vm2605, %v4140
        %4200 = vst.msk [vmem:[%s4173 + $0xd0] sm:$0xff] %vm2605, %v4145
        %4201 = vst.msk [vmem:[%s4173 + $0xd8] sm:$0xff] %vm2605, %v4150
        %4202 = vst.msk [vmem:[%s4173 + $0xe0] sm:$0xff] %vm2605, %v4155
        %4203 = vst.msk [vmem:[%s4173 + $0xe8] sm:$0xff] %vm2605, %v4160
        %4204 = vst.msk [vmem:[%s4173 + $0xf0] sm:$0xff] %vm2605, %v4165
        %4205 = vst.msk [vmem:[%s4173 + $0xf8] sm:$0xff] %vm2605, %v4170
        %s4206 = scalar_lea.vmem %s3, 192
        %v4207 = vld [vmem:[%s4206] sm:$0xff]
        %v4208 = vld [vmem:[%s4206 + $0x8] sm:$0xff]
        %v4209 = vld [vmem:[%s4206 + $0x10] sm:$0xff]
        %v4210 = vld [vmem:[%s4206 + $0x18] sm:$0xff]
        %v4211 = vld [vmem:[%s4206 + $0x20] sm:$0xff]
        %v4212 = vld [vmem:[%s4206 + $0x28] sm:$0xff]
        %v4213 = vld [vmem:[%s4206 + $0x30] sm:$0xff]
        %v4214 = vld [vmem:[%s4206 + $0x38] sm:$0xff]
        %4215 = vmatprep.subr.mxu0 0.0
        %4216 = vmatpush1.msra.mxu0 0.0
        %4217 = vmatprep.subr.mxu0 0.0
        %4218 = vmatpush1.msra.mxu0 0.0
        %4219 = vmatprep.subr.mxu0 0.0
        %4220 = vmatpush1.msra.mxu0 0.0
        %4221 = vmatprep.subr.mxu0 0.0
        %4222 = vmatpush1.msra.mxu0 0.0
        %4223 = vmatprep.subr.mxu0 0.0
        %4224 = vmatpush1.msra.mxu0 0.0
        %4225 = vmatprep.subr.mxu0 0.0
        %4226 = vmatpush1.msra.mxu0 0.0
        %4227 = vmatprep.subr.mxu0 0.0
        %4228 = vmatpush1.msra.mxu0 0.0
        %4229 = vmatprep.subr.mxu0 0.0
        %4230 = vmatpush1.msra.mxu0 0.0
        %4231 = vmatprep.subr.mxu0 0.0
        %4232 = vmatpush1.msra.mxu0 %v4214
        %4233 = vmatprep.subr.mxu0 0.0
        %4234 = vmatpush1.msra.mxu0 %v4213
        %4235 = vmatprep.subr.mxu0 0.0
        %4236 = vmatpush1.msra.mxu0 %v4212
        %4237 = vmatprep.subr.mxu0 0.0
        %4238 = vmatpush1.msra.mxu0 %v4211
        %4239 = vmatprep.subr.mxu0 0.0
        %4240 = vmatpush1.msra.mxu0 %v4210
        %4241 = vmatprep.subr.mxu0 0.0
        %4242 = vmatpush1.msra.mxu0 %v4209
        %4243 = vmatprep.subr.mxu0 0.0
        %4244 = vmatpush1.msra.mxu0 %v4208
        %4245 = vmatprep.subr.mxu0 0.0
        %4246 = vmatpush1.msra.mxu0 %v4207
        %4247 = vmatprep.subr.mxu0 0.0
        %4248 = vmatpush2.msra.mxu0 0.0
        %4249 = vmatprep.subr.mxu0 0.0
        %4250 = vmatpush2.msra.mxu0 0.0
        %4251 = vmatprep.subr.mxu0 0.0
        %4252 = vmatpush2.msra.mxu0 0.0
        %4253 = vmatprep.subr.mxu0 0.0
        %4254 = vmatpush2.msra.mxu0 0.0
        %4255 = vmatprep.subr.mxu0 0.0
        %4256 = vmatpush2.msra.mxu0 0.0
        %4257 = vmatprep.subr.mxu0 0.0
        %4258 = vmatpush2.msra.mxu0 0.0
        %4259 = vmatprep.subr.mxu0 0.0
        %4260 = vmatpush2.msra.mxu0 0.0
        %4261 = vmatprep.subr.mxu0 0.0
        %4262 = vmatpush2.msra.mxu0 0.0
        %4263 = vmatprep.subr.mxu0 0.0
        %4264 = vmatpush2.msra.mxu0 0.0
        %4265 = vmatprep.subr.mxu0 0.0
        %4266 = vmatpush2.msra.mxu0 0.0
        %4267 = vmatprep.subr.mxu0 0.0
        %4268 = vmatpush2.msra.mxu0 0.0
        %4269 = vmatprep.subr.mxu0 0.0
        %4270 = vmatpush2.msra.mxu0 0.0
        %4271 = vmatprep.subr.mxu0 0.0
        %4272 = vmatpush2.msra.mxu0 0.0
        %4273 = vmatprep.subr.mxu0 0.0
        %4274 = vmatpush2.msra.mxu0 0.0
        %4275 = vmatprep.subr.mxu0 0.0
        %4276 = vmatpush2.msra.mxu0 0.0
        %4277 = vmatprep.subr.mxu0 0.0
        %4278 = vmatpush2.msra.mxu0 0.0
        %4279 = vmatprep.mubr.f32.mxu0 0.0
        %4280 = vmatmul.mubr.f32.gmra.mxu0 %v3320
        %v4281 = vpop.f32.mrf.mxu0
        %v4282 = vadd.f32 %v3278, %v4281
        %v4283 = vpop.f32.mrf.mxu0
        %4284 = vmatprep.mubr.f32.mxu0 0.0
        %4285 = vmatmul.mubr.f32.gmra.mxu0 %v3323
        %v4286 = vpop.f32.mrf.mxu0
        %v4287 = vadd.f32 %v3279, %v4286
        %v4288 = vpop.f32.mrf.mxu0
        %4289 = vmatprep.mubr.f32.mxu0 0.0
        %4290 = vmatmul.mubr.f32.gmra.mxu0 %v3326
        %v4291 = vpop.f32.mrf.mxu0
        %v4292 = vadd.f32 %v3280, %v4291
        %v4293 = vpop.f32.mrf.mxu0
        %4294 = vmatprep.mubr.f32.mxu0 0.0
        %4295 = vmatmul.mubr.f32.gmra.mxu0 %v3329
        %v4296 = vpop.f32.mrf.mxu0
        %v4297 = vadd.f32 %v3281, %v4296
        %v4298 = vpop.f32.mrf.mxu0
        %4299 = vmatprep.mubr.f32.mxu0 0.0
        %4300 = vmatmul.mubr.f32.gmra.mxu0 %v3332
        %v4301 = vpop.f32.mrf.mxu0
        %v4302 = vadd.f32 %v3282, %v4301
        %v4303 = vpop.f32.mrf.mxu0
        %4304 = vmatprep.mubr.f32.mxu0 0.0
        %4305 = vmatmul.mubr.f32.gmra.mxu0 %v3335
        %v4306 = vpop.f32.mrf.mxu0
        %v4307 = vadd.f32 %v3283, %v4306
        %v4308 = vpop.f32.mrf.mxu0
        %4309 = vmatprep.mubr.f32.mxu0 0.0
        %4310 = vmatmul.mubr.f32.gmra.mxu0 %v3338
        %v4311 = vpop.f32.mrf.mxu0
        %v4312 = vadd.f32 %v3284, %v4311
        %v4313 = vpop.f32.mrf.mxu0
        %4314 = vmatprep.mubr.f32.mxu0 0.0
        %4315 = vmatmul.mubr.f32.gmra.mxu0 %v3341
        %v4316 = vpop.f32.mrf.mxu0
        %v4317 = vadd.f32 %v3285, %v4316
        %v4318 = vpop.f32.mrf.mxu0
        %4319 = vmatprep.mubr.f32.mxu0 0.0
        %4320 = vmatmul.mubr.f32.gmra.mxu0 %v3344
        %v4321 = vpop.f32.mrf.mxu0
        %v4322 = vadd.f32 %v3286, %v4321
        %v4323 = vpop.f32.mrf.mxu0
        %4324 = vmatprep.mubr.f32.mxu0 0.0
        %4325 = vmatmul.mubr.f32.gmra.mxu0 %v3347
        %v4326 = vpop.f32.mrf.mxu0
        %v4327 = vadd.f32 %v3287, %v4326
        %v4328 = vpop.f32.mrf.mxu0
        %4329 = vmatprep.mubr.f32.mxu0 0.0
        %4330 = vmatmul.mubr.f32.gmra.mxu0 %v3350
        %v4331 = vpop.f32.mrf.mxu0
        %v4332 = vadd.f32 %v3288, %v4331
        %v4333 = vpop.f32.mrf.mxu0
        %4334 = vmatprep.mubr.f32.mxu0 0.0
        %4335 = vmatmul.mubr.f32.gmra.mxu0 %v3353
        %v4336 = vpop.f32.mrf.mxu0
        %v4337 = vadd.f32 %v3289, %v4336
        %v4338 = vpop.f32.mrf.mxu0
        %4339 = vmatprep.mubr.f32.mxu0 0.0
        %4340 = vmatmul.mubr.f32.gmra.mxu0 %v3356
        %v4341 = vpop.f32.mrf.mxu0
        %v4342 = vadd.f32 %v3290, %v4341
        %v4343 = vpop.f32.mrf.mxu0
        %4344 = vmatprep.mubr.f32.mxu0 0.0
        %4345 = vmatmul.mubr.f32.gmra.mxu0 %v3359
        %v4346 = vpop.f32.mrf.mxu0
        %v4347 = vadd.f32 %v3291, %v4346
        %v4348 = vpop.f32.mrf.mxu0
        %4349 = vmatprep.mubr.f32.mxu0 0.0
        %4350 = vmatmul.mubr.f32.gmra.mxu0 %v3362
        %v4351 = vpop.f32.mrf.mxu0
        %v4352 = vadd.f32 %v3292, %v4351
        %v4353 = vpop.f32.mrf.mxu0
        %4354 = vmatprep.mubr.f32.mxu0 0.0
        %4355 = vmatmul.mubr.f32.gmra.mxu0 %v3365
        %v4356 = vpop.f32.mrf.mxu0
        %v4357 = vadd.f32 %v3293, %v4356
        %v4358 = vpop.f32.mrf.mxu0
        %4359 = vmatprep.mubr.f32.mxu0 0.0
        %4360 = vmatmul.mubr.f32.gmra.mxu0 %v3368
        %v4361 = vpop.f32.mrf.mxu0
        %v4362 = vadd.f32 %v3294, %v4361
        %v4363 = vpop.f32.mrf.mxu0
        %4364 = vmatprep.mubr.f32.mxu0 0.0
        %4365 = vmatmul.mubr.f32.gmra.mxu0 %v3371
        %v4366 = vpop.f32.mrf.mxu0
        %v4367 = vadd.f32 %v3295, %v4366
        %v4368 = vpop.f32.mrf.mxu0
        %4369 = vmatprep.mubr.f32.mxu0 0.0
        %4370 = vmatmul.mubr.f32.gmra.mxu0 %v3374
        %v4371 = vpop.f32.mrf.mxu0
        %v4372 = vadd.f32 %v3296, %v4371
        %v4373 = vpop.f32.mrf.mxu0
        %4374 = vmatprep.mubr.f32.mxu0 0.0
        %4375 = vmatmul.mubr.f32.gmra.mxu0 %v3377
        %v4376 = vpop.f32.mrf.mxu0
        %v4377 = vadd.f32 %v3297, %v4376
        %v4378 = vpop.f32.mrf.mxu0
        %4379 = vmatprep.mubr.f32.mxu0 0.0
        %4380 = vmatmul.mubr.f32.gmra.mxu0 %v3380
        %v4381 = vpop.f32.mrf.mxu0
        %v4382 = vadd.f32 %v3298, %v4381
        %v4383 = vpop.f32.mrf.mxu0
        %4384 = vmatprep.mubr.f32.mxu0 0.0
        %4385 = vmatmul.mubr.f32.gmra.mxu0 %v3383
        %v4386 = vpop.f32.mrf.mxu0
        %v4387 = vadd.f32 %v3299, %v4386
        %v4388 = vpop.f32.mrf.mxu0
        %4389 = vmatprep.mubr.f32.mxu0 0.0
        %4390 = vmatmul.mubr.f32.gmra.mxu0 %v3386
        %v4391 = vpop.f32.mrf.mxu0
        %v4392 = vadd.f32 %v3300, %v4391
        %v4393 = vpop.f32.mrf.mxu0
        %4394 = vmatprep.mubr.f32.mxu0 0.0
        %4395 = vmatmul.mubr.f32.gmra.mxu0 %v3389
        %v4396 = vpop.f32.mrf.mxu0
        %v4397 = vadd.f32 %v3301, %v4396
        %v4398 = vpop.f32.mrf.mxu0
        %4399 = vmatprep.mubr.f32.mxu0 0.0
        %4400 = vmatmul.mubr.f32.gmra.mxu0 %v3392
        %v4401 = vpop.f32.mrf.mxu0
        %v4402 = vadd.f32 %v3302, %v4401
        %v4403 = vpop.f32.mrf.mxu0
        %4404 = vmatprep.mubr.f32.mxu0 0.0
        %4405 = vmatmul.mubr.f32.gmra.mxu0 %v3395
        %v4406 = vpop.f32.mrf.mxu0
        %v4407 = vadd.f32 %v3303, %v4406
        %v4408 = vpop.f32.mrf.mxu0
        %4409 = vmatprep.mubr.f32.mxu0 0.0
        %4410 = vmatmul.mubr.f32.gmra.mxu0 %v3398
        %v4411 = vpop.f32.mrf.mxu0
        %v4412 = vadd.f32 %v3304, %v4411
        %v4413 = vpop.f32.mrf.mxu0
        %4414 = vmatprep.mubr.f32.mxu0 0.0
        %4415 = vmatmul.mubr.f32.gmra.mxu0 %v3401
        %v4416 = vpop.f32.mrf.mxu0
        %v4417 = vadd.f32 %v3305, %v4416
        %v4418 = vpop.f32.mrf.mxu0
        %4419 = vmatprep.mubr.f32.mxu0 0.0
        %4420 = vmatmul.mubr.f32.gmra.mxu0 %v3404
        %v4421 = vpop.f32.mrf.mxu0
        %v4422 = vadd.f32 %v3306, %v4421
        %v4423 = vpop.f32.mrf.mxu0
        %4424 = vmatprep.mubr.f32.mxu0 0.0
        %4425 = vmatmul.mubr.f32.gmra.mxu0 %v3407
        %v4426 = vpop.f32.mrf.mxu0
        %v4427 = vadd.f32 %v3307, %v4426
        %v4428 = vpop.f32.mrf.mxu0
        %4429 = vmatprep.mubr.f32.mxu0 0.0
        %4430 = vmatmul.mubr.f32.gmra.mxu0 %v3410
        %v4431 = vpop.f32.mrf.mxu0
        %v4432 = vadd.f32 %v3308, %v4431
        %v4433 = vpop.f32.mrf.mxu0
        %4434 = vmatprep.mubr.f32.mxu0 0.0
        %4435 = vmatmul.mubr.f32.gmra.mxu0 %v3413
        %v4436 = vpop.f32.mrf.mxu0
        %v4437 = vadd.f32 %v3309, %v4436
        %v4438 = vpop.f32.mrf.mxu0
        %4439 = vdwg.mxu0
        %s4440 = scalar_lea.vmem %s285, 768
        %4441 = vst.msk [vmem:[%s4440] sm:$0xff] %vm2605, %v4282
        %4442 = vst.msk [vmem:[%s4440 + $0x8] sm:$0xff] %vm2605, %v4287
        %4443 = vst.msk [vmem:[%s4440 + $0x10] sm:$0xff] %vm2605, %v4292
        %4444 = vst.msk [vmem:[%s4440 + $0x18] sm:$0xff] %vm2605, %v4297
        %4445 = vst.msk [vmem:[%s4440 + $0x20] sm:$0xff] %vm2605, %v4302
        %4446 = vst.msk [vmem:[%s4440 + $0x28] sm:$0xff] %vm2605, %v4307
        %4447 = vst.msk [vmem:[%s4440 + $0x30] sm:$0xff] %vm2605, %v4312
        %4448 = vst.msk [vmem:[%s4440 + $0x38] sm:$0xff] %vm2605, %v4317
        %4449 = vst.msk [vmem:[%s4440 + $0x40] sm:$0xff] %vm2605, %v4322
        %4450 = vst.msk [vmem:[%s4440 + $0x48] sm:$0xff] %vm2605, %v4327
        %4451 = vst.msk [vmem:[%s4440 + $0x50] sm:$0xff] %vm2605, %v4332
        %4452 = vst.msk [vmem:[%s4440 + $0x58] sm:$0xff] %vm2605, %v4337
        %4453 = vst.msk [vmem:[%s4440 + $0x60] sm:$0xff] %vm2605, %v4342
        %4454 = vst.msk [vmem:[%s4440 + $0x68] sm:$0xff] %vm2605, %v4347
        %4455 = vst.msk [vmem:[%s4440 + $0x70] sm:$0xff] %vm2605, %v4352
        %4456 = vst.msk [vmem:[%s4440 + $0x78] sm:$0xff] %vm2605, %v4357
        %4457 = vst.msk [vmem:[%s4440 + $0x80] sm:$0xff] %vm2605, %v4362
        %4458 = vst.msk [vmem:[%s4440 + $0x88] sm:$0xff] %vm2605, %v4367
        %4459 = vst.msk [vmem:[%s4440 + $0x90] sm:$0xff] %vm2605, %v4372
        %4460 = vst.msk [vmem:[%s4440 + $0x98] sm:$0xff] %vm2605, %v4377
        %4461 = vst.msk [vmem:[%s4440 + $0xa0] sm:$0xff] %vm2605, %v4382
        %4462 = vst.msk [vmem:[%s4440 + $0xa8] sm:$0xff] %vm2605, %v4387
        %4463 = vst.msk [vmem:[%s4440 + $0xb0] sm:$0xff] %vm2605, %v4392
        %4464 = vst.msk [vmem:[%s4440 + $0xb8] sm:$0xff] %vm2605, %v4397
        %4465 = vst.msk [vmem:[%s4440 + $0xc0] sm:$0xff] %vm2605, %v4402
        %4466 = vst.msk [vmem:[%s4440 + $0xc8] sm:$0xff] %vm2605, %v4407
        %4467 = vst.msk [vmem:[%s4440 + $0xd0] sm:$0xff] %vm2605, %v4412
        %4468 = vst.msk [vmem:[%s4440 + $0xd8] sm:$0xff] %vm2605, %v4417
        %4469 = vst.msk [vmem:[%s4440 + $0xe0] sm:$0xff] %vm2605, %v4422
        %4470 = vst.msk [vmem:[%s4440 + $0xe8] sm:$0xff] %vm2605, %v4427
        %4471 = vst.msk [vmem:[%s4440 + $0xf0] sm:$0xff] %vm2605, %v4432
        %4472 = vst.msk [vmem:[%s4440 + $0xf8] sm:$0xff] %vm2605, %v4437
        %p4473 = scmp.lt.s32.totalorder %s21, 1
        %s4474 = scalar_select %p4473, %s21, 1
        %s4475 = smul.addr %s4474, 128
        %s4476 = smul.addr %s4475, 8
        %s4477 = scalar_lea.vmem %s6, %s4476
        // Predicated region
        $region53: #{tpu_custom_call.1} parent=43 // pred_check
          %p4478 = pneg %p170
        $region54: #{tpu_custom_call.1} parent=43 // pred_check_branch
          %4480 = sbr.rel (%p4478) target = $region56
        $region55: #{tpu_custom_call.1} parent=43 // pred_region
          _
        $region56: #{tpu_custom_call.1} parent=43 // pred_fallthru
          _
      $region44: #{tpu_custom_call.1} parent=5 // pred_fallthru
        _
      %p4481 = scmp.le.s32.totalorder 2, %s16
      // Predicated region
      $region57: #{tpu_custom_call.1} parent=5 // pred_check
        %p4482 = pneg %p4481
      $region58: #{tpu_custom_call.1} parent=5 // pred_check_branch
        %4484 = sbr.rel (%p4482) target = $region60
      $region59: #{tpu_custom_call.1} parent=5 // pred_region
        %s4485 = ssub.s32 %s16, 2
        // Predicated region
        $region61: #{tpu_custom_call.1} parent=59 // pred_check
          %p4486 = pneg %p176
        $region62: #{tpu_custom_call.1} parent=59 // pred_check_branch
          %4488 = sbr.rel (%p4486) target = $region64
        $region63: #{tpu_custom_call.1} parent=59 // pred_region
          %p4489 = scmp.lt.s32.totalorder %s22, 1
          %s4490 = scalar_select %p4489, %s22, 1
          %s4491 = smul.addr %s4490, 128
          %s4492 = smul.addr %s4491, 8
          %s4493 = scalar_lea.vmem %s6, %s4492
        $region64: #{tpu_custom_call.1} parent=59 // pred_fallthru
          _
      $region60: #{tpu_custom_call.1} parent=5 // pred_fallthru
        _
    $region6: #{tpu_custom_call.1} parent=1 // loop_footer
      %s20 = sadd.s32 1, %s16
    $region7: #{tpu_custom_call.1} parent=1 // loop_footer_branch
      %15 = sbr.rel target = $region3
    $region8: #{tpu_custom_call.1} parent=1 // loop_exit
      _
    %4494 = vsyncpa [#allocation5], 1
    %s4495 = scalar_lea.sflag [#allocation5], 1
    %4496 = vsyncpa %s4495, 1
    %4497 = vsyncpa [#allocation6], 1
    %s4498 = scalar_lea.sflag [#allocation6], 1
    %4499 = vsyncpa %s4498, 1

</llo_original>
